<compile_context>
chip_gen: v7x
topology: tpu7x:2x2x1
jax: 0.10.0
libtpu: 0.0.40
codegen_flags: <defaults>
</compile_context>

<pallas_src>
import jax
import jax.numpy as jnp
import numpy as np
from jax import lax
from jax.experimental import pallas as pl
from jax.experimental.pallas import tpu as pltpu

_L = 16  # sublane-aligned column (bf16 tile = 16 sublanes) where conv1's
         # output starts inside the scratch; columns 0.._L-2 are never read.


def basic_block_kernel(x_ref, w1_ref, s1_ref, b1_ref, w2_ref, s2_ref, b2_ref,
                       out_ref, hpad_ref):
    """Fused BasicBlock, one image of the batch per grid step.

    x_ref    : (1, H+2, W+2, Cin) bf16  zero-padded NHWC input (conv padding=1)
    w1_ref   : (9*Cin, Cout)      bf16  conv1 weights, rows ordered (ky, kx, cin)
    s1/b1    : (1, Cout)          f32   folded BN1 scale / bias
    w2_ref   : (9*Cout, Cout)     bf16  conv2 weights, rows ordered (ky, kx, cin)
    s2/b2    : (1, Cout)          f32   folded BN2 scale / bias
    out_ref  : (1, H*W, Cout)     f32
    hpad_ref : (H+2, _L+W+1, Cout) bf16 scratch: conv1 output + zero halo
               (halo = rows 0 / H+1, columns _L-1 / _L+W; cols 0.._L-2 unused)
    """
    H = x_ref.shape[1] - 2
    W = x_ref.shape[2] - 2
    Cin = x_ref.shape[3]
    Cout = hpad_ref.shape[2]

    x = x_ref[0]                                        # (H+2, W+2, Cin) bf16

    # ---- conv1: in-kernel im2col (lane-axis concat, tap order (ky,kx,cin))
    #      + one (H*W, 9*Cin) x (9*Cin, Cout) bf16 MXU matmul, f32 acc ----
    taps1 = [x[ky:ky + H, kx:kx + W, :] for ky in range(3) for kx in range(3)]
    p1 = jnp.concatenate(taps1, axis=-1).reshape(H * W, 9 * Cin)
    acc1 = jnp.dot(p1, w1_ref[...], preferred_element_type=jnp.float32)

    # Residual identity = the center tap of the conv1 patch (already in VMEM);
    # no separate HBM stream.  (Cin == Cout is required: downsample=None.)
    identity = taps1[4].reshape(H * W, Cin).astype(jnp.float32)

    # ---- bn1 + relu; cast once to bf16 and store at aligned column _L ----
    h = jnp.maximum(acc1 * s1_ref[...] + b1_ref[...], 0.0)      # (H*W, Cout) f32

    # Refresh only the thin zero halo (2 rows + 2 columns) each step; the
    # interior write below never touches it and columns 0.._L-2 are never read.
    zrow = jnp.zeros((1, hpad_ref.shape[1], Cout), jnp.bfloat16)
    zcol = jnp.zeros((H + 2, 1, Cout), jnp.bfloat16)
    hpad_ref[0:1, :, :] = zrow
    hpad_ref[H + 1:H + 2, :, :] = zrow
    hpad_ref[:, _L - 1:_L, :] = zcol
    hpad_ref[:, _L + W:_L + W + 1, :] = zcol
    hpad_ref[1:H + 1, _L:_L + W, :] = h.astype(jnp.bfloat16).reshape(H, W, Cout)

    # ---- conv2: in-kernel bf16 im2col + one bf16 MXU matmul, f32 acc ----
    taps2 = [hpad_ref[ky:ky + H, _L - 1 + kx:_L - 1 + kx + W, :]
             for ky in range(3) for kx in range(3)]
    p2 = jnp.concatenate(taps2, axis=-1).reshape(H * W, 9 * Cout)
    acc2 = jnp.dot(p2, w2_ref[...], preferred_element_type=jnp.float32)

    # ---- bn2 + residual add + relu ----
    o = acc2 * s2_ref[...] + b2_ref[...] + identity
    out_ref[0] = jnp.maximum(o, 0.0).astype(out_ref.dtype)


@jax.jit
def basic_block_pallas(x_nchw, w1_hwio, s1, b1, w2_hwio, s2, b2):
    """x_nchw: (N, Cin, H, W) f32; w*_hwio: (3, 3, Cin/Cout, Cout); s*/b* folded BN."""
    N, Cin, H, W = x_nchw.shape
    Cout = w1_hwio.shape[-1]
    assert Cin == Cout, "identity path requires Cin == Cout (downsample=None)"

    # NCHW -> NHWC; zero-pad spatial dims (conv padding=1); bf16 for the MXU.
    x_nhwc = jnp.transpose(x_nchw, (0, 2, 3, 1))
    x_pad = jnp.pad(x_nhwc, ((0, 0), (1, 1), (1, 1), (0, 0))).astype(jnp.bfloat16)

    w1r = w1_hwio.reshape(9 * Cin, Cout).astype(jnp.bfloat16)
    w2r = w2_hwio.reshape(9 * Cout, Cout).astype(jnp.bfloat16)
    s1r, b1r = s1.reshape(1, Cout), b1.reshape(1, Cout)
    s2r, b2r = s2.reshape(1, Cout), b2.reshape(1, Cout)

    flops = 2 * N * H * W * 9 * (Cin * Cout + Cout * Cout)
    bytes_accessed = (x_pad.size * 2 + w1r.size * 2 + w2r.size * 2
                      + 4 * Cout * 4 + N * H * W * Cout * 4)
    cost = pl.CostEstimate(flops=flops, transcendentals=0,
                           bytes_accessed=bytes_accessed)

    full = lambda a: pl.BlockSpec(a.shape, lambda n: (0,) * a.ndim)

    out_flat = pl.pallas_call(
        basic_block_kernel,
        out_shape=jax.ShapeDtypeStruct((N, H * W, Cout), x_nchw.dtype),
        grid_spec=pltpu.PrefetchScalarGridSpec(
            num_scalar_prefetch=0,
            grid=(N,),
            in_specs=[
                pl.BlockSpec((1, H + 2, W + 2, Cin), lambda n: (n, 0, 0, 0)),
                full(w1r), full(s1r), full(b1r),
                full(w2r), full(s2r), full(b2r),
            ],
            out_specs=pl.BlockSpec((1, H * W, Cout), lambda n: (n, 0, 0)),
            scratch_shapes=[pltpu.VMEM((H + 2, _L + W + 1, Cout), jnp.bfloat16)],
        ),
        compiler_params=pltpu.CompilerParams(
            dimension_semantics=("parallel",),
            # 64 MiB keeps whole-image tiles + double buffers on v5e/v6e
            # (128 MiB physical VMEM).  On v7x (64 MiB physical) drop this to
            # <= 48 MiB or row-tile the grid for large feature maps.
            vmem_limit_bytes=64 * 1024 * 1024),
        cost_estimate=cost,
    )(x_pad, w1r, s1r, b1r, w2r, s2r, b2r)

    # (N, H*W, Cout) -> NHWC -> NCHW (PyTorch layout)
    return jnp.transpose(out_flat.reshape(N, H, W, Cout), (0, 3, 1, 2))


def reference_basic_block(x, w1_oihw, s1, b1, w2_oihw, s2, b2):
    """Plain-JAX f32 reference of the same forward pass (NCHW)."""
    dn = ('NCHW', 'OIHW', 'NCHW')
    out = lax.conv_general_dilated(x, w1_oihw, (1, 1), 'SAME',
                                   dimension_numbers=dn)
    out = out * s1[None, :, None, None] + b1[None, :, None, None]
    out = jnp.maximum(out, 0.0)
    out = lax.conv_general_dilated(out, w2_oihw, (1, 1), 'SAME',
                                   dimension_numbers=dn)
    out = out * s2[None, :, None, None] + b2[None, :, None, None]
    return jnp.maximum(out + x, 0.0)


if __name__ == "__main__":
    # Shapes consistent with BasicBlock(inplanes=4, planes=4, stride=1)
    N, C, H, W = 2, 4, 16, 16
    planes = C  # identity path requires matching channels (downsample=None)

    key = jax.random.PRNGKey(0)
    k = jax.random.split(key, 8)

    x = jax.random.normal(k[0], (N, C, H, W), jnp.float32)

    # Conv weights in PyTorch OIHW layout (Cout, Cin, 3, 3)
    w1_oihw = 0.1 * jax.random.normal(k[1], (planes, C, 3, 3), jnp.float32)
    w2_oihw = 0.1 * jax.random.normal(k[2], (planes, planes, 3, 3), jnp.float32)

    # BatchNorm (inference-mode) parameters, folded into scale/bias
    eps = 1e-5
    gamma1 = 1.0 + 0.1 * jax.random.normal(k[3], (planes,), jnp.float32)
    beta1 = 0.1 * jax.random.normal(k[4], (planes,), jnp.float32)
    mean1 = 0.05 * jax.random.normal(k[5], (planes,), jnp.float32)
    var1 = jnp.abs(1.0 + 0.1 * jax.random.normal(k[6], (planes,), jnp.float32))
    gamma2 = jnp.ones((planes,), jnp.float32)
    beta2 = jnp.zeros((planes,), jnp.float32)
    mean2 = 0.05 * jax.random.normal(k[7], (planes,), jnp.float32)
    var2 = jnp.ones((planes,), jnp.float32)

    s1 = gamma1 / jnp.sqrt(var1 + eps)
    b1 = beta1 - mean1 * s1
    s2 = gamma2 / jnp.sqrt(var2 + eps)
    b2 = beta2 - mean2 * s2

    # OIHW -> HWIO for the NHWC kernel
    w1_hwio = jnp.transpose(w1_oihw, (2, 3, 1, 0))
    w2_hwio = jnp.transpose(w2_oihw, (2, 3, 1, 0))

    out = basic_block_pallas(x, w1_hwio, s1, b1, w2_hwio, s2, b2)
    out = jax.block_until_ready(out)

    ref = jax.block_until_ready(
        reference_basic_block(x, w1_oihw, s1, b1, w2_oihw, s2, b2))
    # bf16 MXU operands / bf16 identity with f32 accumulation -> loosened
    # tolerance vs the f32 reference.
    np.testing.assert_allclose(np.asarray(out), np.asarray(ref),
                               rtol=2e-2, atol=2e-2)

    print("KERNEL_OK")
</pallas_src>

<mosaic_0001>
module attributes {stable_mosaic.version = 11 : i64} {
  func.func @basic_block_kernel(%arg0: i32, %arg1: memref<1x18x18x4xbf16, #tpu.memory_space<vmem>>, %arg2: memref<36x4xbf16, #tpu.memory_space<vmem>>, %arg3: memref<1x4xf32, #tpu.memory_space<vmem>>, %arg4: memref<1x4xf32, #tpu.memory_space<vmem>>, %arg5: memref<36x4xbf16, #tpu.memory_space<vmem>>, %arg6: memref<1x4xf32, #tpu.memory_space<vmem>>, %arg7: memref<1x4xf32, #tpu.memory_space<vmem>>, %arg8: memref<1x256x4xf32, #tpu.memory_space<vmem>>, %arg9: memref<18x33x4xbf16, #tpu.memory_space<vmem>>) attributes {dimension_semantics = [#tpu.dimension_semantics<parallel>], iteration_bounds = array<i64: 2>, scalar_prefetch = 0 : i64, scratch_operands = 1 : i64, tpu.core_type = #tpu.core_type<tc>, window_params = [{transform_indices = @transform_0, window_bounds = array<i64: 1, 18, 18, 4>}, {pipeline_mode = #tpu.pipeline_mode<synchronous>, transform_indices = @transform_1, window_bounds = array<i64: 36, 4>}, {pipeline_mode = #tpu.pipeline_mode<synchronous>, transform_indices = @transform_2, window_bounds = array<i64: 1, 4>}, {pipeline_mode = #tpu.pipeline_mode<synchronous>, transform_indices = @transform_3, window_bounds = array<i64: 1, 4>}, {pipeline_mode = #tpu.pipeline_mode<synchronous>, transform_indices = @transform_4, window_bounds = array<i64: 36, 4>}, {pipeline_mode = #tpu.pipeline_mode<synchronous>, transform_indices = @transform_5, window_bounds = array<i64: 1, 4>}, {pipeline_mode = #tpu.pipeline_mode<synchronous>, transform_indices = @transform_6, window_bounds = array<i64: 1, 4>}, {transform_indices = @transform_7, window_bounds = array<i64: 1, 256, 4>}]} {
    %c0 = arith.constant 0 : index
    %c0_0 = arith.constant 0 : index
    %c0_1 = arith.constant 0 : index
    %c0_2 = arith.constant 0 : index
    %0 = vector.load %arg1[%c0, %c0_0, %c0_1, %c0_2] : memref<1x18x18x4xbf16, #tpu.memory_space<vmem>>, vector<1x18x18x4xbf16>
    %1 = vector.shape_cast %0 : vector<1x18x18x4xbf16> to vector<18x18x4xbf16>
    %2 = vector.extract_strided_slice %1 {offsets = [0, 0, 0], sizes = [16, 16, 4], strides = [1, 1, 1]} : vector<18x18x4xbf16> to vector<16x16x4xbf16>
    %3 = vector.extract_strided_slice %1 {offsets = [0, 1, 0], sizes = [16, 16, 4], strides = [1, 1, 1]} : vector<18x18x4xbf16> to vector<16x16x4xbf16>
    %4 = vector.extract_strided_slice %1 {offsets = [0, 2, 0], sizes = [16, 16, 4], strides = [1, 1, 1]} : vector<18x18x4xbf16> to vector<16x16x4xbf16>
    %5 = vector.extract_strided_slice %1 {offsets = [1, 0, 0], sizes = [16, 16, 4], strides = [1, 1, 1]} : vector<18x18x4xbf16> to vector<16x16x4xbf16>
    %6 = vector.extract_strided_slice %1 {offsets = [1, 1, 0], sizes = [16, 16, 4], strides = [1, 1, 1]} : vector<18x18x4xbf16> to vector<16x16x4xbf16>
    %7 = vector.extract_strided_slice %1 {offsets = [1, 2, 0], sizes = [16, 16, 4], strides = [1, 1, 1]} : vector<18x18x4xbf16> to vector<16x16x4xbf16>
    %8 = vector.extract_strided_slice %1 {offsets = [2, 0, 0], sizes = [16, 16, 4], strides = [1, 1, 1]} : vector<18x18x4xbf16> to vector<16x16x4xbf16>
    %9 = vector.extract_strided_slice %1 {offsets = [2, 1, 0], sizes = [16, 16, 4], strides = [1, 1, 1]} : vector<18x18x4xbf16> to vector<16x16x4xbf16>
    %10 = vector.extract_strided_slice %1 {offsets = [2, 2, 0], sizes = [16, 16, 4], strides = [1, 1, 1]} : vector<18x18x4xbf16> to vector<16x16x4xbf16>
    %11 = tpu.concatenate %2, %3, %4, %5, %6, %7, %8, %9, %10 in 2 : vector<16x16x4xbf16>, vector<16x16x4xbf16>, vector<16x16x4xbf16>, vector<16x16x4xbf16>, vector<16x16x4xbf16>, vector<16x16x4xbf16>, vector<16x16x4xbf16>, vector<16x16x4xbf16>, vector<16x16x4xbf16> -> vector<16x16x36xbf16>
    %12 = vector.shape_cast %11 : vector<16x16x36xbf16> to vector<256x36xbf16>
    %c0_3 = arith.constant 0 : index
    %c0_4 = arith.constant 0 : index
    %13 = vector.load %arg2[%c0_3, %c0_4] : memref<36x4xbf16, #tpu.memory_space<vmem>>, vector<36x4xbf16>
    %cst = arith.constant dense<0.000000e+00> : vector<256x4xf32>
    %14 = tpu.matmul %12, %13, %cst {dimension_numbers = #tpu.dot_dimension_numbers<[1], [0], [0], [1], [0, 0, 1, 1], [], []>} : vector<256x36xbf16>, vector<36x4xbf16>, vector<256x4xf32> -> vector<256x4xf32>
    %15 = vector.shape_cast %6 : vector<16x16x4xbf16> to vector<256x4xbf16>
    %16 = arith.extf %15 : vector<256x4xbf16> to vector<256x4xf32>
    %c0_5 = arith.constant 0 : index
    %c0_6 = arith.constant 0 : index
    %17 = vector.load %arg3[%c0_5, %c0_6] : memref<1x4xf32, #tpu.memory_space<vmem>>, vector<1x4xf32>
    %18 = vector.broadcast %17 : vector<1x4xf32> to vector<256x4xf32>
    %19 = arith.mulf %14, %18 : vector<256x4xf32>
    %c0_7 = arith.constant 0 : index
    %c0_8 = arith.constant 0 : index
    %20 = vector.load %arg4[%c0_7, %c0_8] : memref<1x4xf32, #tpu.memory_space<vmem>>, vector<1x4xf32>
    %21 = vector.broadcast %20 : vector<1x4xf32> to vector<256x4xf32>
    %22 = arith.addf %19, %21 : vector<256x4xf32>
    %cst_9 = arith.constant 0.000000e+00 : f32
    %23 = vector.broadcast %cst_9 : f32 to vector<256x4xf32>
    %24 = arith.maximumf %22, %23 : vector<256x4xf32>
    %cst_10 = arith.constant 0.000000e+00 : bf16
    %25 = vector.broadcast %cst_10 : bf16 to vector<1x33x4xbf16>
    %cst_11 = arith.constant 0.000000e+00 : bf16
    %26 = vector.broadcast %cst_11 : bf16 to vector<18x1x4xbf16>
    %c0_12 = arith.constant 0 : index
    %c0_13 = arith.constant 0 : index
    %c0_14 = arith.constant 0 : index
    %27 = vector.load %arg9[%c0_12, %c0_13, %c0_14] : memref<18x33x4xbf16, #tpu.memory_space<vmem>>, vector<1x33x4xbf16>
    tpu.vector_store %arg9[%c0_12, %c0_13, %c0_14], %25 {strides = array<i32>} : memref<18x33x4xbf16, #tpu.memory_space<vmem>>, vector<1x33x4xbf16>,
    %c17 = arith.constant 17 : index
    %c0_15 = arith.constant 0 : index
    %c0_16 = arith.constant 0 : index
    %28 = vector.load %arg9[%c17, %c0_15, %c0_16] : memref<18x33x4xbf16, #tpu.memory_space<vmem>>, vector<1x33x4xbf16>
    tpu.vector_store %arg9[%c17, %c0_15, %c0_16], %25 {strides = array<i32>} : memref<18x33x4xbf16, #tpu.memory_space<vmem>>, vector<1x33x4xbf16>,
    %c0_17 = arith.constant 0 : index
    %c15 = arith.constant 15 : index
    %c0_18 = arith.constant 0 : index
    %29 = vector.load %arg9[%c0_17, %c15, %c0_18] : memref<18x33x4xbf16, #tpu.memory_space<vmem>>, vector<18x1x4xbf16>
    tpu.vector_store %arg9[%c0_17, %c15, %c0_18], %26 {strides = array<i32>} : memref<18x33x4xbf16, #tpu.memory_space<vmem>>, vector<18x1x4xbf16>,
    %c0_19 = arith.constant 0 : index
    %c32 = arith.constant 32 : index
    %c0_20 = arith.constant 0 : index
    %30 = vector.load %arg9[%c0_19, %c32, %c0_20] : memref<18x33x4xbf16, #tpu.memory_space<vmem>>, vector<18x1x4xbf16>
    tpu.vector_store %arg9[%c0_19, %c32, %c0_20], %26 {strides = array<i32>} : memref<18x33x4xbf16, #tpu.memory_space<vmem>>, vector<18x1x4xbf16>,
    %31 = arith.truncf %24 : vector<256x4xf32> to vector<256x4xbf16>
    %32 = vector.shape_cast %31 : vector<256x4xbf16> to vector<16x16x4xbf16>
    %c1 = arith.constant 1 : index
    %c16 = arith.constant 16 : index
    %c0_21 = arith.constant 0 : index
    %33 = vector.load %arg9[%c1, %c16, %c0_21] : memref<18x33x4xbf16, #tpu.memory_space<vmem>>, vector<16x16x4xbf16>
    tpu.vector_store %arg9[%c1, %c16, %c0_21], %32 {strides = array<i32>} : memref<18x33x4xbf16, #tpu.memory_space<vmem>>, vector<16x16x4xbf16>,
    %c0_22 = arith.constant 0 : index
    %c15_23 = arith.constant 15 : index
    %c0_24 = arith.constant 0 : index
    %34 = vector.load %arg9[%c0_22, %c15_23, %c0_24] : memref<18x33x4xbf16, #tpu.memory_space<vmem>>, vector<16x16x4xbf16>
    %c0_25 = arith.constant 0 : index
    %c16_26 = arith.constant 16 : index
    %c0_27 = arith.constant 0 : index
    %35 = vector.load %arg9[%c0_25, %c16_26, %c0_27] : memref<18x33x4xbf16, #tpu.memory_space<vmem>>, vector<16x16x4xbf16>
    %c0_28 = arith.constant 0 : index
    %c17_29 = arith.constant 17 : index
    %c0_30 = arith.constant 0 : index
    %36 = vector.load %arg9[%c0_28, %c17_29, %c0_30] : memref<18x33x4xbf16, #tpu.memory_space<vmem>>, vector<16x16x4xbf16>
    %c1_31 = arith.constant 1 : index
    %c15_32 = arith.constant 15 : index
    %c0_33 = arith.constant 0 : index
    %37 = vector.load %arg9[%c1_31, %c15_32, %c0_33] : memref<18x33x4xbf16, #tpu.memory_space<vmem>>, vector<16x16x4xbf16>
    %c1_34 = arith.constant 1 : index
    %c16_35 = arith.constant 16 : index
    %c0_36 = arith.constant 0 : index
    %38 = vector.load %arg9[%c1_34, %c16_35, %c0_36] : memref<18x33x4xbf16, #tpu.memory_space<vmem>>, vector<16x16x4xbf16>
    %c1_37 = arith.constant 1 : index
    %c17_38 = arith.constant 17 : index
    %c0_39 = arith.constant 0 : index
    %39 = vector.load %arg9[%c1_37, %c17_38, %c0_39] : memref<18x33x4xbf16, #tpu.memory_space<vmem>>, vector<16x16x4xbf16>
    %c2 = arith.constant 2 : index
    %c15_40 = arith.constant 15 : index
    %c0_41 = arith.constant 0 : index
    %40 = vector.load %arg9[%c2, %c15_40, %c0_41] : memref<18x33x4xbf16, #tpu.memory_space<vmem>>, vector<16x16x4xbf16>
    %c2_42 = arith.constant 2 : index
    %c16_43 = arith.constant 16 : index
    %c0_44 = arith.constant 0 : index
    %41 = vector.load %arg9[%c2_42, %c16_43, %c0_44] : memref<18x33x4xbf16, #tpu.memory_space<vmem>>, vector<16x16x4xbf16>
    %c2_45 = arith.constant 2 : index
    %c17_46 = arith.constant 17 : index
    %c0_47 = arith.constant 0 : index
    %42 = vector.load %arg9[%c2_45, %c17_46, %c0_47] : memref<18x33x4xbf16, #tpu.memory_space<vmem>>, vector<16x16x4xbf16>
    %43 = tpu.concatenate %34, %35, %36, %37, %38, %39, %40, %41, %42 in 2 : vector<16x16x4xbf16>, vector<16x16x4xbf16>, vector<16x16x4xbf16>, vector<16x16x4xbf16>, vector<16x16x4xbf16>, vector<16x16x4xbf16>, vector<16x16x4xbf16>, vector<16x16x4xbf16>, vector<16x16x4xbf16> -> vector<16x16x36xbf16>
    %44 = vector.shape_cast %43 : vector<16x16x36xbf16> to vector<256x36xbf16>
    %c0_48 = arith.constant 0 : index
    %c0_49 = arith.constant 0 : index
    %45 = vector.load %arg5[%c0_48, %c0_49] : memref<36x4xbf16, #tpu.memory_space<vmem>>, vector<36x4xbf16>
    %cst_50 = arith.constant dense<0.000000e+00> : vector<256x4xf32>
    %46 = tpu.matmul %44, %45, %cst_50 {dimension_numbers = #tpu.dot_dimension_numbers<[1], [0], [0], [1], [0, 0, 1, 1], [], []>} : vector<256x36xbf16>, vector<36x4xbf16>, vector<256x4xf32> -> vector<256x4xf32>
    %c0_51 = arith.constant 0 : index
    %c0_52 = arith.constant 0 : index
    %47 = vector.load %arg6[%c0_51, %c0_52] : memref<1x4xf32, #tpu.memory_space<vmem>>, vector<1x4xf32>
    %48 = vector.broadcast %47 : vector<1x4xf32> to vector<256x4xf32>
    %49 = arith.mulf %46, %48 : vector<256x4xf32>
    %c0_53 = arith.constant 0 : index
    %c0_54 = arith.constant 0 : index
    %50 = vector.load %arg7[%c0_53, %c0_54] : memref<1x4xf32, #tpu.memory_space<vmem>>, vector<1x4xf32>
    %51 = vector.broadcast %50 : vector<1x4xf32> to vector<256x4xf32>
    %52 = arith.addf %49, %51 : vector<256x4xf32>
    %53 = arith.addf %52, %16 : vector<256x4xf32>
    %cst_55 = arith.constant 0.000000e+00 : f32
    %54 = vector.broadcast %cst_55 : f32 to vector<256x4xf32>
    %55 = arith.maximumf %53, %54 : vector<256x4xf32>
    %c0_56 = arith.constant 0 : index
    %c0_57 = arith.constant 0 : index
    %c0_58 = arith.constant 0 : index
    %56 = vector.load %arg8[%c0_56, %c0_57, %c0_58] : memref<1x256x4xf32, #tpu.memory_space<vmem>>, vector<1x256x4xf32>
    %57 = vector.shape_cast %56 : vector<1x256x4xf32> to vector<256x4xf32>
    %58 = vector.shape_cast %55 : vector<256x4xf32> to vector<1x256x4xf32>
    tpu.vector_store %arg8[%c0_56, %c0_57, %c0_58], %58 {strides = array<i32>} : memref<1x256x4xf32, #tpu.memory_space<vmem>>, vector<1x256x4xf32>,
    return
  }
  func.func @transform_0(%arg0: i32) -> (i32, i32, i32, i32) {
    %c0_i32 = arith.constant 0 : i32
    %c0_i32_0 = arith.constant 0 : i32
    %c0_i32_1 = arith.constant 0 : i32
    %c0_i32_2 = arith.constant 0 : i32
    return %arg0, %c0_i32, %c0_i32_0, %c0_i32_1 : i32, i32, i32, i32
  }
  func.func @transform_1(%arg0: i32) -> (i32, i32) {
    %c0_i32 = arith.constant 0 : i32
    %c0_i32_0 = arith.constant 0 : i32
    %c0_i32_1 = arith.constant 0 : i32
    return %c0_i32, %c0_i32_0 : i32, i32
  }
  func.func @transform_2(%arg0: i32) -> (i32, i32) {
    %c0_i32 = arith.constant 0 : i32
    %c0_i32_0 = arith.constant 0 : i32
    %c0_i32_1 = arith.constant 0 : i32
    return %c0_i32, %c0_i32_0 : i32, i32
  }
  func.func @transform_3(%arg0: i32) -> (i32, i32) {
    %c0_i32 = arith.constant 0 : i32
    %c0_i32_0 = arith.constant 0 : i32
    %c0_i32_1 = arith.constant 0 : i32
    return %c0_i32, %c0_i32_0 : i32, i32
  }
  func.func @transform_4(%arg0: i32) -> (i32, i32) {
    %c0_i32 = arith.constant 0 : i32
    %c0_i32_0 = arith.constant 0 : i32
    %c0_i32_1 = arith.constant 0 : i32
    return %c0_i32, %c0_i32_0 : i32, i32
  }
  func.func @transform_5(%arg0: i32) -> (i32, i32) {
    %c0_i32 = arith.constant 0 : i32
    %c0_i32_0 = arith.constant 0 : i32
    %c0_i32_1 = arith.constant 0 : i32
    return %c0_i32, %c0_i32_0 : i32, i32
  }
  func.func @transform_6(%arg0: i32) -> (i32, i32) {
    %c0_i32 = arith.constant 0 : i32
    %c0_i32_0 = arith.constant 0 : i32
    %c0_i32_1 = arith.constant 0 : i32
    return %c0_i32, %c0_i32_0 : i32, i32
  }
  func.func @transform_7(%arg0: i32) -> (i32, i32, i32) {
    %c0_i32 = arith.constant 0 : i32
    %c0_i32_0 = arith.constant 0 : i32
    %c0_i32_1 = arith.constant 0 : i32
    return %arg0, %c0_i32, %c0_i32_0 : i32, i32, i32
  }
}

</mosaic_0001>

<llo_original>
// kernel: basic_block_pallas.1
$region0: #{basic_block_pallas.1}
  #allocation0 [shape = 'u32[]', space=smem, size = 0x4, offset = 0x4, fixed_abs, tag = 'smem constant byte address 0x4 - core index']
  #allocation1 [shape = 'u32[144,128]{1,0:T(1,128)}', space=vmem, size = 0x12000, scoped, tag = 'internal scratch']
  #allocation2 [shape = 'bf16[18,33,4]{2,1,0:T(8,128)(2,1)}', space=vmem, size = 0x2d000, scoped, tag = 'scratch operand']
  %s0 = inlined_call_operand.hbm [shape: bf16[2,18,18,4], index: 0, kind: input, shape index: {}]
  %s1 = inlined_call_operand.hbm [shape: bf16[36,4], index: 1, kind: input, shape index: {}]
  %s2 = inlined_call_operand.hbm [shape: f32[1,4], index: 2, kind: input, shape index: {}]
  %s3 = inlined_call_operand.hbm [shape: f32[1,4], index: 3, kind: input, shape index: {}]
  %s4 = inlined_call_operand.hbm [shape: bf16[36,4], index: 4, kind: input, shape index: {}]
  %s5 = inlined_call_operand.hbm [shape: f32[1,4], index: 5, kind: input, shape index: {}]
  %s6 = inlined_call_operand.hbm [shape: f32[1,4], index: 6, kind: input, shape index: {}]
  %s7 = inlined_call_operand.hbm [shape: f32[2,256,4], index: 7, kind: output, shape index: {}]
  %s8 = sld [smem:[#allocation0]]
  $region89: #{basic_block_pallas.1} parent=0
    _
  %s10 = ssub.s32 1, %s8
  %s11 = scalar_select 0, %s10, %s8
  $region1: #{basic_block_pallas.1} parent=0
    #allocation3 [shape = 'u8[221184]{0}', space=vmem, size = 0x36000, scoped, tag = 'input window, operand 0']
    #allocation4 [shape = 's32[2]{0}', space=sflag, size = 0x8, scoped, tag = 'scoped memory for basic_block_pallas.1']
    #allocation5 [shape = 's32[2]{0}', space=sflag, size = 0x8, scoped, tag = 'scoped memory for basic_block_pallas.1']
    #allocation6 [shape = 'u8[10240]{0}', space=vmem, size = 0x2800, scoped, tag = 'input window, operand 1, single buffered']
    #allocation7 [shape = 's32[1]{0}', space=sflag, size = 0x4, scoped, tag = 'scoped memory for basic_block_pallas.1']
    #allocation8 [shape = 'u8[512]{0}', space=vmem, size = 0x400, scoped, tag = 'input window, operand 2, single buffered']
    #allocation9 [shape = 'u8[512]{0}', space=vmem, size = 0x400, scoped, tag = 'input window, operand 3, single buffered']
    #allocation10 [shape = 's32[1]{0}', space=sflag, size = 0x4, scoped, tag = 'scoped memory for basic_block_pallas.1']
    #allocation11 [shape = 'u8[10240]{0}', space=vmem, size = 0x2800, scoped, tag = 'input window, operand 4, single buffered']
    #allocation12 [shape = 'u8[512]{0}', space=vmem, size = 0x400, scoped, tag = 'input window, operand 5, single buffered']
    #allocation13 [shape = 's32[1]{0}', space=sflag, size = 0x4, scoped, tag = 'scoped memory for basic_block_pallas.1']
    #allocation14 [shape = 'u8[512]{0}', space=vmem, size = 0x400, scoped, tag = 'input window, operand 6, single buffered']
    #allocation15 [shape = 'u8[262144]{0}', space=vmem, size = 0x40000, scoped, tag = 'output window, operand 0']
    %12 = vsyncpa [#allocation4], 0
    %s13 = scalar_lea.sflag [#allocation4], 1
    %14 = vsyncpa %s13, 0
    %15 = vsyncpa [#allocation7], 0
    %16 = vsyncpa [#allocation10], 0
    %17 = vsyncpa [#allocation13], 0
    %18 = vsyncpa [#allocation5], 0
    %s19 = scalar_lea.sflag [#allocation5], 1
    %20 = vsyncpa %s19, 0
    loop: start=0, step=1, limit=4
    $region2: #{basic_block_pallas.1} parent=1 // loop_pre_header
      _
    $region3: #{basic_block_pallas.1} parent=1 // loop_header
      %s22 = sphi 0, %s26
      %p23 = scmp.ge.s32.totalorder %s22, 4
      %s32 = sphi 0, %s34
      %s35 = sphi 0, %s32
      %s36 = sphi 0, %s35
      %s52 = sphi 0, %s36
      %s56 = sphi 0, %s56
      %s58 = sphi 0, %s56
      %s59 = sphi 0, %s58
      %s73 = sphi 0, %s59
      %s77 = sphi 0, %s77
      %s79 = sphi 0, %s77
      %s80 = sphi 0, %s79
      %s94 = sphi 0, %s80
      %s98 = sphi 0, %s98
      %s100 = sphi 0, %s98
      %s101 = sphi 0, %s100
      %s115 = sphi 0, %s101
      %s119 = sphi 0, %s119
      %s121 = sphi 0, %s119
      %s122 = sphi 0, %s121
      %s136 = sphi 0, %s122
      %s140 = sphi 0, %s140
      %s142 = sphi 0, %s140
      %s143 = sphi 0, %s142
      %s157 = sphi 0, %s143
      %s161 = sphi 0, %s161
      %s163 = sphi 0, %s161
      %s164 = sphi 0, %s163
      %s178 = sphi 0, %s164
      %s184 = sphi 0, %s186
      %s187 = sphi 0, %s184
      %s188 = sphi 0, %s187
      %s204 = sphi 0, %s188
    $region4: #{basic_block_pallas.1} parent=1 // loop_header_branch
      %25 = sbr.rel (%p23) target = $region8
    $region5: #{basic_block_pallas.1} parent=1 // loop_body
      %s27 = ssub.s32 %s22, 1
      %s28 = ssub.s32 %s22, 2
      %s29 = sadd.s32 %s22, 1
      %s30 = ssub.s32 %s22, %s29
      %p31 = scmp.eq.s32.totalorder %s30, 0
      %s33 = sadd.s32 %s32, 1
      %s34 = scalar_select %p31, %s32, %s33
      %p37 = pneg %p31
      %p38 = scmp.eq.s32.totalorder %s22, 1
      %p39 = por %p37, %p38
      %p40 = scmp.ne.s32.totalorder %s32, %s35
      %p41 = scmp.eq.s32.totalorder %s22, 0
      %p42 = por %p40, %p41
      %p43 = scmp.ne.s32.totalorder %s32, %s35
      %p44 = scmp.eq.s32.totalorder %s27, 1
      %p45 = por %p43, %p44
      %p46 = scmp.ne.s32.totalorder %s35, %s36
      %p47 = scmp.eq.s32.totalorder %s27, 0
      %p48 = por %p46, %p47
      %p49 = scmp.ne.s32.totalorder %s35, %s36
      %p50 = scmp.eq.s32.totalorder %s28, 1
      %p51 = por %p49, %p50
      %p53 = scmp.ne.s32.totalorder %s36, %s52
      %p54 = scmp.eq.s32.totalorder %s28, 0
      %p55 = por %p53, %p54
      %s57 = sadd.s32 %s56, 1
      %p60 = scmp.eq.s32.totalorder %s22, 1
      %p61 = scmp.ne.s32.totalorder %s56, %s58
      %p62 = scmp.eq.s32.totalorder %s22, 0
      %p63 = por %p61, %p62
      %p64 = scmp.ne.s32.totalorder %s56, %s58
      %p65 = scmp.eq.s32.totalorder %s27, 1
      %p66 = por %p64, %p65
      %p67 = scmp.ne.s32.totalorder %s58, %s59
      %p68 = scmp.eq.s32.totalorder %s27, 0
      %p69 = por %p67, %p68
      %p70 = scmp.ne.s32.totalorder %s58, %s59
      %p71 = scmp.eq.s32.totalorder %s28, 1
      %p72 = por %p70, %p71
      %p74 = scmp.ne.s32.totalorder %s59, %s73
      %p75 = scmp.eq.s32.totalorder %s28, 0
      %p76 = por %p74, %p75
      %s78 = sadd.s32 %s77, 1
      %p81 = scmp.eq.s32.totalorder %s22, 1
      %p82 = scmp.ne.s32.totalorder %s77, %s79
      %p83 = scmp.eq.s32.totalorder %s22, 0
      %p84 = por %p82, %p83
      %p85 = scmp.ne.s32.totalorder %s77, %s79
      %p86 = scmp.eq.s32.totalorder %s27, 1
      %p87 = por %p85, %p86
      %p88 = scmp.ne.s32.totalorder %s79, %s80
      %p89 = scmp.eq.s32.totalorder %s27, 0
      %p90 = por %p88, %p89
      %p91 = scmp.ne.s32.totalorder %s79, %s80
      %p92 = scmp.eq.s32.totalorder %s28, 1
      %p93 = por %p91, %p92
      %p95 = scmp.ne.s32.totalorder %s80, %s94
      %p96 = scmp.eq.s32.totalorder %s28, 0
      %p97 = por %p95, %p96
      %s99 = sadd.s32 %s98, 1
      %p102 = scmp.eq.s32.totalorder %s22, 1
      %p103 = scmp.ne.s32.totalorder %s98, %s100
      %p104 = scmp.eq.s32.totalorder %s22, 0
      %p105 = por %p103, %p104
      %p106 = scmp.ne.s32.totalorder %s98, %s100
      %p107 = scmp.eq.s32.totalorder %s27, 1
      %p108 = por %p106, %p107
      %p109 = scmp.ne.s32.totalorder %s100, %s101
      %p110 = scmp.eq.s32.totalorder %s27, 0
      %p111 = por %p109, %p110
      %p112 = scmp.ne.s32.totalorder %s100, %s101
      %p113 = scmp.eq.s32.totalorder %s28, 1
      %p114 = por %p112, %p113
      %p116 = scmp.ne.s32.totalorder %s101, %s115
      %p117 = scmp.eq.s32.totalorder %s28, 0
      %p118 = por %p116, %p117
      %s120 = sadd.s32 %s119, 1
      %p123 = scmp.eq.s32.totalorder %s22, 1
      %p124 = scmp.ne.s32.totalorder %s119, %s121
      %p125 = scmp.eq.s32.totalorder %s22, 0
      %p126 = por %p124, %p125
      %p127 = scmp.ne.s32.totalorder %s119, %s121
      %p128 = scmp.eq.s32.totalorder %s27, 1
      %p129 = por %p127, %p128
      %p130 = scmp.ne.s32.totalorder %s121, %s122
      %p131 = scmp.eq.s32.totalorder %s27, 0
      %p132 = por %p130, %p131
      %p133 = scmp.ne.s32.totalorder %s121, %s122
      %p134 = scmp.eq.s32.totalorder %s28, 1
      %p135 = por %p133, %p134
      %p137 = scmp.ne.s32.totalorder %s122, %s136
      %p138 = scmp.eq.s32.totalorder %s28, 0
      %p139 = por %p137, %p138
      %s141 = sadd.s32 %s140, 1
      %p144 = scmp.eq.s32.totalorder %s22, 1
      %p145 = scmp.ne.s32.totalorder %s140, %s142
      %p146 = scmp.eq.s32.totalorder %s22, 0
      %p147 = por %p145, %p146
      %p148 = scmp.ne.s32.totalorder %s140, %s142
      %p149 = scmp.eq.s32.totalorder %s27, 1
      %p150 = por %p148, %p149
      %p151 = scmp.ne.s32.totalorder %s142, %s143
      %p152 = scmp.eq.s32.totalorder %s27, 0
      %p153 = por %p151, %p152
      %p154 = scmp.ne.s32.totalorder %s142, %s143
      %p155 = scmp.eq.s32.totalorder %s28, 1
      %p156 = por %p154, %p155
      %p158 = scmp.ne.s32.totalorder %s143, %s157
      %p159 = scmp.eq.s32.totalorder %s28, 0
      %p160 = por %p158, %p159
      %s162 = sadd.s32 %s161, 1
      %p165 = scmp.eq.s32.totalorder %s22, 1
      %p166 = scmp.ne.s32.totalorder %s161, %s163
      %p167 = scmp.eq.s32.totalorder %s22, 0
      %p168 = por %p166, %p167
      %p169 = scmp.ne.s32.totalorder %s161, %s163
      %p170 = scmp.eq.s32.totalorder %s27, 1
      %p171 = por %p169, %p170
      %p172 = scmp.ne.s32.totalorder %s163, %s164
      %p173 = scmp.eq.s32.totalorder %s27, 0
      %p174 = por %p172, %p173
      %p175 = scmp.ne.s32.totalorder %s163, %s164
      %p176 = scmp.eq.s32.totalorder %s28, 1
      %p177 = por %p175, %p176
      %p179 = scmp.ne.s32.totalorder %s164, %s178
      %p180 = scmp.eq.s32.totalorder %s28, 0
      %p181 = por %p179, %p180
      %s182 = ssub.s32 %s22, %s29
      %p183 = scmp.eq.s32.totalorder %s182, 0
      %s185 = sadd.s32 %s184, 1
      %s186 = scalar_select %p183, %s184, %s185
      %p189 = pneg %p183
      %p190 = scmp.eq.s32.totalorder %s22, 1
      %p191 = por %p189, %p190
      %p192 = scmp.ne.s32.totalorder %s184, %s187
      %p193 = scmp.eq.s32.totalorder %s22, 0
      %p194 = por %p192, %p193
      %p195 = scmp.ne.s32.totalorder %s184, %s187
      %p196 = scmp.eq.s32.totalorder %s27, 1
      %p197 = por %p195, %p196
      %p198 = scmp.ne.s32.totalorder %s187, %s188
      %p199 = scmp.eq.s32.totalorder %s27, 0
      %p200 = por %p198, %p199
      %p201 = scmp.ne.s32.totalorder %s187, %s188
      %p202 = scmp.eq.s32.totalorder %s28, 1
      %p203 = por %p201, %p202
      %p205 = scmp.ne.s32.totalorder %s188, %s204
      %p206 = scmp.eq.s32.totalorder %s28, 0
      %p207 = por %p205, %p206
      %p208 = scmp.le.s32.totalorder 1, %s22
      %p209 = scmp.lt.s32.totalorder %s22, 3
      %p210 = pnand %p208, %p209
      %p211 = pneg %p210
      // Predicated region
      $region9: #{basic_block_pallas.1} parent=5 // pred_check
        _
      $region10: #{basic_block_pallas.1} parent=5 // pred_check_branch
        %213 = sbr.rel (%p210) target = $region12
      $region11: #{basic_block_pallas.1} parent=5 // pred_region
        %s214 = ssub.s32 %s22, 1
        // Predicated region
        $region13: #{basic_block_pallas.1} parent=11 // pred_check
          %p215 = pneg %p69
        $region14: #{basic_block_pallas.1} parent=11 // pred_check_branch
          %217 = sbr.rel (%p215) target = $region16
        $region15: #{basic_block_pallas.1} parent=11 // pred_region
          %s219 = ssub.s32 320, 320
          %220 = vsyncadd [#allocation7], %s219
          %s221 = sshll.u32 [#allocation6], 4
          %s222 = int_to_ptr.vmem [resolvable:$true] %s221
          %227 = dma.hbm_to_vmem [thread:$0]  %s1, 320, %s222, [#allocation7], 64, 64, 4
        $region16: #{basic_block_pallas.1} parent=11 // pred_fallthru
          _
        // Predicated region
        $region17: #{basic_block_pallas.1} parent=11 // pred_check
          %p228 = pneg %p90
        $region18: #{basic_block_pallas.1} parent=11 // pred_check_branch
          %230 = sbr.rel (%p228) target = $region20
        $region19: #{basic_block_pallas.1} parent=11 // pred_region
          %s232 = ssub.s32 16, 16
          %233 = vsyncadd [#allocation7], %s232
          %s235 = sshll.u32 [#allocation8], 4
          %s236 = int_to_ptr.vmem [resolvable:$true] %s235
          %238 = dma.hbm_to_vmem [thread:$0]  %s2, 16, %s236, [#allocation7]
        $region20: #{basic_block_pallas.1} parent=11 // pred_fallthru
          _
        // Predicated region
        $region21: #{basic_block_pallas.1} parent=11 // pred_check
          %p239 = pneg %p111
        $region22: #{basic_block_pallas.1} parent=11 // pred_check_branch
          %241 = sbr.rel (%p239) target = $region24
        $region23: #{basic_block_pallas.1} parent=11 // pred_region
          %s243 = ssub.s32 16, 16
          %244 = vsyncadd [#allocation10], %s243
          %s246 = sshll.u32 [#allocation9], 4
          %s247 = int_to_ptr.vmem [resolvable:$true] %s246
          %249 = dma.hbm_to_vmem [thread:$0]  %s3, 16, %s247, [#allocation10]
        $region24: #{basic_block_pallas.1} parent=11 // pred_fallthru
          _
        // Predicated region
        $region25: #{basic_block_pallas.1} parent=11 // pred_check
          %p250 = pneg %p132
        $region26: #{basic_block_pallas.1} parent=11 // pred_check_branch
          %252 = sbr.rel (%p250) target = $region28
        $region27: #{basic_block_pallas.1} parent=11 // pred_region
          %s254 = ssub.s32 320, 320
          %255 = vsyncadd [#allocation10], %s254
          %s256 = sshll.u32 [#allocation11], 4
          %s257 = int_to_ptr.vmem [resolvable:$true] %s256
          %262 = dma.hbm_to_vmem [thread:$0]  %s4, 320, %s257, [#allocation10], 64, 64, 4
        $region28: #{basic_block_pallas.1} parent=11 // pred_fallthru
          _
        // Predicated region
        $region29: #{basic_block_pallas.1} parent=11 // pred_check
          %p263 = pneg %p153
        $region30: #{basic_block_pallas.1} parent=11 // pred_check_branch
          %265 = sbr.rel (%p263) target = $region32
        $region31: #{basic_block_pallas.1} parent=11 // pred_region
          %s267 = ssub.s32 16, 16
          %268 = vsyncadd [#allocation13], %s267
          %s270 = sshll.u32 [#allocation12], 4
          %s271 = int_to_ptr.vmem [resolvable:$true] %s270
          %273 = dma.hbm_to_vmem [thread:$0]  %s5, 16, %s271, [#allocation13]
        $region32: #{basic_block_pallas.1} parent=11 // pred_fallthru
          _
        // Predicated region
        $region33: #{basic_block_pallas.1} parent=11 // pred_check
          %p274 = pneg %p174
        $region34: #{basic_block_pallas.1} parent=11 // pred_check_branch
          %276 = sbr.rel (%p274) target = $region36
        $region35: #{basic_block_pallas.1} parent=11 // pred_region
          %s278 = ssub.s32 16, 16
          %279 = vsyncadd [#allocation13], %s278
          %s281 = sshll.u32 [#allocation14], 4
          %s282 = int_to_ptr.vmem [resolvable:$true] %s281
          %284 = dma.hbm_to_vmem [thread:$0]  %s6, 16, %s282, [#allocation13]
        $region36: #{basic_block_pallas.1} parent=11 // pred_fallthru
          _
      $region12: #{basic_block_pallas.1} parent=5 // pred_fallthru
        _
      %p285 = scmp.lt.s32.totalorder %s22, 2
      // Predicated region
      $region37: #{basic_block_pallas.1} parent=5 // pred_check
        %p286 = pneg %p285
      $region38: #{basic_block_pallas.1} parent=5 // pred_check_branch
        %288 = sbr.rel (%p286) target = $region40
      $region39: #{basic_block_pallas.1} parent=5 // pred_region
        // Predicated region
        $region41: #{basic_block_pallas.1} parent=39 // pred_check
          %p289 = pneg %p42
        $region42: #{basic_block_pallas.1} parent=39 // pred_check_branch
          %291 = sbr.rel (%p289) target = $region44
        $region43: #{basic_block_pallas.1} parent=39 // pred_region
          %s292 = sand.u32 %s32, 1
          %s293 = scalar_lea.sflag [#allocation4], %s292
          %s294 = sand.u32 %s32, 1
          %s295 = smul.addr %s294, 216
          %s296 = scalar_lea.vmem [#allocation3], %s295
          %s298 = ssub.s32 3456, 3456
          %299 = vsyncadd %s293, %s298
          %s300 = smul.addr %s22, 54
          %s301 = smul.addr %s300, 64
          %s302 = scalar_lea.hbm %s0, %s301
          %s303 = sshll.u32 %s296, 4
          %s304 = int_to_ptr.vmem [resolvable:$true] %s303
          %309 = dma.hbm_to_vmem [thread:$0]  %s302, 3456, %s304, %s293, 64, 64, 4
        $region44: #{basic_block_pallas.1} parent=39 // pred_fallthru
          _
      $region40: #{basic_block_pallas.1} parent=5 // pred_fallthru
        _
      %p310 = scmp.le.s32.totalorder 1, %s22
      %p311 = scmp.lt.s32.totalorder %s22, 3
      %p312 = pnand %p310, %p311
      %p313 = pneg %p312
      // Predicated region
      $region45: #{basic_block_pallas.1} parent=5 // pred_check
        _
      $region46: #{basic_block_pallas.1} parent=5 // pred_check_branch
        %315 = sbr.rel (%p312) target = $region48
      $region47: #{basic_block_pallas.1} parent=5 // pred_region
        %s316 = ssub.s32 %s22, 1
        %s317 = sand.u32 %s35, 1
        %s318 = scalar_lea.sflag [#allocation4], %s317
        %s319 = sand.u32 %s35, 1
        %s320 = smul.addr %s319, 216
        %s321 = scalar_lea.vmem [#allocation3], %s320
        // Predicated region
        $region49: #{basic_block_pallas.1} parent=47 // pred_check
          %p322 = pneg %p48
        $region50: #{basic_block_pallas.1} parent=47 // pred_check_branch
          %324 = sbr.rel (%p322) target = $region52
        $region51: #{basic_block_pallas.1} parent=47 // pred_region
          %325 = dma.done %s318, 3456
        $region52: #{basic_block_pallas.1} parent=47 // pred_fallthru
          _
        // Predicated region
        $region53: #{basic_block_pallas.1} parent=47 // pred_check
          %p326 = pneg %p69
        $region54: #{basic_block_pallas.1} parent=47 // pred_check_branch
          %328 = sbr.rel (%p326) target = $region56
        $region55: #{basic_block_pallas.1} parent=47 // pred_region
          %329 = dma.done [#allocation7], 320
        $region56: #{basic_block_pallas.1} parent=47 // pred_fallthru
          _
        // Predicated region
        $region57: #{basic_block_pallas.1} parent=47 // pred_check
          %p330 = pneg %p90
        $region58: #{basic_block_pallas.1} parent=47 // pred_check_branch
          %332 = sbr.rel (%p330) target = $region60
        $region59: #{basic_block_pallas.1} parent=47 // pred_region
          %333 = dma.done [#allocation7], 16
        $region60: #{basic_block_pallas.1} parent=47 // pred_fallthru
          _
        // Predicated region
        $region61: #{basic_block_pallas.1} parent=47 // pred_check
          %p334 = pneg %p111
        $region62: #{basic_block_pallas.1} parent=47 // pred_check_branch
          %336 = sbr.rel (%p334) target = $region64
        $region63: #{basic_block_pallas.1} parent=47 // pred_region
          %337 = dma.done [#allocation10], 16
        $region64: #{basic_block_pallas.1} parent=47 // pred_fallthru
          _
        // Predicated region
        $region65: #{basic_block_pallas.1} parent=47 // pred_check
          %p338 = pneg %p132
        $region66: #{basic_block_pallas.1} parent=47 // pred_check_branch
          %340 = sbr.rel (%p338) target = $region68
        $region67: #{basic_block_pallas.1} parent=47 // pred_region
          %341 = dma.done [#allocation10], 320
        $region68: #{basic_block_pallas.1} parent=47 // pred_fallthru
          _
        // Predicated region
        $region69: #{basic_block_pallas.1} parent=47 // pred_check
          %p342 = pneg %p153
        $region70: #{basic_block_pallas.1} parent=47 // pred_check_branch
          %344 = sbr.rel (%p342) target = $region72
        $region71: #{basic_block_pallas.1} parent=47 // pred_region
          %345 = dma.done [#allocation13], 16
        $region72: #{basic_block_pallas.1} parent=47 // pred_fallthru
          _
        // Predicated region
        $region73: #{basic_block_pallas.1} parent=47 // pred_check
          %p346 = pneg %p174
        $region74: #{basic_block_pallas.1} parent=47 // pred_check_branch
          %348 = sbr.rel (%p346) target = $region76
        $region75: #{basic_block_pallas.1} parent=47 // pred_region
          %349 = dma.done [#allocation13], 16
        $region76: #{basic_block_pallas.1} parent=47 // pred_fallthru
          _
        %s350 = sand.u32 %s35, 1
        %s351 = scalar_lea.sflag [#allocation4], %s350
        %s352 = sand.u32 %s35, 1
        %s353 = smul.addr %s352, 216
        %s354 = scalar_lea.vmem [#allocation3], %s353
        %p355 = pneg %p48
        %p356 = pneg %p45
        %p357 = pneg %p69
        %p358 = pneg %p66
        %p359 = pneg %p90
        %p360 = pneg %p87
        %p361 = pneg %p111
        %p362 = pneg %p108
        %p363 = pneg %p132
        %p364 = pneg %p129
        %p365 = pneg %p153
        %p366 = pneg %p150
        %p367 = pneg %p174
        %p368 = pneg %p171
        %p369 = pneg %p200
        %p370 = pneg %p197
        %s371 = sand.u32 %s187, 1
        %s372 = scalar_lea.sflag [#allocation5], %s371
        %s373 = sand.u32 %s187, 1
        %s374 = smul.addr %s373, 256
        %s375 = scalar_lea.vmem [#allocation15], %s374
        %v377 = vld [vmem:[%s321] sm:$0xf]
        %v378 = vld [vmem:[%s321 + $0x4] sm:$0xf]
        %v379 = vld [vmem:[%s321 + $0x8] sm:$0x1]
        %v380 = vld [vmem:[%s321 + $0xc] sm:$0xf]
        %v381 = vld [vmem:[%s321 + $0x10] sm:$0xf]
        %v382 = vld [vmem:[%s321 + $0x14] sm:$0x1]
        %v383 = vld [vmem:[%s321 + $0x18] sm:$0xf]
        %v384 = vld [vmem:[%s321 + $0x1c] sm:$0xf]
        %v385 = vld [vmem:[%s321 + $0x20] sm:$0x1]
        %v386 = vld [vmem:[%s321 + $0x24] sm:$0xf]
        %v387 = vld [vmem:[%s321 + $0x28] sm:$0xf]
        %v388 = vld [vmem:[%s321 + $0x2c] sm:$0x1]
        %v389 = vld [vmem:[%s321 + $0x30] sm:$0xf]
        %v390 = vld [vmem:[%s321 + $0x34] sm:$0xf]
        %v391 = vld [vmem:[%s321 + $0x38] sm:$0x1]
        %v392 = vld [vmem:[%s321 + $0x3c] sm:$0xf]
        %v393 = vld [vmem:[%s321 + $0x40] sm:$0xf]
        %v394 = vld [vmem:[%s321 + $0x44] sm:$0x1]
        %v395 = vld [vmem:[%s321 + $0x48] sm:$0xf]
        %v396 = vld [vmem:[%s321 + $0x4c] sm:$0xf]
        %v397 = vld [vmem:[%s321 + $0x50] sm:$0x1]
        %v398 = vld [vmem:[%s321 + $0x54] sm:$0xf]
        %v399 = vld [vmem:[%s321 + $0x58] sm:$0xf]
        %v400 = vld [vmem:[%s321 + $0x5c] sm:$0x1]
        %v401 = vld [vmem:[%s321 + $0x60] sm:$0xf]
        %v402 = vld [vmem:[%s321 + $0x64] sm:$0xf]
        %v403 = vld [vmem:[%s321 + $0x68] sm:$0x1]
        %v404 = vld [vmem:[%s321 + $0x6c] sm:$0xf]
        %v405 = vld [vmem:[%s321 + $0x70] sm:$0xf]
        %v406 = vld [vmem:[%s321 + $0x74] sm:$0x1]
        %v407 = vld [vmem:[%s321 + $0x78] sm:$0xf]
        %v408 = vld [vmem:[%s321 + $0x7c] sm:$0xf]
        %v409 = vld [vmem:[%s321 + $0x80] sm:$0x1]
        %v410 = vld [vmem:[%s321 + $0x84] sm:$0xf]
        %v411 = vld [vmem:[%s321 + $0x88] sm:$0xf]
        %v412 = vld [vmem:[%s321 + $0x8c] sm:$0x1]
        %v413 = vld [vmem:[%s321 + $0x90] sm:$0xf]
        %v414 = vld [vmem:[%s321 + $0x94] sm:$0xf]
        %v415 = vld [vmem:[%s321 + $0x98] sm:$0x1]
        %v416 = vld [vmem:[%s321 + $0x9c] sm:$0xf]
        %v417 = vld [vmem:[%s321 + $0xa0] sm:$0xf]
        %v418 = vld [vmem:[%s321 + $0xa4] sm:$0x1]
        %v419 = vld [vmem:[%s321 + $0xa8] sm:$0xf]
        %v420 = vld [vmem:[%s321 + $0xac] sm:$0xf]
        %v421 = vld [vmem:[%s321 + $0xb0] sm:$0x1]
        %v422 = vld [vmem:[%s321 + $0xb4] sm:$0xf]
        %v423 = vld [vmem:[%s321 + $0xb8] sm:$0xf]
        %v424 = vld [vmem:[%s321 + $0xbc] sm:$0x1]
        %v425 = vld [vmem:[%s321 + $0xc0] sm:$0xf]
        %v426 = vld [vmem:[%s321 + $0xc4] sm:$0xf]
        %v427 = vld [vmem:[%s321 + $0xc8] sm:$0x1]
        %v428 = vld [vmem:[%s321 + $0xcc] sm:$0xf]
        %v429 = vld [vmem:[%s321 + $0xd0] sm:$0xf]
        %v430 = vld [vmem:[%s321 + $0xd4] sm:$0x1]
        %v463 = vunpack.c.l.b16 %v377
        %v464 = vunpack.c.l.b16 %v378
        %v465 = vunpack.c.l.b16 %v380
        %v466 = vunpack.c.l.b16 %v381
        %v467 = vunpack.c.l.b16 %v383
        %v468 = vunpack.c.l.b16 %v384
        %v469 = vunpack.c.l.b16 %v386
        %v470 = vunpack.c.l.b16 %v387
        %v471 = vunpack.c.l.b16 %v389
        %v472 = vunpack.c.l.b16 %v390
        %v473 = vunpack.c.l.b16 %v392
        %v474 = vunpack.c.l.b16 %v393
        %v475 = vunpack.c.l.b16 %v395
        %v476 = vunpack.c.l.b16 %v396
        %v477 = vunpack.c.l.b16 %v398
        %v478 = vunpack.c.l.b16 %v399
        %v479 = vunpack.c.l.b16 %v401
        %v480 = vunpack.c.l.b16 %v402
        %v481 = vunpack.c.l.b16 %v404
        %v482 = vunpack.c.l.b16 %v405
        %v483 = vunpack.c.l.b16 %v407
        %v484 = vunpack.c.l.b16 %v408
        %v485 = vunpack.c.l.b16 %v410
        %v486 = vunpack.c.l.b16 %v411
        %v487 = vunpack.c.l.b16 %v413
        %v488 = vunpack.c.l.b16 %v414
        %v489 = vunpack.c.l.b16 %v416
        %v490 = vunpack.c.l.b16 %v417
        %v491 = vunpack.c.l.b16 %v419
        %v492 = vunpack.c.l.b16 %v420
        %v493 = vunpack.c.l.b16 %v422
        %v494 = vunpack.c.l.b16 %v423
        %v495 = vpack.c.b16 %v464, %v463
        %v496 = vpack.c.b16 %v466, %v465
        %v497 = vpack.c.b16 %v468, %v467
        %v498 = vpack.c.b16 %v470, %v469
        %v499 = vpack.c.b16 %v472, %v471
        %v500 = vpack.c.b16 %v474, %v473
        %v501 = vpack.c.b16 %v476, %v475
        %v502 = vpack.c.b16 %v478, %v477
        %v503 = vpack.c.b16 %v480, %v479
        %v504 = vpack.c.b16 %v482, %v481
        %v505 = vpack.c.b16 %v484, %v483
        %v506 = vpack.c.b16 %v486, %v485
        %v507 = vpack.c.b16 %v488, %v487
        %v508 = vpack.c.b16 %v490, %v489
        %v509 = vpack.c.b16 %v492, %v491
        %v510 = vpack.c.b16 %v494, %v493
        %v527 = vunpack.c.l.b16 %v379
        %v528 = vunpack.c.l.b16 %v382
        %v529 = vunpack.c.l.b16 %v385
        %v530 = vunpack.c.l.b16 %v388
        %v531 = vunpack.c.l.b16 %v391
        %v532 = vunpack.c.l.b16 %v394
        %v533 = vunpack.c.l.b16 %v397
        %v534 = vunpack.c.l.b16 %v400
        %v535 = vunpack.c.l.b16 %v403
        %v536 = vunpack.c.l.b16 %v406
        %v537 = vunpack.c.l.b16 %v409
        %v538 = vunpack.c.l.b16 %v412
        %v539 = vunpack.c.l.b16 %v415
        %v540 = vunpack.c.l.b16 %v418
        %v541 = vunpack.c.l.b16 %v421
        %v542 = vunpack.c.l.b16 %v424
        %v543 = vpack.c.b16 %v527, %v527
        %v544 = vpack.c.b16 %v528, %v528
        %v545 = vpack.c.b16 %v529, %v529
        %v546 = vpack.c.b16 %v530, %v530
        %v547 = vpack.c.b16 %v531, %v531
        %v548 = vpack.c.b16 %v532, %v532
        %v549 = vpack.c.b16 %v533, %v533
        %v550 = vpack.c.b16 %v534, %v534
        %v551 = vpack.c.b16 %v535, %v535
        %v552 = vpack.c.b16 %v536, %v536
        %v553 = vpack.c.b16 %v537, %v537
        %v554 = vpack.c.b16 %v538, %v538
        %v555 = vpack.c.b16 %v539, %v539
        %v556 = vpack.c.b16 %v540, %v540
        %v557 = vpack.c.b16 %v541, %v541
        %v558 = vpack.c.b16 %v542, %v542
        %vm559 = vsmask.f32 7424
        %v561 = vshrl.u32 %v495, 16
        %v563 = vshll.u32 %v495, 16
        %v565 = vrot.slane %v563, 1
        %v566 = vor.u32 %v561, %v565
        %v568 = vshll.u32 %v543, 16
        %v570 = vrot.slane %v568, 1
        %v571 = vsel %vm559, %v566, %v570
        %v573 = vshrl.u32 %v496, 16
        %v575 = vshll.u32 %v496, 16
        %v577 = vrot.slane %v575, 1
        %v578 = vor.u32 %v573, %v577
        %v580 = vshll.u32 %v544, 16
        %v582 = vrot.slane %v580, 1
        %v583 = vsel %vm559, %v578, %v582
        %v585 = vshrl.u32 %v497, 16
        %v587 = vshll.u32 %v497, 16
        %v589 = vrot.slane %v587, 1
        %v590 = vor.u32 %v585, %v589
        %v592 = vshll.u32 %v545, 16
        %v594 = vrot.slane %v592, 1
        %v595 = vsel %vm559, %v590, %v594
        %v597 = vshrl.u32 %v498, 16
        %v599 = vshll.u32 %v498, 16
        %v601 = vrot.slane %v599, 1
        %v602 = vor.u32 %v597, %v601
        %v604 = vshll.u32 %v546, 16
        %v606 = vrot.slane %v604, 1
        %v607 = vsel %vm559, %v602, %v606
        %v609 = vshrl.u32 %v499, 16
        %v611 = vshll.u32 %v499, 16
        %v613 = vrot.slane %v611, 1
        %v614 = vor.u32 %v609, %v613
        %v616 = vshll.u32 %v547, 16
        %v618 = vrot.slane %v616, 1
        %v619 = vsel %vm559, %v614, %v618
        %v621 = vshrl.u32 %v500, 16
        %v623 = vshll.u32 %v500, 16
        %v625 = vrot.slane %v623, 1
        %v626 = vor.u32 %v621, %v625
        %v628 = vshll.u32 %v548, 16
        %v630 = vrot.slane %v628, 1
        %v631 = vsel %vm559, %v626, %v630
        %v633 = vshrl.u32 %v501, 16
        %v635 = vshll.u32 %v501, 16
        %v637 = vrot.slane %v635, 1
        %v638 = vor.u32 %v633, %v637
        %v640 = vshll.u32 %v549, 16
        %v642 = vrot.slane %v640, 1
        %v643 = vsel %vm559, %v638, %v642
        %v645 = vshrl.u32 %v502, 16
        %v647 = vshll.u32 %v502, 16
        %v649 = vrot.slane %v647, 1
        %v650 = vor.u32 %v645, %v649
        %v652 = vshll.u32 %v550, 16
        %v654 = vrot.slane %v652, 1
        %v655 = vsel %vm559, %v650, %v654
        %v657 = vshrl.u32 %v503, 16
        %v659 = vshll.u32 %v503, 16
        %v661 = vrot.slane %v659, 1
        %v662 = vor.u32 %v657, %v661
        %v664 = vshll.u32 %v551, 16
        %v666 = vrot.slane %v664, 1
        %v667 = vsel %vm559, %v662, %v666
        %v669 = vshrl.u32 %v504, 16
        %v671 = vshll.u32 %v504, 16
        %v673 = vrot.slane %v671, 1
        %v674 = vor.u32 %v669, %v673
        %v676 = vshll.u32 %v552, 16
        %v678 = vrot.slane %v676, 1
        %v679 = vsel %vm559, %v674, %v678
        %v681 = vshrl.u32 %v505, 16
        %v683 = vshll.u32 %v505, 16
        %v685 = vrot.slane %v683, 1
        %v686 = vor.u32 %v681, %v685
        %v688 = vshll.u32 %v553, 16
        %v690 = vrot.slane %v688, 1
        %v691 = vsel %vm559, %v686, %v690
        %v693 = vshrl.u32 %v506, 16
        %v695 = vshll.u32 %v506, 16
        %v697 = vrot.slane %v695, 1
        %v698 = vor.u32 %v693, %v697
        %v700 = vshll.u32 %v554, 16
        %v702 = vrot.slane %v700, 1
        %v703 = vsel %vm559, %v698, %v702
        %v705 = vshrl.u32 %v507, 16
        %v707 = vshll.u32 %v507, 16
        %v709 = vrot.slane %v707, 1
        %v710 = vor.u32 %v705, %v709
        %v712 = vshll.u32 %v555, 16
        %v714 = vrot.slane %v712, 1
        %v715 = vsel %vm559, %v710, %v714
        %v717 = vshrl.u32 %v508, 16
        %v719 = vshll.u32 %v508, 16
        %v721 = vrot.slane %v719, 1
        %v722 = vor.u32 %v717, %v721
        %v724 = vshll.u32 %v556, 16
        %v726 = vrot.slane %v724, 1
        %v727 = vsel %vm559, %v722, %v726
        %v729 = vshrl.u32 %v509, 16
        %v731 = vshll.u32 %v509, 16
        %v733 = vrot.slane %v731, 1
        %v734 = vor.u32 %v729, %v733
        %v736 = vshll.u32 %v557, 16
        %v738 = vrot.slane %v736, 1
        %v739 = vsel %vm559, %v734, %v738
        %v741 = vshrl.u32 %v510, 16
        %v743 = vshll.u32 %v510, 16
        %v745 = vrot.slane %v743, 1
        %v746 = vor.u32 %v741, %v745
        %v748 = vshll.u32 %v558, 16
        %v750 = vrot.slane %v748, 1
        %v751 = vsel %vm559, %v746, %v750
        %752 = vrot.lane.b32.xlu0 %v571, 4
        %v753 = vpop.permute.xlu0 %752
        %754 = vrot.lane.b32.xlu0 %v583, 4
        %v755 = vpop.permute.xlu0 %754
        %756 = vrot.lane.b32.xlu0 %v595, 4
        %v757 = vpop.permute.xlu0 %756
        %758 = vrot.lane.b32.xlu0 %v607, 4
        %v759 = vpop.permute.xlu0 %758
        %760 = vrot.lane.b32.xlu0 %v619, 4
        %v761 = vpop.permute.xlu0 %760
        %762 = vrot.lane.b32.xlu0 %v631, 4
        %v763 = vpop.permute.xlu0 %762
        %764 = vrot.lane.b32.xlu0 %v643, 4
        %v765 = vpop.permute.xlu0 %764
        %766 = vrot.lane.b32.xlu0 %v655, 4
        %v767 = vpop.permute.xlu0 %766
        %768 = vrot.lane.b32.xlu0 %v667, 4
        %v769 = vpop.permute.xlu0 %768
        %770 = vrot.lane.b32.xlu0 %v679, 4
        %v771 = vpop.permute.xlu0 %770
        %772 = vrot.lane.b32.xlu0 %v691, 4
        %v773 = vpop.permute.xlu0 %772
        %774 = vrot.lane.b32.xlu0 %v703, 4
        %v775 = vpop.permute.xlu0 %774
        %776 = vrot.lane.b32.xlu0 %v715, 4
        %v777 = vpop.permute.xlu0 %776
        %778 = vrot.lane.b32.xlu0 %v727, 4
        %v779 = vpop.permute.xlu0 %778
        %780 = vrot.lane.b32.xlu0 %v739, 4
        %v781 = vpop.permute.xlu0 %780
        %782 = vrot.lane.b32.xlu0 %v751, 4
        %v783 = vpop.permute.xlu0 %782
        %vm784 = vcmask 1046528
        %v785 = vrot.slane %v495, 1
        %v786 = vrot.slane %v543, 1
        %v787 = vsel %vm784, %v785, %v786
        %v788 = vrot.slane %v496, 1
        %v789 = vrot.slane %v544, 1
        %v790 = vsel %vm784, %v788, %v789
        %v791 = vrot.slane %v497, 1
        %v792 = vrot.slane %v545, 1
        %v793 = vsel %vm784, %v791, %v792
        %v794 = vrot.slane %v498, 1
        %v795 = vrot.slane %v546, 1
        %v796 = vsel %vm784, %v794, %v795
        %v797 = vrot.slane %v499, 1
        %v798 = vrot.slane %v547, 1
        %v799 = vsel %vm784, %v797, %v798
        %v800 = vrot.slane %v500, 1
        %v801 = vrot.slane %v548, 1
        %v802 = vsel %vm784, %v800, %v801
        %v803 = vrot.slane %v501, 1
        %v804 = vrot.slane %v549, 1
        %v805 = vsel %vm784, %v803, %v804
        %v806 = vrot.slane %v502, 1
        %v807 = vrot.slane %v550, 1
        %v808 = vsel %vm784, %v806, %v807
        %v809 = vrot.slane %v503, 1
        %v810 = vrot.slane %v551, 1
        %v811 = vsel %vm784, %v809, %v810
        %v812 = vrot.slane %v504, 1
        %v813 = vrot.slane %v552, 1
        %v814 = vsel %vm784, %v812, %v813
        %v815 = vrot.slane %v505, 1
        %v816 = vrot.slane %v553, 1
        %v817 = vsel %vm784, %v815, %v816
        %v818 = vrot.slane %v506, 1
        %v819 = vrot.slane %v554, 1
        %v820 = vsel %vm784, %v818, %v819
        %v821 = vrot.slane %v507, 1
        %v822 = vrot.slane %v555, 1
        %v823 = vsel %vm784, %v821, %v822
        %v824 = vrot.slane %v508, 1
        %v825 = vrot.slane %v556, 1
        %v826 = vsel %vm784, %v824, %v825
        %v827 = vrot.slane %v509, 1
        %v828 = vrot.slane %v557, 1
        %v829 = vsel %vm784, %v827, %v828
        %v830 = vrot.slane %v510, 1
        %v831 = vrot.slane %v558, 1
        %v832 = vsel %vm784, %v830, %v831
        %833 = vrot.lane.b32.xlu0 %v787, 8
        %v834 = vpop.permute.xlu0 %833
        %835 = vrot.lane.b32.xlu0 %v790, 8
        %v836 = vpop.permute.xlu0 %835
        %837 = vrot.lane.b32.xlu0 %v793, 8
        %v838 = vpop.permute.xlu0 %837
        %839 = vrot.lane.b32.xlu0 %v796, 8
        %v840 = vpop.permute.xlu0 %839
        %841 = vrot.lane.b32.xlu0 %v799, 8
        %v842 = vpop.permute.xlu0 %841
        %843 = vrot.lane.b32.xlu0 %v802, 8
        %v844 = vpop.permute.xlu0 %843
        %845 = vrot.lane.b32.xlu0 %v805, 8
        %v846 = vpop.permute.xlu0 %845
        %847 = vrot.lane.b32.xlu0 %v808, 8
        %v848 = vpop.permute.xlu0 %847
        %849 = vrot.lane.b32.xlu0 %v811, 8
        %v850 = vpop.permute.xlu0 %849
        %851 = vrot.lane.b32.xlu0 %v814, 8
        %v852 = vpop.permute.xlu0 %851
        %853 = vrot.lane.b32.xlu0 %v817, 8
        %v854 = vpop.permute.xlu0 %853
        %855 = vrot.lane.b32.xlu0 %v820, 8
        %v856 = vpop.permute.xlu0 %855
        %857 = vrot.lane.b32.xlu0 %v823, 8
        %v858 = vpop.permute.xlu0 %857
        %859 = vrot.lane.b32.xlu0 %v826, 8
        %v860 = vpop.permute.xlu0 %859
        %861 = vrot.lane.b32.xlu0 %v829, 8
        %v862 = vpop.permute.xlu0 %861
        %863 = vrot.lane.b32.xlu0 %v832, 8
        %v864 = vpop.permute.xlu0 %863
        %v867 = vunpack.c.l.b16 %v425
        %v868 = vunpack.c.l.b16 %v426
        %v869 = vpack.c.b16 %v868, %v867
        %870 = vrot.lane.b32.xlu0 %v496, 12
        %v871 = vpop.permute.xlu0 %870
        %872 = vrot.lane.b32.xlu0 %v497, 12
        %v873 = vpop.permute.xlu0 %872
        %874 = vrot.lane.b32.xlu0 %v498, 12
        %v875 = vpop.permute.xlu0 %874
        %876 = vrot.lane.b32.xlu0 %v499, 12
        %v877 = vpop.permute.xlu0 %876
        %878 = vrot.lane.b32.xlu0 %v500, 12
        %v879 = vpop.permute.xlu0 %878
        %880 = vrot.lane.b32.xlu0 %v501, 12
        %v881 = vpop.permute.xlu0 %880
        %882 = vrot.lane.b32.xlu0 %v502, 12
        %v883 = vpop.permute.xlu0 %882
        %884 = vrot.lane.b32.xlu0 %v503, 12
        %v885 = vpop.permute.xlu0 %884
        %886 = vrot.lane.b32.xlu0 %v504, 12
        %v887 = vpop.permute.xlu0 %886
        %888 = vrot.lane.b32.xlu0 %v505, 12
        %v889 = vpop.permute.xlu0 %888
        %890 = vrot.lane.b32.xlu0 %v506, 12
        %v891 = vpop.permute.xlu0 %890
        %892 = vrot.lane.b32.xlu0 %v507, 12
        %v893 = vpop.permute.xlu0 %892
        %894 = vrot.lane.b32.xlu0 %v508, 12
        %v895 = vpop.permute.xlu0 %894
        %896 = vrot.lane.b32.xlu0 %v509, 12
        %v897 = vpop.permute.xlu0 %896
        %898 = vrot.lane.b32.xlu0 %v510, 12
        %v899 = vpop.permute.xlu0 %898
        %900 = vrot.lane.b32.xlu0 %v869, 12
        %v901 = vpop.permute.xlu0 %900
        %v903 = vunpack.c.l.b16 %v427
        %v904 = vpack.c.b16 %v903, %v903
        %v906 = vshrl.u32 %v869, 16
        %v908 = vshll.u32 %v869, 16
        %v910 = vrot.slane %v908, 1
        %v911 = vor.u32 %v906, %v910
        %v913 = vshll.u32 %v904, 16
        %v915 = vrot.slane %v913, 1
        %v916 = vsel %vm559, %v911, %v915
        %917 = vrot.lane.b32.xlu0 %v583, 16
        %v918 = vpop.permute.xlu0 %917
        %919 = vrot.lane.b32.xlu0 %v595, 16
        %v920 = vpop.permute.xlu0 %919
        %921 = vrot.lane.b32.xlu0 %v607, 16
        %v922 = vpop.permute.xlu0 %921
        %923 = vrot.lane.b32.xlu0 %v619, 16
        %v924 = vpop.permute.xlu0 %923
        %925 = vrot.lane.b32.xlu0 %v631, 16
        %v926 = vpop.permute.xlu0 %925
        %927 = vrot.lane.b32.xlu0 %v643, 16
        %v928 = vpop.permute.xlu0 %927
        %929 = vrot.lane.b32.xlu0 %v655, 16
        %v930 = vpop.permute.xlu0 %929
        %931 = vrot.lane.b32.xlu0 %v667, 16
        %v932 = vpop.permute.xlu0 %931
        %933 = vrot.lane.b32.xlu0 %v679, 16
        %v934 = vpop.permute.xlu0 %933
        %935 = vrot.lane.b32.xlu0 %v691, 16
        %v936 = vpop.permute.xlu0 %935
        %937 = vrot.lane.b32.xlu0 %v703, 16
        %v938 = vpop.permute.xlu0 %937
        %939 = vrot.lane.b32.xlu0 %v715, 16
        %v940 = vpop.permute.xlu0 %939
        %941 = vrot.lane.b32.xlu0 %v727, 16
        %v942 = vpop.permute.xlu0 %941
        %943 = vrot.lane.b32.xlu0 %v739, 16
        %v944 = vpop.permute.xlu0 %943
        %945 = vrot.lane.b32.xlu0 %v751, 16
        %v946 = vpop.permute.xlu0 %945
        %947 = vrot.lane.b32.xlu0 %v916, 16
        %v948 = vpop.permute.xlu0 %947
        %v949 = vrot.slane %v869, 1
        %v950 = vrot.slane %v904, 1
        %v951 = vsel %vm784, %v949, %v950
        %952 = vrot.lane.b32.xlu0 %v790, 20
        %v953 = vpop.permute.xlu0 %952
        %954 = vrot.lane.b32.xlu0 %v793, 20
        %v955 = vpop.permute.xlu0 %954
        %956 = vrot.lane.b32.xlu0 %v796, 20
        %v957 = vpop.permute.xlu0 %956
        %958 = vrot.lane.b32.xlu0 %v799, 20
        %v959 = vpop.permute.xlu0 %958
        %960 = vrot.lane.b32.xlu0 %v802, 20
        %v961 = vpop.permute.xlu0 %960
        %962 = vrot.lane.b32.xlu0 %v805, 20
        %v963 = vpop.permute.xlu0 %962
        %964 = vrot.lane.b32.xlu0 %v808, 20
        %v965 = vpop.permute.xlu0 %964
        %966 = vrot.lane.b32.xlu0 %v811, 20
        %v967 = vpop.permute.xlu0 %966
        %968 = vrot.lane.b32.xlu0 %v814, 20
        %v969 = vpop.permute.xlu0 %968
        %970 = vrot.lane.b32.xlu0 %v817, 20
        %v971 = vpop.permute.xlu0 %970
        %972 = vrot.lane.b32.xlu0 %v820, 20
        %v973 = vpop.permute.xlu0 %972
        %974 = vrot.lane.b32.xlu0 %v823, 20
        %v975 = vpop.permute.xlu0 %974
        %976 = vrot.lane.b32.xlu0 %v826, 20
        %v977 = vpop.permute.xlu0 %976
        %978 = vrot.lane.b32.xlu0 %v829, 20
        %v979 = vpop.permute.xlu0 %978
        %980 = vrot.lane.b32.xlu0 %v832, 20
        %v981 = vpop.permute.xlu0 %980
        %982 = vrot.lane.b32.xlu0 %v951, 20
        %v983 = vpop.permute.xlu0 %982
        %v986 = vunpack.c.l.b16 %v428
        %v987 = vunpack.c.l.b16 %v429
        %v988 = vpack.c.b16 %v987, %v986
        %989 = vrot.lane.b32.xlu0 %v497, 24
        %v990 = vpop.permute.xlu0 %989
        %991 = vrot.lane.b32.xlu0 %v498, 24
        %v992 = vpop.permute.xlu0 %991
        %993 = vrot.lane.b32.xlu0 %v499, 24
        %v994 = vpop.permute.xlu0 %993
        %995 = vrot.lane.b32.xlu0 %v500, 24
        %v996 = vpop.permute.xlu0 %995
        %997 = vrot.lane.b32.xlu0 %v501, 24
        %v998 = vpop.permute.xlu0 %997
        %999 = vrot.lane.b32.xlu0 %v502, 24
        %v1000 = vpop.permute.xlu0 %999
        %1001 = vrot.lane.b32.xlu0 %v503, 24
        %v1002 = vpop.permute.xlu0 %1001
        %1003 = vrot.lane.b32.xlu0 %v504, 24
        %v1004 = vpop.permute.xlu0 %1003
        %1005 = vrot.lane.b32.xlu0 %v505, 24
        %v1006 = vpop.permute.xlu0 %1005
        %1007 = vrot.lane.b32.xlu0 %v506, 24
        %v1008 = vpop.permute.xlu0 %1007
        %1009 = vrot.lane.b32.xlu0 %v507, 24
        %v1010 = vpop.permute.xlu0 %1009
        %1011 = vrot.lane.b32.xlu0 %v508, 24
        %v1012 = vpop.permute.xlu0 %1011
        %1013 = vrot.lane.b32.xlu0 %v509, 24
        %v1014 = vpop.permute.xlu0 %1013
        %1015 = vrot.lane.b32.xlu0 %v510, 24
        %v1016 = vpop.permute.xlu0 %1015
        %1017 = vrot.lane.b32.xlu0 %v869, 24
        %v1018 = vpop.permute.xlu0 %1017
        %1019 = vrot.lane.b32.xlu0 %v988, 24
        %v1020 = vpop.permute.xlu0 %1019
        %v1022 = vunpack.c.l.b16 %v430
        %v1023 = vpack.c.b16 %v1022, %v1022
        %v1025 = vshrl.u32 %v988, 16
        %v1027 = vshll.u32 %v988, 16
        %v1029 = vrot.slane %v1027, 1
        %v1030 = vor.u32 %v1025, %v1029
        %v1032 = vshll.u32 %v1023, 16
        %v1034 = vrot.slane %v1032, 1
        %v1035 = vsel %vm559, %v1030, %v1034
        %1036 = vrot.lane.b32.xlu0 %v595, 28
        %v1037 = vpop.permute.xlu0 %1036
        %1038 = vrot.lane.b32.xlu0 %v607, 28
        %v1039 = vpop.permute.xlu0 %1038
        %1040 = vrot.lane.b32.xlu0 %v619, 28
        %v1041 = vpop.permute.xlu0 %1040
        %1042 = vrot.lane.b32.xlu0 %v631, 28
        %v1043 = vpop.permute.xlu0 %1042
        %1044 = vrot.lane.b32.xlu0 %v643, 28
        %v1045 = vpop.permute.xlu0 %1044
        %1046 = vrot.lane.b32.xlu0 %v655, 28
        %v1047 = vpop.permute.xlu0 %1046
        %1048 = vrot.lane.b32.xlu0 %v667, 28
        %v1049 = vpop.permute.xlu0 %1048
        %1050 = vrot.lane.b32.xlu0 %v679, 28
        %v1051 = vpop.permute.xlu0 %1050
        %1052 = vrot.lane.b32.xlu0 %v691, 28
        %v1053 = vpop.permute.xlu0 %1052
        %1054 = vrot.lane.b32.xlu0 %v703, 28
        %v1055 = vpop.permute.xlu0 %1054
        %1056 = vrot.lane.b32.xlu0 %v715, 28
        %v1057 = vpop.permute.xlu0 %1056
        %1058 = vrot.lane.b32.xlu0 %v727, 28
        %v1059 = vpop.permute.xlu0 %1058
        %1060 = vrot.lane.b32.xlu0 %v739, 28
        %v1061 = vpop.permute.xlu0 %1060
        %1062 = vrot.lane.b32.xlu0 %v751, 28
        %v1063 = vpop.permute.xlu0 %1062
        %1064 = vrot.lane.b32.xlu0 %v916, 28
        %v1065 = vpop.permute.xlu0 %1064
        %1066 = vrot.lane.b32.xlu0 %v1035, 28
        %v1067 = vpop.permute.xlu0 %1066
        %v1068 = vrot.slane %v988, 1
        %v1069 = vrot.slane %v1023, 1
        %v1070 = vsel %vm784, %v1068, %v1069
        %1071 = vrot.lane.b32.xlu0 %v793, 32
        %v1072 = vpop.permute.xlu0 %1071
        %1073 = vrot.lane.b32.xlu0 %v796, 32
        %v1074 = vpop.permute.xlu0 %1073
        %1075 = vrot.lane.b32.xlu0 %v799, 32
        %v1076 = vpop.permute.xlu0 %1075
        %1077 = vrot.lane.b32.xlu0 %v802, 32
        %v1078 = vpop.permute.xlu0 %1077
        %1079 = vrot.lane.b32.xlu0 %v805, 32
        %v1080 = vpop.permute.xlu0 %1079
        %1081 = vrot.lane.b32.xlu0 %v808, 32
        %v1082 = vpop.permute.xlu0 %1081
        %1083 = vrot.lane.b32.xlu0 %v811, 32
        %v1084 = vpop.permute.xlu0 %1083
        %1085 = vrot.lane.b32.xlu0 %v814, 32
        %v1086 = vpop.permute.xlu0 %1085
        %1087 = vrot.lane.b32.xlu0 %v817, 32
        %v1088 = vpop.permute.xlu0 %1087
        %1089 = vrot.lane.b32.xlu0 %v820, 32
        %v1090 = vpop.permute.xlu0 %1089
        %1091 = vrot.lane.b32.xlu0 %v823, 32
        %v1092 = vpop.permute.xlu0 %1091
        %1093 = vrot.lane.b32.xlu0 %v826, 32
        %v1094 = vpop.permute.xlu0 %1093
        %1095 = vrot.lane.b32.xlu0 %v829, 32
        %v1096 = vpop.permute.xlu0 %1095
        %1097 = vrot.lane.b32.xlu0 %v832, 32
        %v1098 = vpop.permute.xlu0 %1097
        %1099 = vrot.lane.b32.xlu0 %v951, 32
        %v1100 = vpop.permute.xlu0 %1099
        %1101 = vrot.lane.b32.xlu0 %v1070, 32
        %v1102 = vpop.permute.xlu0 %1101
        %vm1103 = vcmask 31744
        %v1105 = vsel %vm1103, %v495, %v753
        %v1107 = vsel %vm1103, %v496, %v755
        %v1109 = vsel %vm1103, %v497, %v757
        %v1111 = vsel %vm1103, %v498, %v759
        %v1113 = vsel %vm1103, %v499, %v761
        %v1115 = vsel %vm1103, %v500, %v763
        %v1117 = vsel %vm1103, %v501, %v765
        %v1119 = vsel %vm1103, %v502, %v767
        %v1121 = vsel %vm1103, %v503, %v769
        %v1123 = vsel %vm1103, %v504, %v771
        %v1125 = vsel %vm1103, %v505, %v773
        %v1127 = vsel %vm1103, %v506, %v775
        %v1129 = vsel %vm1103, %v507, %v777
        %v1131 = vsel %vm1103, %v508, %v779
        %v1133 = vsel %vm1103, %v509, %v781
        %v1135 = vsel %vm1103, %v510, %v783
        %vm1136 = vcmask 64512
        %v1138 = vsel %vm1136, %v1105, %v834
        %v1140 = vsel %vm1136, %v1107, %v836
        %v1142 = vsel %vm1136, %v1109, %v838
        %v1144 = vsel %vm1136, %v1111, %v840
        %v1146 = vsel %vm1136, %v1113, %v842
        %v1148 = vsel %vm1136, %v1115, %v844
        %v1150 = vsel %vm1136, %v1117, %v846
        %v1152 = vsel %vm1136, %v1119, %v848
        %v1154 = vsel %vm1136, %v1121, %v850
        %v1156 = vsel %vm1136, %v1123, %v852
        %v1158 = vsel %vm1136, %v1125, %v854
        %v1160 = vsel %vm1136, %v1127, %v856
        %v1162 = vsel %vm1136, %v1129, %v858
        %v1164 = vsel %vm1136, %v1131, %v860
        %v1166 = vsel %vm1136, %v1133, %v862
        %v1168 = vsel %vm1136, %v1135, %v864
        %vm1169 = vcmask 97280
        %v1171 = vsel %vm1169, %v1138, %v871
        %v1173 = vsel %vm1169, %v1140, %v873
        %v1175 = vsel %vm1169, %v1142, %v875
        %v1177 = vsel %vm1169, %v1144, %v877
        %v1179 = vsel %vm1169, %v1146, %v879
        %v1181 = vsel %vm1169, %v1148, %v881
        %v1183 = vsel %vm1169, %v1150, %v883
        %v1185 = vsel %vm1169, %v1152, %v885
        %v1187 = vsel %vm1169, %v1154, %v887
        %v1189 = vsel %vm1169, %v1156, %v889
        %v1191 = vsel %vm1169, %v1158, %v891
        %v1193 = vsel %vm1169, %v1160, %v893
        %v1195 = vsel %vm1169, %v1162, %v895
        %v1197 = vsel %vm1169, %v1164, %v897
        %v1199 = vsel %vm1169, %v1166, %v899
        %v1201 = vsel %vm1169, %v1168, %v901
        %vm1202 = vcmask 130048
        %v1204 = vsel %vm1202, %v1171, %v918
        %v1206 = vsel %vm1202, %v1173, %v920
        %v1208 = vsel %vm1202, %v1175, %v922
        %v1210 = vsel %vm1202, %v1177, %v924
        %v1212 = vsel %vm1202, %v1179, %v926
        %v1214 = vsel %vm1202, %v1181, %v928
        %v1216 = vsel %vm1202, %v1183, %v930
        %v1218 = vsel %vm1202, %v1185, %v932
        %v1220 = vsel %vm1202, %v1187, %v934
        %v1222 = vsel %vm1202, %v1189, %v936
        %v1224 = vsel %vm1202, %v1191, %v938
        %v1226 = vsel %vm1202, %v1193, %v940
        %v1228 = vsel %vm1202, %v1195, %v942
        %v1230 = vsel %vm1202, %v1197, %v944
        %v1232 = vsel %vm1202, %v1199, %v946
        %v1234 = vsel %vm1202, %v1201, %v948
        %vm1235 = vcmask 162816
        %v1237 = vsel %vm1235, %v1204, %v953
        %v1239 = vsel %vm1235, %v1206, %v955
        %v1241 = vsel %vm1235, %v1208, %v957
        %v1243 = vsel %vm1235, %v1210, %v959
        %v1245 = vsel %vm1235, %v1212, %v961
        %v1247 = vsel %vm1235, %v1214, %v963
        %v1249 = vsel %vm1235, %v1216, %v965
        %v1251 = vsel %vm1235, %v1218, %v967
        %v1253 = vsel %vm1235, %v1220, %v969
        %v1255 = vsel %vm1235, %v1222, %v971
        %v1257 = vsel %vm1235, %v1224, %v973
        %v1259 = vsel %vm1235, %v1226, %v975
        %v1261 = vsel %vm1235, %v1228, %v977
        %v1263 = vsel %vm1235, %v1230, %v979
        %v1265 = vsel %vm1235, %v1232, %v981
        %v1267 = vsel %vm1235, %v1234, %v983
        %vm1268 = vcmask 195584
        %v1270 = vsel %vm1268, %v1237, %v990
        %v1272 = vsel %vm1268, %v1239, %v992
        %v1274 = vsel %vm1268, %v1241, %v994
        %v1276 = vsel %vm1268, %v1243, %v996
        %v1278 = vsel %vm1268, %v1245, %v998
        %v1280 = vsel %vm1268, %v1247, %v1000
        %v1282 = vsel %vm1268, %v1249, %v1002
        %v1284 = vsel %vm1268, %v1251, %v1004
        %v1286 = vsel %vm1268, %v1253, %v1006
        %v1288 = vsel %vm1268, %v1255, %v1008
        %v1290 = vsel %vm1268, %v1257, %v1010
        %v1292 = vsel %vm1268, %v1259, %v1012
        %v1294 = vsel %vm1268, %v1261, %v1014
        %v1296 = vsel %vm1268, %v1263, %v1016
        %v1298 = vsel %vm1268, %v1265, %v1018
        %v1300 = vsel %vm1268, %v1267, %v1020
        %vm1301 = vcmask 228352
        %v1303 = vsel %vm1301, %v1270, %v1037
        %v1305 = vsel %vm1301, %v1272, %v1039
        %v1307 = vsel %vm1301, %v1274, %v1041
        %v1309 = vsel %vm1301, %v1276, %v1043
        %v1311 = vsel %vm1301, %v1278, %v1045
        %v1313 = vsel %vm1301, %v1280, %v1047
        %v1315 = vsel %vm1301, %v1282, %v1049
        %v1317 = vsel %vm1301, %v1284, %v1051
        %v1319 = vsel %vm1301, %v1286, %v1053
        %v1321 = vsel %vm1301, %v1288, %v1055
        %v1323 = vsel %vm1301, %v1290, %v1057
        %v1325 = vsel %vm1301, %v1292, %v1059
        %v1327 = vsel %vm1301, %v1294, %v1061
        %v1329 = vsel %vm1301, %v1296, %v1063
        %v1331 = vsel %vm1301, %v1298, %v1065
        %v1333 = vsel %vm1301, %v1300, %v1067
        %vm1334 = vcmask 261120
        %v1336 = vsel %vm1334, %v1303, %v1072
        %v1338 = vsel %vm1334, %v1305, %v1074
        %v1340 = vsel %vm1334, %v1307, %v1076
        %v1342 = vsel %vm1334, %v1309, %v1078
        %v1344 = vsel %vm1334, %v1311, %v1080
        %v1346 = vsel %vm1334, %v1313, %v1082
        %v1348 = vsel %vm1334, %v1315, %v1084
        %v1350 = vsel %vm1334, %v1317, %v1086
        %v1352 = vsel %vm1334, %v1319, %v1088
        %v1354 = vsel %vm1334, %v1321, %v1090
        %v1356 = vsel %vm1334, %v1323, %v1092
        %v1358 = vsel %vm1334, %v1325, %v1094
        %v1360 = vsel %vm1334, %v1327, %v1096
        %v1362 = vsel %vm1334, %v1329, %v1098
        %v1364 = vsel %vm1334, %v1331, %v1100
        %v1366 = vsel %vm1334, %v1333, %v1102
        %v1367 = vld [vmem:[#allocation6] sm:$0xf]
        %v1368 = vld [vmem:[#allocation6 + $0x4] sm:$0xf]
        %v1369 = vld [vmem:[#allocation6 + $0x8] sm:$0xf]
        %v1370 = vld [vmem:[#allocation6 + $0xc] sm:$0xf]
        %v1371 = vld [vmem:[#allocation6 + $0x10] sm:$0x3]
        %v1377 = vunpack.c.l.b16 %v1367
        %v1378 = vunpack.c.l.b16 %v1368
        %v1379 = vunpack.c.l.b16 %v1369
        %v1380 = vunpack.c.l.b16 %v1370
        %v1381 = vunpack.c.l.b16 %v1371
        %v1382 = vpack.c.b16 %v1378, %v1377
        %v1383 = vpack.c.b16 %v1380, %v1379
        %v1384 = vpack.c.b16 %v1381, %v1381
        %vm1387 = vcmask 293888
        %v1388 = vsel %vm1387, %v1336, 0
        %v1390 = vsel %vm1387, %v1338, 0
        %v1392 = vsel %vm1387, %v1340, 0
        %v1394 = vsel %vm1387, %v1342, 0
        %v1396 = vsel %vm1387, %v1344, 0
        %v1398 = vsel %vm1387, %v1346, 0
        %v1400 = vsel %vm1387, %v1348, 0
        %v1402 = vsel %vm1387, %v1350, 0
        %v1404 = vsel %vm1387, %v1352, 0
        %v1406 = vsel %vm1387, %v1354, 0
        %v1408 = vsel %vm1387, %v1356, 0
        %v1410 = vsel %vm1387, %v1358, 0
        %v1412 = vsel %vm1387, %v1360, 0
        %v1414 = vsel %vm1387, %v1362, 0
        %v1416 = vsel %vm1387, %v1364, 0
        %v1418 = vsel %vm1387, %v1366, 0
        %vm1420 = vcmask 1041408
        %v1422 = vsel %vm1420, %v1384, 0
        %1424 = vmatprep.subr.bf16.mxu0 0
        %1425 = vmatpush1.bf16.msra.mxu0 %v1382
        %1426 = vmatprep.subr.bf16.mxu0 0
        %1427 = vmatpush1.bf16.msra.mxu0 %v1383
        %1428 = vmatprep.subr.bf16.mxu0 0
        %1429 = vmatpush1.bf16.msra.mxu0 %v1422
        %1430 = vmatprep.subr.bf16.mxu0 0
        %1431 = vmatpush1.bf16.msra.mxu0 0
        %1432 = vmatprep.subr.bf16.mxu0 0
        %1433 = vmatpush1.bf16.msra.mxu0 0
        %1434 = vmatprep.subr.bf16.mxu0 0
        %1435 = vmatpush1.bf16.msra.mxu0 0
        %1436 = vmatprep.subr.bf16.mxu0 0
        %1437 = vmatpush1.bf16.msra.mxu0 0
        %1438 = vmatprep.subr.bf16.mxu0 0
        %1439 = vmatpush1.bf16.msra.mxu0 0
        %1440 = vmatprep.subr.bf16.mxu0 0
        %1441 = vmatpush1.bf16.msra.mxu0 0
        %1442 = vmatprep.subr.bf16.mxu0 0
        %1443 = vmatpush1.bf16.msra.mxu0 0
        %1444 = vmatprep.subr.bf16.mxu0 0
        %1445 = vmatpush1.bf16.msra.mxu0 0
        %1446 = vmatprep.subr.bf16.mxu0 0
        %1447 = vmatpush1.bf16.msra.mxu0 0
        %1448 = vmatprep.subr.bf16.mxu0 0
        %1449 = vmatpush1.bf16.msra.mxu0 0
        %1450 = vmatprep.subr.bf16.mxu0 0
        %1451 = vmatpush1.bf16.msra.mxu0 0
        %1452 = vmatprep.subr.bf16.mxu0 0
        %1453 = vmatpush1.bf16.msra.mxu0 0
        %1454 = vmatprep.subr.bf16.mxu0 0
        %1455 = vmatpush1.bf16.msra.mxu0 0
        %1456 = vmatprep.mubr.bf16.mxu0 0
        %1457 = vmatmul.mubr.bf16.gmra.mrb[0].mxu0 %v1388
        %v1458 = vpop.f32.mrb[0].mxu0
        %v1459 = vadd.f32 0.0, %v1458
        %v1460 = vpop.f32.mrb[0].mxu0
        %v1461 = vpop.f32.mrb[0].mxu0
        %v1462 = vadd.f32 0.0, %v1461
        %v1463 = vpop.f32.mrb[0].mxu0
        %1464 = vmatprep.mubr.bf16.mxu0 0
        %1465 = vmatmul.mubr.bf16.gmra.mrb[0].mxu0 %v1390
        %v1466 = vpop.f32.mrb[0].mxu0
        %v1467 = vadd.f32 0.0, %v1466
        %v1468 = vpop.f32.mrb[0].mxu0
        %v1469 = vpop.f32.mrb[0].mxu0
        %v1470 = vadd.f32 0.0, %v1469
        %v1471 = vpop.f32.mrb[0].mxu0
        %1472 = vmatprep.mubr.bf16.mxu0 0
        %1473 = vmatmul.mubr.bf16.gmra.mrb[0].mxu0 %v1392
        %v1474 = vpop.f32.mrb[0].mxu0
        %v1475 = vadd.f32 0.0, %v1474
        %v1476 = vpop.f32.mrb[0].mxu0
        %v1477 = vpop.f32.mrb[0].mxu0
        %v1478 = vadd.f32 0.0, %v1477
        %v1479 = vpop.f32.mrb[0].mxu0
        %1480 = vmatprep.mubr.bf16.mxu0 0
        %1481 = vmatmul.mubr.bf16.gmra.mrb[0].mxu0 %v1394
        %v1482 = vpop.f32.mrb[0].mxu0
        %v1483 = vadd.f32 0.0, %v1482
        %v1484 = vpop.f32.mrb[0].mxu0
        %v1485 = vpop.f32.mrb[0].mxu0
        %v1486 = vadd.f32 0.0, %v1485
        %v1487 = vpop.f32.mrb[0].mxu0
        %1488 = vmatprep.mubr.bf16.mxu0 0
        %1489 = vmatmul.mubr.bf16.gmra.mrb[0].mxu0 %v1396
        %v1490 = vpop.f32.mrb[0].mxu0
        %v1491 = vadd.f32 0.0, %v1490
        %v1492 = vpop.f32.mrb[0].mxu0
        %v1493 = vpop.f32.mrb[0].mxu0
        %v1494 = vadd.f32 0.0, %v1493
        %v1495 = vpop.f32.mrb[0].mxu0
        %1496 = vmatprep.mubr.bf16.mxu0 0
        %1497 = vmatmul.mubr.bf16.gmra.mrb[0].mxu0 %v1398
        %v1498 = vpop.f32.mrb[0].mxu0
        %v1499 = vadd.f32 0.0, %v1498
        %v1500 = vpop.f32.mrb[0].mxu0
        %v1501 = vpop.f32.mrb[0].mxu0
        %v1502 = vadd.f32 0.0, %v1501
        %v1503 = vpop.f32.mrb[0].mxu0
        %1504 = vmatprep.mubr.bf16.mxu0 0
        %1505 = vmatmul.mubr.bf16.gmra.mrb[0].mxu0 %v1400
        %v1506 = vpop.f32.mrb[0].mxu0
        %v1507 = vadd.f32 0.0, %v1506
        %v1508 = vpop.f32.mrb[0].mxu0
        %v1509 = vpop.f32.mrb[0].mxu0
        %v1510 = vadd.f32 0.0, %v1509
        %v1511 = vpop.f32.mrb[0].mxu0
        %1512 = vmatprep.mubr.bf16.mxu0 0
        %1513 = vmatmul.mubr.bf16.gmra.mrb[0].mxu0 %v1402
        %v1514 = vpop.f32.mrb[0].mxu0
        %v1515 = vadd.f32 0.0, %v1514
        %v1516 = vpop.f32.mrb[0].mxu0
        %v1517 = vpop.f32.mrb[0].mxu0
        %v1518 = vadd.f32 0.0, %v1517
        %v1519 = vpop.f32.mrb[0].mxu0
        %1520 = vmatprep.mubr.bf16.mxu0 0
        %1521 = vmatmul.mubr.bf16.gmra.mrb[0].mxu0 %v1404
        %v1522 = vpop.f32.mrb[0].mxu0
        %v1523 = vadd.f32 0.0, %v1522
        %v1524 = vpop.f32.mrb[0].mxu0
        %v1525 = vpop.f32.mrb[0].mxu0
        %v1526 = vadd.f32 0.0, %v1525
        %v1527 = vpop.f32.mrb[0].mxu0
        %1528 = vmatprep.mubr.bf16.mxu0 0
        %1529 = vmatmul.mubr.bf16.gmra.mrb[0].mxu0 %v1406
        %v1530 = vpop.f32.mrb[0].mxu0
        %v1531 = vadd.f32 0.0, %v1530
        %v1532 = vpop.f32.mrb[0].mxu0
        %v1533 = vpop.f32.mrb[0].mxu0
        %v1534 = vadd.f32 0.0, %v1533
        %v1535 = vpop.f32.mrb[0].mxu0
        %1536 = vmatprep.mubr.bf16.mxu0 0
        %1537 = vmatmul.mubr.bf16.gmra.mrb[0].mxu0 %v1408
        %v1538 = vpop.f32.mrb[0].mxu0
        %v1539 = vadd.f32 0.0, %v1538
        %v1540 = vpop.f32.mrb[0].mxu0
        %v1541 = vpop.f32.mrb[0].mxu0
        %v1542 = vadd.f32 0.0, %v1541
        %v1543 = vpop.f32.mrb[0].mxu0
        %1544 = vmatprep.mubr.bf16.mxu0 0
        %1545 = vmatmul.mubr.bf16.gmra.mrb[0].mxu0 %v1410
        %v1546 = vpop.f32.mrb[0].mxu0
        %v1547 = vadd.f32 0.0, %v1546
        %v1548 = vpop.f32.mrb[0].mxu0
        %v1549 = vpop.f32.mrb[0].mxu0
        %v1550 = vadd.f32 0.0, %v1549
        %v1551 = vpop.f32.mrb[0].mxu0
        %1552 = vmatprep.mubr.bf16.mxu0 0
        %1553 = vmatmul.mubr.bf16.gmra.mrb[0].mxu0 %v1412
        %v1554 = vpop.f32.mrb[0].mxu0
        %v1555 = vadd.f32 0.0, %v1554
        %v1556 = vpop.f32.mrb[0].mxu0
        %v1557 = vpop.f32.mrb[0].mxu0
        %v1558 = vadd.f32 0.0, %v1557
        %v1559 = vpop.f32.mrb[0].mxu0
        %1560 = vmatprep.mubr.bf16.mxu0 0
        %1561 = vmatmul.mubr.bf16.gmra.mrb[0].mxu0 %v1414
        %v1562 = vpop.f32.mrb[0].mxu0
        %v1563 = vadd.f32 0.0, %v1562
        %v1564 = vpop.f32.mrb[0].mxu0
        %v1565 = vpop.f32.mrb[0].mxu0
        %v1566 = vadd.f32 0.0, %v1565
        %v1567 = vpop.f32.mrb[0].mxu0
        %1568 = vmatprep.mubr.bf16.mxu0 0
        %1569 = vmatmul.mubr.bf16.gmra.mrb[0].mxu0 %v1416
        %v1570 = vpop.f32.mrb[0].mxu0
        %v1571 = vadd.f32 0.0, %v1570
        %v1572 = vpop.f32.mrb[0].mxu0
        %v1573 = vpop.f32.mrb[0].mxu0
        %v1574 = vadd.f32 0.0, %v1573
        %v1575 = vpop.f32.mrb[0].mxu0
        %1576 = vmatprep.mubr.bf16.mxu0 0
        %1577 = vmatmul.mubr.bf16.gmra.mrb[0].mxu0 %v1418
        %v1578 = vpop.f32.mrb[0].mxu0
        %v1579 = vadd.f32 0.0, %v1578
        %v1580 = vpop.f32.mrb[0].mxu0
        %v1581 = vpop.f32.mrb[0].mxu0
        %v1582 = vadd.f32 0.0, %v1581
        %v1583 = vpop.f32.mrb[0].mxu0
        %1584 = vdwg.mxu0
        %vm1585 = vsmask.f32 3328
        %vm1586 = vsmask.f32 7440
        %vm1587 = vmor %vm1585, %vm1586
        %v1589 = vshrl.u32 %v380, 16
        %v1591 = vrot.slane %v1589, 4
        %v1592 = vshll.u32 %v380, 16
        %v1594 = vrot.slane %v1592, 5
        %v1595 = vor.u32 %v1591, %v1594
        %v1596 = vrot.slane %v1595, 4
        %v1598 = vshll.u32 %v381, 16
        %v1600 = vrot.slane %v1598, 5
        %v1601 = vsel %vm1587, %v1596, %v1600
        %v1602 = vshrl.u32 %v381, 16
        %v1604 = vrot.slane %v1602, 4
        %v1605 = vor.u32 %v1604, %v1600
        %v1606 = vrot.slane %v1605, 4
        %v1608 = vshll.u32 %v382, 16
        %v1610 = vrot.slane %v1608, 5
        %v1611 = vsel %vm1587, %v1606, %v1610
        %v1613 = vshrl.u32 %v383, 16
        %v1615 = vrot.slane %v1613, 4
        %v1616 = vshll.u32 %v383, 16
        %v1618 = vrot.slane %v1616, 5
        %v1619 = vor.u32 %v1615, %v1618
        %v1620 = vrot.slane %v1619, 4
        %v1622 = vshll.u32 %v384, 16
        %v1624 = vrot.slane %v1622, 5
        %v1625 = vsel %vm1587, %v1620, %v1624
        %v1626 = vshrl.u32 %v384, 16
        %v1628 = vrot.slane %v1626, 4
        %v1629 = vor.u32 %v1628, %v1624
        %v1630 = vrot.slane %v1629, 4
        %v1632 = vshll.u32 %v385, 16
        %v1634 = vrot.slane %v1632, 5
        %v1635 = vsel %vm1587, %v1630, %v1634
        %v1637 = vshrl.u32 %v386, 16
        %v1639 = vrot.slane %v1637, 4
        %v1640 = vshll.u32 %v386, 16
        %v1642 = vrot.slane %v1640, 5
        %v1643 = vor.u32 %v1639, %v1642
        %v1644 = vrot.slane %v1643, 4
        %v1646 = vshll.u32 %v387, 16
        %v1648 = vrot.slane %v1646, 5
        %v1649 = vsel %vm1587, %v1644, %v1648
        %v1650 = vshrl.u32 %v387, 16
        %v1652 = vrot.slane %v1650, 4
        %v1653 = vor.u32 %v1652, %v1648
        %v1654 = vrot.slane %v1653, 4
        %v1656 = vshll.u32 %v388, 16
        %v1658 = vrot.slane %v1656, 5
        %v1659 = vsel %vm1587, %v1654, %v1658
        %v1661 = vshrl.u32 %v389, 16
        %v1663 = vrot.slane %v1661, 4
        %v1664 = vshll.u32 %v389, 16
        %v1666 = vrot.slane %v1664, 5
        %v1667 = vor.u32 %v1663, %v1666
        %v1668 = vrot.slane %v1667, 4
        %v1670 = vshll.u32 %v390, 16
        %v1672 = vrot.slane %v1670, 5
        %v1673 = vsel %vm1587, %v1668, %v1672
        %v1674 = vshrl.u32 %v390, 16
        %v1676 = vrot.slane %v1674, 4
        %v1677 = vor.u32 %v1676, %v1672
        %v1678 = vrot.slane %v1677, 4
        %v1680 = vshll.u32 %v391, 16
        %v1682 = vrot.slane %v1680, 5
        %v1683 = vsel %vm1587, %v1678, %v1682
        %v1685 = vshrl.u32 %v392, 16
        %v1687 = vrot.slane %v1685, 4
        %v1688 = vshll.u32 %v392, 16
        %v1690 = vrot.slane %v1688, 5
        %v1691 = vor.u32 %v1687, %v1690
        %v1692 = vrot.slane %v1691, 4
        %v1694 = vshll.u32 %v393, 16
        %v1696 = vrot.slane %v1694, 5
        %v1697 = vsel %vm1587, %v1692, %v1696
        %v1698 = vshrl.u32 %v393, 16
        %v1700 = vrot.slane %v1698, 4
        %v1701 = vor.u32 %v1700, %v1696
        %v1702 = vrot.slane %v1701, 4
        %v1704 = vshll.u32 %v394, 16
        %v1706 = vrot.slane %v1704, 5
        %v1707 = vsel %vm1587, %v1702, %v1706
        %v1709 = vshrl.u32 %v395, 16
        %v1711 = vrot.slane %v1709, 4
        %v1712 = vshll.u32 %v395, 16
        %v1714 = vrot.slane %v1712, 5
        %v1715 = vor.u32 %v1711, %v1714
        %v1716 = vrot.slane %v1715, 4
        %v1718 = vshll.u32 %v396, 16
        %v1720 = vrot.slane %v1718, 5
        %v1721 = vsel %vm1587, %v1716, %v1720
        %v1722 = vshrl.u32 %v396, 16
        %v1724 = vrot.slane %v1722, 4
        %v1725 = vor.u32 %v1724, %v1720
        %v1726 = vrot.slane %v1725, 4
        %v1728 = vshll.u32 %v397, 16
        %v1730 = vrot.slane %v1728, 5
        %v1731 = vsel %vm1587, %v1726, %v1730
        %v1733 = vshrl.u32 %v398, 16
        %v1735 = vrot.slane %v1733, 4
        %v1736 = vshll.u32 %v398, 16
        %v1738 = vrot.slane %v1736, 5
        %v1739 = vor.u32 %v1735, %v1738
        %v1740 = vrot.slane %v1739, 4
        %v1742 = vshll.u32 %v399, 16
        %v1744 = vrot.slane %v1742, 5
        %v1745 = vsel %vm1587, %v1740, %v1744
        %v1746 = vshrl.u32 %v399, 16
        %v1748 = vrot.slane %v1746, 4
        %v1749 = vor.u32 %v1748, %v1744
        %v1750 = vrot.slane %v1749, 4
        %v1752 = vshll.u32 %v400, 16
        %v1754 = vrot.slane %v1752, 5
        %v1755 = vsel %vm1587, %v1750, %v1754
        %v1757 = vshrl.u32 %v401, 16
        %v1759 = vrot.slane %v1757, 4
        %v1760 = vshll.u32 %v401, 16
        %v1762 = vrot.slane %v1760, 5
        %v1763 = vor.u32 %v1759, %v1762
        %v1764 = vrot.slane %v1763, 4
        %v1766 = vshll.u32 %v402, 16
        %v1768 = vrot.slane %v1766, 5
        %v1769 = vsel %vm1587, %v1764, %v1768
        %v1770 = vshrl.u32 %v402, 16
        %v1772 = vrot.slane %v1770, 4
        %v1773 = vor.u32 %v1772, %v1768
        %v1774 = vrot.slane %v1773, 4
        %v1776 = vshll.u32 %v403, 16
        %v1778 = vrot.slane %v1776, 5
        %v1779 = vsel %vm1587, %v1774, %v1778
        %v1781 = vshrl.u32 %v404, 16
        %v1783 = vrot.slane %v1781, 4
        %v1784 = vshll.u32 %v404, 16
        %v1786 = vrot.slane %v1784, 5
        %v1787 = vor.u32 %v1783, %v1786
        %v1788 = vrot.slane %v1787, 4
        %v1790 = vshll.u32 %v405, 16
        %v1792 = vrot.slane %v1790, 5
        %v1793 = vsel %vm1587, %v1788, %v1792
        %v1794 = vshrl.u32 %v405, 16
        %v1796 = vrot.slane %v1794, 4
        %v1797 = vor.u32 %v1796, %v1792
        %v1798 = vrot.slane %v1797, 4
        %v1800 = vshll.u32 %v406, 16
        %v1802 = vrot.slane %v1800, 5
        %v1803 = vsel %vm1587, %v1798, %v1802
        %v1805 = vshrl.u32 %v407, 16
        %v1807 = vrot.slane %v1805, 4
        %v1808 = vshll.u32 %v407, 16
        %v1810 = vrot.slane %v1808, 5
        %v1811 = vor.u32 %v1807, %v1810
        %v1812 = vrot.slane %v1811, 4
        %v1814 = vshll.u32 %v408, 16
        %v1816 = vrot.slane %v1814, 5
        %v1817 = vsel %vm1587, %v1812, %v1816
        %v1818 = vshrl.u32 %v408, 16
        %v1820 = vrot.slane %v1818, 4
        %v1821 = vor.u32 %v1820, %v1816
        %v1822 = vrot.slane %v1821, 4
        %v1824 = vshll.u32 %v409, 16
        %v1826 = vrot.slane %v1824, 5
        %v1827 = vsel %vm1587, %v1822, %v1826
        %v1829 = vshrl.u32 %v410, 16
        %v1831 = vrot.slane %v1829, 4
        %v1832 = vshll.u32 %v410, 16
        %v1834 = vrot.slane %v1832, 5
        %v1835 = vor.u32 %v1831, %v1834
        %v1836 = vrot.slane %v1835, 4
        %v1838 = vshll.u32 %v411, 16
        %v1840 = vrot.slane %v1838, 5
        %v1841 = vsel %vm1587, %v1836, %v1840
        %v1842 = vshrl.u32 %v411, 16
        %v1844 = vrot.slane %v1842, 4
        %v1845 = vor.u32 %v1844, %v1840
        %v1846 = vrot.slane %v1845, 4
        %v1848 = vshll.u32 %v412, 16
        %v1850 = vrot.slane %v1848, 5
        %v1851 = vsel %vm1587, %v1846, %v1850
        %v1853 = vshrl.u32 %v413, 16
        %v1855 = vrot.slane %v1853, 4
        %v1856 = vshll.u32 %v413, 16
        %v1858 = vrot.slane %v1856, 5
        %v1859 = vor.u32 %v1855, %v1858
        %v1860 = vrot.slane %v1859, 4
        %v1862 = vshll.u32 %v414, 16
        %v1864 = vrot.slane %v1862, 5
        %v1865 = vsel %vm1587, %v1860, %v1864
        %v1866 = vshrl.u32 %v414, 16
        %v1868 = vrot.slane %v1866, 4
        %v1869 = vor.u32 %v1868, %v1864
        %v1870 = vrot.slane %v1869, 4
        %v1872 = vshll.u32 %v415, 16
        %v1874 = vrot.slane %v1872, 5
        %v1875 = vsel %vm1587, %v1870, %v1874
        %v1877 = vshrl.u32 %v416, 16
        %v1879 = vrot.slane %v1877, 4
        %v1880 = vshll.u32 %v416, 16
        %v1882 = vrot.slane %v1880, 5
        %v1883 = vor.u32 %v1879, %v1882
        %v1884 = vrot.slane %v1883, 4
        %v1886 = vshll.u32 %v417, 16
        %v1888 = vrot.slane %v1886, 5
        %v1889 = vsel %vm1587, %v1884, %v1888
        %v1890 = vshrl.u32 %v417, 16
        %v1892 = vrot.slane %v1890, 4
        %v1893 = vor.u32 %v1892, %v1888
        %v1894 = vrot.slane %v1893, 4
        %v1896 = vshll.u32 %v418, 16
        %v1898 = vrot.slane %v1896, 5
        %v1899 = vsel %vm1587, %v1894, %v1898
        %v1901 = vshrl.u32 %v419, 16
        %v1903 = vrot.slane %v1901, 4
        %v1904 = vshll.u32 %v419, 16
        %v1906 = vrot.slane %v1904, 5
        %v1907 = vor.u32 %v1903, %v1906
        %v1908 = vrot.slane %v1907, 4
        %v1910 = vshll.u32 %v420, 16
        %v1912 = vrot.slane %v1910, 5
        %v1913 = vsel %vm1587, %v1908, %v1912
        %v1914 = vshrl.u32 %v420, 16
        %v1916 = vrot.slane %v1914, 4
        %v1917 = vor.u32 %v1916, %v1912
        %v1918 = vrot.slane %v1917, 4
        %v1920 = vshll.u32 %v421, 16
        %v1922 = vrot.slane %v1920, 5
        %v1923 = vsel %vm1587, %v1918, %v1922
        %v1925 = vshrl.u32 %v422, 16
        %v1927 = vrot.slane %v1925, 4
        %v1928 = vshll.u32 %v422, 16
        %v1930 = vrot.slane %v1928, 5
        %v1931 = vor.u32 %v1927, %v1930
        %v1932 = vrot.slane %v1931, 4
        %v1934 = vshll.u32 %v423, 16
        %v1936 = vrot.slane %v1934, 5
        %v1937 = vsel %vm1587, %v1932, %v1936
        %v1938 = vshrl.u32 %v423, 16
        %v1940 = vrot.slane %v1938, 4
        %v1941 = vor.u32 %v1940, %v1936
        %v1942 = vrot.slane %v1941, 4
        %v1944 = vshll.u32 %v424, 16
        %v1946 = vrot.slane %v1944, 5
        %v1947 = vsel %vm1587, %v1942, %v1946
        %v1949 = vshrl.u32 %v425, 16
        %v1951 = vrot.slane %v1949, 4
        %v1952 = vshll.u32 %v425, 16
        %v1954 = vrot.slane %v1952, 5
        %v1955 = vor.u32 %v1951, %v1954
        %v1956 = vrot.slane %v1955, 4
        %v1958 = vshll.u32 %v426, 16
        %v1960 = vrot.slane %v1958, 5
        %v1961 = vsel %vm1587, %v1956, %v1960
        %v1962 = vshrl.u32 %v426, 16
        %v1964 = vrot.slane %v1962, 4
        %v1965 = vor.u32 %v1964, %v1960
        %v1966 = vrot.slane %v1965, 4
        %v1968 = vshll.u32 %v427, 16
        %v1970 = vrot.slane %v1968, 5
        %v1971 = vsel %vm1587, %v1966, %v1970
        %v2004 = vunpack.c.l.bf16 %v1601
        %v2005 = vunpack.c.l.bf16 %v1611
        %v2006 = vunpack.c.l.bf16 %v1625
        %v2007 = vunpack.c.l.bf16 %v1635
        %v2008 = vunpack.c.l.bf16 %v1649
        %v2009 = vunpack.c.l.bf16 %v1659
        %v2010 = vunpack.c.l.bf16 %v1673
        %v2011 = vunpack.c.l.bf16 %v1683
        %v2012 = vunpack.c.l.bf16 %v1697
        %v2013 = vunpack.c.l.bf16 %v1707
        %v2014 = vunpack.c.l.bf16 %v1721
        %v2015 = vunpack.c.l.bf16 %v1731
        %v2016 = vunpack.c.l.bf16 %v1745
        %v2017 = vunpack.c.l.bf16 %v1755
        %v2018 = vunpack.c.l.bf16 %v1769
        %v2019 = vunpack.c.l.bf16 %v1779
        %v2020 = vunpack.c.l.bf16 %v1793
        %v2021 = vunpack.c.l.bf16 %v1803
        %v2022 = vunpack.c.l.bf16 %v1817
        %v2023 = vunpack.c.l.bf16 %v1827
        %v2024 = vunpack.c.l.bf16 %v1841
        %v2025 = vunpack.c.l.bf16 %v1851
        %v2026 = vunpack.c.l.bf16 %v1865
        %v2027 = vunpack.c.l.bf16 %v1875
        %v2028 = vunpack.c.l.bf16 %v1889
        %v2029 = vunpack.c.l.bf16 %v1899
        %v2030 = vunpack.c.l.bf16 %v1913
        %v2031 = vunpack.c.l.bf16 %v1923
        %v2032 = vunpack.c.l.bf16 %v1937
        %v2033 = vunpack.c.l.bf16 %v1947
        %v2034 = vunpack.c.l.bf16 %v1961
        %v2035 = vunpack.c.l.bf16 %v1971
        %v2036 = vld [vmem:[#allocation8] sm:$0x1]
        %v2038 = vlaneseq
        %v2039 = vshrl.u32 %v2038, 7
        %v2040 = vsub.s32 0, %v2039
        %v2041 = vrot.slane %v2036, %v2040
        %v2043 = vmul.f32 %v1459, %v2041
        %v2044 = vmul.f32 %v1462, %v2041
        %v2045 = vmul.f32 %v1467, %v2041
        %v2046 = vmul.f32 %v1470, %v2041
        %v2047 = vmul.f32 %v1475, %v2041
        %v2048 = vmul.f32 %v1478, %v2041
        %v2049 = vmul.f32 %v1483, %v2041
        %v2050 = vmul.f32 %v1486, %v2041
        %v2051 = vmul.f32 %v1491, %v2041
        %v2052 = vmul.f32 %v1494, %v2041
        %v2053 = vmul.f32 %v1499, %v2041
        %v2054 = vmul.f32 %v1502, %v2041
        %v2055 = vmul.f32 %v1507, %v2041
        %v2056 = vmul.f32 %v1510, %v2041
        %v2057 = vmul.f32 %v1515, %v2041
        %v2058 = vmul.f32 %v1518, %v2041
        %v2059 = vmul.f32 %v1523, %v2041
        %v2060 = vmul.f32 %v1526, %v2041
        %v2061 = vmul.f32 %v1531, %v2041
        %v2062 = vmul.f32 %v1534, %v2041
        %v2063 = vmul.f32 %v1539, %v2041
        %v2064 = vmul.f32 %v1542, %v2041
        %v2065 = vmul.f32 %v1547, %v2041
        %v2066 = vmul.f32 %v1550, %v2041
        %v2067 = vmul.f32 %v1555, %v2041
        %v2068 = vmul.f32 %v1558, %v2041
        %v2069 = vmul.f32 %v1563, %v2041
        %v2070 = vmul.f32 %v1566, %v2041
        %v2071 = vmul.f32 %v1571, %v2041
        %v2072 = vmul.f32 %v1574, %v2041
        %v2073 = vmul.f32 %v1579, %v2041
        %v2074 = vmul.f32 %v1582, %v2041
        %v2075 = vld [vmem:[#allocation9] sm:$0x1]
        %v2077 = vlaneseq
        %v2078 = vshrl.u32 %v2077, 7
        %v2079 = vsub.s32 0, %v2078
        %v2080 = vrot.slane %v2075, %v2079
        %v2082 = vadd.f32 %v2043, %v2080
        %v2083 = vadd.f32 %v2044, %v2080
        %v2084 = vadd.f32 %v2045, %v2080
        %v2085 = vadd.f32 %v2046, %v2080
        %v2086 = vadd.f32 %v2047, %v2080
        %v2087 = vadd.f32 %v2048, %v2080
        %v2088 = vadd.f32 %v2049, %v2080
        %v2089 = vadd.f32 %v2050, %v2080
        %v2090 = vadd.f32 %v2051, %v2080
        %v2091 = vadd.f32 %v2052, %v2080
        %v2092 = vadd.f32 %v2053, %v2080
        %v2093 = vadd.f32 %v2054, %v2080
        %v2094 = vadd.f32 %v2055, %v2080
        %v2095 = vadd.f32 %v2056, %v2080
        %v2096 = vadd.f32 %v2057, %v2080
        %v2097 = vadd.f32 %v2058, %v2080
        %v2098 = vadd.f32 %v2059, %v2080
        %v2099 = vadd.f32 %v2060, %v2080
        %v2100 = vadd.f32 %v2061, %v2080
        %v2101 = vadd.f32 %v2062, %v2080
        %v2102 = vadd.f32 %v2063, %v2080
        %v2103 = vadd.f32 %v2064, %v2080
        %v2104 = vadd.f32 %v2065, %v2080
        %v2105 = vadd.f32 %v2066, %v2080
        %v2106 = vadd.f32 %v2067, %v2080
        %v2107 = vadd.f32 %v2068, %v2080
        %v2108 = vadd.f32 %v2069, %v2080
        %v2109 = vadd.f32 %v2070, %v2080
        %v2110 = vadd.f32 %v2071, %v2080
        %v2111 = vadd.f32 %v2072, %v2080
        %v2112 = vadd.f32 %v2073, %v2080
        %v2113 = vadd.f32 %v2074, %v2080
        %v2114 = vmax.f32 %v2082, 0.0
        %v2115 = vmax.f32 %v2083, 0.0
        %v2116 = vmax.f32 %v2084, 0.0
        %v2117 = vmax.f32 %v2085, 0.0
        %v2118 = vmax.f32 %v2086, 0.0
        %v2119 = vmax.f32 %v2087, 0.0
        %v2120 = vmax.f32 %v2088, 0.0
        %v2121 = vmax.f32 %v2089, 0.0
        %v2122 = vmax.f32 %v2090, 0.0
        %v2123 = vmax.f32 %v2091, 0.0
        %v2124 = vmax.f32 %v2092, 0.0
        %v2125 = vmax.f32 %v2093, 0.0
        %v2126 = vmax.f32 %v2094, 0.0
        %v2127 = vmax.f32 %v2095, 0.0
        %v2128 = vmax.f32 %v2096, 0.0
        %v2129 = vmax.f32 %v2097, 0.0
        %v2130 = vmax.f32 %v2098, 0.0
        %v2131 = vmax.f32 %v2099, 0.0
        %v2132 = vmax.f32 %v2100, 0.0
        %v2133 = vmax.f32 %v2101, 0.0
        %v2134 = vmax.f32 %v2102, 0.0
        %v2135 = vmax.f32 %v2103, 0.0
        %v2136 = vmax.f32 %v2104, 0.0
        %v2137 = vmax.f32 %v2105, 0.0
        %v2138 = vmax.f32 %v2106, 0.0
        %v2139 = vmax.f32 %v2107, 0.0
        %v2140 = vmax.f32 %v2108, 0.0
        %v2141 = vmax.f32 %v2109, 0.0
        %v2142 = vmax.f32 %v2110, 0.0
        %v2143 = vmax.f32 %v2111, 0.0
        %v2144 = vmax.f32 %v2112, 0.0
        %v2145 = vmax.f32 %v2113, 0.0
        %vm2146 = vcmask 27648
        %2147 = vst.msk [vmem:[#allocation2] sm:$0xf] %vm2146, 0
        %2148 = vst.msk [vmem:[#allocation2 + $0x4] sm:$0xf] %vm2146, 0
        %2149 = vst.msk [vmem:[#allocation2 + $0x8] sm:$0xf] %vm2146, 0
        %2150 = vst.msk [vmem:[#allocation2 + $0xc] sm:$0xf] %vm2146, 0
        %vm2151 = vcmask 24576
        %vm2152 = vsmask.f32 256
        %vm2153 = vmand %vm2151, %vm2152
        %v2154 = vld [vmem:[#allocation2 + $0x10] sm:$0x1]
        %v2155 = vsel %vm2153, 0, %v2154
        %2156 = vst [vmem:[#allocation2 + $0x10] sm:$0x1] %v2155
        %s2157 = scalar_lea.vmem [#allocation2], 340
        %2158 = vst.msk [vmem:[%s2157] sm:$0xf] %vm2146, 0
        %2159 = vst.msk [vmem:[%s2157 + $0x4] sm:$0xf] %vm2146, 0
        %2160 = vst.msk [vmem:[%s2157 + $0x8] sm:$0xf] %vm2146, 0
        %2161 = vst.msk [vmem:[%s2157 + $0xc] sm:$0xf] %vm2146, 0
        %v2162 = vld [vmem:[%s2157 + $0x10] sm:$0x1]
        %v2163 = vsel %vm2153, 0, %v2162
        %2164 = vst [vmem:[%s2157 + $0x10] sm:$0x1] %v2163
        %vm2165 = vcmask 27651
        %vm2166 = vsmask.f32 7950
        %vm2167 = vmand %vm2165, %vm2166
        %v2168 = vld [vmem:[#allocation2 + $0x4] sm:$0x8]
        %v2169 = vsel %vm2167, 0, %v2168
        %2170 = vst [vmem:[#allocation2 + $0x4] sm:$0x8] %v2169
        %v2171 = vld [vmem:[#allocation2 + $0x18] sm:$0x8]
        %v2172 = vsel %vm2167, 0, %v2171
        %2173 = vst [vmem:[#allocation2 + $0x18] sm:$0x8] %v2172
        %v2174 = vld [vmem:[#allocation2 + $0x2c] sm:$0x8]
        %v2175 = vsel %vm2167, 0, %v2174
        %2176 = vst [vmem:[#allocation2 + $0x2c] sm:$0x8] %v2175
        %v2177 = vld [vmem:[#allocation2 + $0x40] sm:$0x8]
        %v2178 = vsel %vm2167, 0, %v2177
        %2179 = vst [vmem:[#allocation2 + $0x40] sm:$0x8] %v2178
        %v2180 = vld [vmem:[#allocation2 + $0x54] sm:$0x8]
        %v2181 = vsel %vm2167, 0, %v2180
        %2182 = vst [vmem:[#allocation2 + $0x54] sm:$0x8] %v2181
        %v2183 = vld [vmem:[#allocation2 + $0x68] sm:$0x8]
        %v2184 = vsel %vm2167, 0, %v2183
        %2185 = vst [vmem:[#allocation2 + $0x68] sm:$0x8] %v2184
        %v2186 = vld [vmem:[#allocation2 + $0x7c] sm:$0x8]
        %v2187 = vsel %vm2167, 0, %v2186
        %2188 = vst [vmem:[#allocation2 + $0x7c] sm:$0x8] %v2187
        %v2189 = vld [vmem:[#allocation2 + $0x90] sm:$0x8]
        %v2190 = vsel %vm2167, 0, %v2189
        %2191 = vst [vmem:[#allocation2 + $0x90] sm:$0x8] %v2190
        %v2192 = vld [vmem:[#allocation2 + $0xa4] sm:$0x8]
        %v2193 = vsel %vm2167, 0, %v2192
        %2194 = vst [vmem:[#allocation2 + $0xa4] sm:$0x8] %v2193
        %v2195 = vld [vmem:[#allocation2 + $0xb8] sm:$0x8]
        %v2196 = vsel %vm2167, 0, %v2195
        %2197 = vst [vmem:[#allocation2 + $0xb8] sm:$0x8] %v2196
        %v2198 = vld [vmem:[#allocation2 + $0xcc] sm:$0x8]
        %v2199 = vsel %vm2167, 0, %v2198
        %2200 = vst [vmem:[#allocation2 + $0xcc] sm:$0x8] %v2199
        %v2201 = vld [vmem:[#allocation2 + $0xe0] sm:$0x8]
        %v2202 = vsel %vm2167, 0, %v2201
        %2203 = vst [vmem:[#allocation2 + $0xe0] sm:$0x8] %v2202
        %v2204 = vld [vmem:[#allocation2 + $0xf4] sm:$0x8]
        %v2205 = vsel %vm2167, 0, %v2204
        %2206 = vst [vmem:[#allocation2 + $0xf4] sm:$0x8] %v2205
        %v2207 = vld [vmem:[#allocation2 + $0x108] sm:$0x8]
        %v2208 = vsel %vm2167, 0, %v2207
        %2209 = vst [vmem:[#allocation2 + $0x108] sm:$0x8] %v2208
        %v2210 = vld [vmem:[#allocation2 + $0x11c] sm:$0x8]
        %v2211 = vsel %vm2167, 0, %v2210
        %2212 = vst [vmem:[#allocation2 + $0x11c] sm:$0x8] %v2211
        %v2213 = vld [vmem:[#allocation2 + $0x130] sm:$0x8]
        %v2214 = vsel %vm2167, 0, %v2213
        %2215 = vst [vmem:[#allocation2 + $0x130] sm:$0x8] %v2214
        %v2216 = vld [vmem:[#allocation2 + $0x144] sm:$0x8]
        %v2217 = vsel %vm2167, 0, %v2216
        %2218 = vst [vmem:[#allocation2 + $0x144] sm:$0x8] %v2217
        %v2219 = vld [vmem:[#allocation2 + $0x158] sm:$0x8]
        %v2220 = vsel %vm2167, 0, %v2219
        %2221 = vst [vmem:[#allocation2 + $0x158] sm:$0x8] %v2220
        %v2222 = vld [vmem:[#allocation2 + $0x10] sm:$0x1]
        %v2223 = vsel %vm2153, 0, %v2222
        %2224 = vst [vmem:[#allocation2 + $0x10] sm:$0x1] %v2223
        %v2225 = vld [vmem:[#allocation2 + $0x24] sm:$0x1]
        %v2226 = vsel %vm2153, 0, %v2225
        %2227 = vst [vmem:[#allocation2 + $0x24] sm:$0x1] %v2226
        %v2228 = vld [vmem:[#allocation2 + $0x38] sm:$0x1]
        %v2229 = vsel %vm2153, 0, %v2228
        %2230 = vst [vmem:[#allocation2 + $0x38] sm:$0x1] %v2229
        %v2231 = vld [vmem:[#allocation2 + $0x4c] sm:$0x1]
        %v2232 = vsel %vm2153, 0, %v2231
        %2233 = vst [vmem:[#allocation2 + $0x4c] sm:$0x1] %v2232
        %v2234 = vld [vmem:[#allocation2 + $0x60] sm:$0x1]
        %v2235 = vsel %vm2153, 0, %v2234
        %2236 = vst [vmem:[#allocation2 + $0x60] sm:$0x1] %v2235
        %v2237 = vld [vmem:[#allocation2 + $0x74] sm:$0x1]
        %v2238 = vsel %vm2153, 0, %v2237
        %2239 = vst [vmem:[#allocation2 + $0x74] sm:$0x1] %v2238
        %v2240 = vld [vmem:[#allocation2 + $0x88] sm:$0x1]
        %v2241 = vsel %vm2153, 0, %v2240
        %2242 = vst [vmem:[#allocation2 + $0x88] sm:$0x1] %v2241
        %v2243 = vld [vmem:[#allocation2 + $0x9c] sm:$0x1]
        %v2244 = vsel %vm2153, 0, %v2243
        %2245 = vst [vmem:[#allocation2 + $0x9c] sm:$0x1] %v2244
        %v2246 = vld [vmem:[#allocation2 + $0xb0] sm:$0x1]
        %v2247 = vsel %vm2153, 0, %v2246
        %2248 = vst [vmem:[#allocation2 + $0xb0] sm:$0x1] %v2247
        %v2249 = vld [vmem:[#allocation2 + $0xc4] sm:$0x1]
        %v2250 = vsel %vm2153, 0, %v2249
        %2251 = vst [vmem:[#allocation2 + $0xc4] sm:$0x1] %v2250
        %v2252 = vld [vmem:[#allocation2 + $0xd8] sm:$0x1]
        %v2253 = vsel %vm2153, 0, %v2252
        %2254 = vst [vmem:[#allocation2 + $0xd8] sm:$0x1] %v2253
        %v2255 = vld [vmem:[#allocation2 + $0xec] sm:$0x1]
        %v2256 = vsel %vm2153, 0, %v2255
        %2257 = vst [vmem:[#allocation2 + $0xec] sm:$0x1] %v2256
        %v2258 = vld [vmem:[#allocation2 + $0x100] sm:$0x1]
        %v2259 = vsel %vm2153, 0, %v2258
        %2260 = vst [vmem:[#allocation2 + $0x100] sm:$0x1] %v2259
        %v2261 = vld [vmem:[#allocation2 + $0x114] sm:$0x1]
        %v2262 = vsel %vm2153, 0, %v2261
        %2263 = vst [vmem:[#allocation2 + $0x114] sm:$0x1] %v2262
        %v2264 = vld [vmem:[#allocation2 + $0x128] sm:$0x1]
        %v2265 = vsel %vm2153, 0, %v2264
        %2266 = vst [vmem:[#allocation2 + $0x128] sm:$0x1] %v2265
        %v2267 = vld [vmem:[#allocation2 + $0x13c] sm:$0x1]
        %v2268 = vsel %vm2153, 0, %v2267
        %2269 = vst [vmem:[#allocation2 + $0x13c] sm:$0x1] %v2268
        %v2270 = vld [vmem:[#allocation2 + $0x150] sm:$0x1]
        %v2271 = vsel %vm2153, 0, %v2270
        %2272 = vst [vmem:[#allocation2 + $0x150] sm:$0x1] %v2271
        %v2273 = vld [vmem:[#allocation2 + $0x164] sm:$0x1]
        %v2274 = vsel %vm2153, 0, %v2273
        %2275 = vst [vmem:[#allocation2 + $0x164] sm:$0x1] %v2274
        %v2276 = vpack.c.bf16 %v2115, %v2114
        %v2277 = vpack.c.bf16 %v2117, %v2116
        %v2278 = vpack.c.bf16 %v2119, %v2118
        %v2279 = vpack.c.bf16 %v2121, %v2120
        %v2280 = vpack.c.bf16 %v2123, %v2122
        %v2281 = vpack.c.bf16 %v2125, %v2124
        %v2282 = vpack.c.bf16 %v2127, %v2126
        %v2283 = vpack.c.bf16 %v2129, %v2128
        %v2284 = vpack.c.bf16 %v2131, %v2130
        %v2285 = vpack.c.bf16 %v2133, %v2132
        %v2286 = vpack.c.bf16 %v2135, %v2134
        %v2287 = vpack.c.bf16 %v2137, %v2136
        %v2288 = vpack.c.bf16 %v2139, %v2138
        %v2289 = vpack.c.bf16 %v2141, %v2140
        %v2290 = vpack.c.bf16 %v2143, %v2142
        %v2291 = vpack.c.bf16 %v2145, %v2144
        %v2308 = vunpack.c.l.b16 %v2276
        %v2309 = vunpack.c.h.b16 %v2276
        %v2310 = vunpack.c.l.b16 %v2277
        %v2311 = vunpack.c.h.b16 %v2277
        %v2312 = vunpack.c.l.b16 %v2278
        %v2313 = vunpack.c.h.b16 %v2278
        %v2314 = vunpack.c.l.b16 %v2279
        %v2315 = vunpack.c.h.b16 %v2279
        %v2316 = vunpack.c.l.b16 %v2280
        %v2317 = vunpack.c.h.b16 %v2280
        %v2318 = vunpack.c.l.b16 %v2281
        %v2319 = vunpack.c.h.b16 %v2281
        %v2320 = vunpack.c.l.b16 %v2282
        %v2321 = vunpack.c.h.b16 %v2282
        %v2322 = vunpack.c.l.b16 %v2283
        %v2323 = vunpack.c.h.b16 %v2283
        %v2324 = vunpack.c.l.b16 %v2284
        %v2325 = vunpack.c.h.b16 %v2284
        %v2326 = vunpack.c.l.b16 %v2285
        %v2327 = vunpack.c.h.b16 %v2285
        %v2328 = vunpack.c.l.b16 %v2286
        %v2329 = vunpack.c.h.b16 %v2286
        %v2330 = vunpack.c.l.b16 %v2287
        %v2331 = vunpack.c.h.b16 %v2287
        %v2332 = vunpack.c.l.b16 %v2288
        %v2333 = vunpack.c.h.b16 %v2288
        %v2334 = vunpack.c.l.b16 %v2289
        %v2335 = vunpack.c.h.b16 %v2289
        %v2336 = vunpack.c.l.b16 %v2290
        %v2337 = vunpack.c.h.b16 %v2290
        %v2338 = vunpack.c.l.b16 %v2291
        %v2339 = vunpack.c.h.b16 %v2291
        %v2340 = vpack.c.b16 %v2308, %v2308
        %v2341 = vpack.c.b16 %v2309, %v2309
        %v2342 = vpack.c.b16 %v2310, %v2310
        %v2343 = vpack.c.b16 %v2311, %v2311
        %v2344 = vpack.c.b16 %v2312, %v2312
        %v2345 = vpack.c.b16 %v2313, %v2313
        %v2346 = vpack.c.b16 %v2314, %v2314
        %v2347 = vpack.c.b16 %v2315, %v2315
        %v2348 = vpack.c.b16 %v2316, %v2316
        %v2349 = vpack.c.b16 %v2317, %v2317
        %v2350 = vpack.c.b16 %v2318, %v2318
        %v2351 = vpack.c.b16 %v2319, %v2319
        %v2352 = vpack.c.b16 %v2320, %v2320
        %v2353 = vpack.c.b16 %v2321, %v2321
        %v2354 = vpack.c.b16 %v2322, %v2322
        %v2355 = vpack.c.b16 %v2323, %v2323
        %v2356 = vpack.c.b16 %v2324, %v2324
        %v2357 = vpack.c.b16 %v2325, %v2325
        %v2358 = vpack.c.b16 %v2326, %v2326
        %v2359 = vpack.c.b16 %v2327, %v2327
        %v2360 = vpack.c.b16 %v2328, %v2328
        %v2361 = vpack.c.b16 %v2329, %v2329
        %v2362 = vpack.c.b16 %v2330, %v2330
        %v2363 = vpack.c.b16 %v2331, %v2331
        %v2364 = vpack.c.b16 %v2332, %v2332
        %v2365 = vpack.c.b16 %v2333, %v2333
        %v2366 = vpack.c.b16 %v2334, %v2334
        %v2367 = vpack.c.b16 %v2335, %v2335
        %v2368 = vpack.c.b16 %v2336, %v2336
        %v2369 = vpack.c.b16 %v2337, %v2337
        %v2370 = vpack.c.b16 %v2338, %v2338
        %v2371 = vpack.c.b16 %v2339, %v2339
        %s2404 = scalar_lea.vmem [#allocation2], 20
        %2405 = vst.msk [vmem:[%s2404 + $0x8] sm:$0xf] %vm2146, %v2340
        %2406 = vst.msk [vmem:[%s2404 + $0xc] sm:$0xf] %vm2146, %v2341
        %2407 = vst.msk [vmem:[%s2404 + $0x1c] sm:$0xf] %vm2146, %v2342
        %2408 = vst.msk [vmem:[%s2404 + $0x20] sm:$0xf] %vm2146, %v2343
        %2409 = vst.msk [vmem:[%s2404 + $0x30] sm:$0xf] %vm2146, %v2344
        %2410 = vst.msk [vmem:[%s2404 + $0x34] sm:$0xf] %vm2146, %v2345
        %2411 = vst.msk [vmem:[%s2404 + $0x44] sm:$0xf] %vm2146, %v2346
        %2412 = vst.msk [vmem:[%s2404 + $0x48] sm:$0xf] %vm2146, %v2347
        %2413 = vst.msk [vmem:[%s2404 + $0x58] sm:$0xf] %vm2146, %v2348
        %2414 = vst.msk [vmem:[%s2404 + $0x5c] sm:$0xf] %vm2146, %v2349
        %2415 = vst.msk [vmem:[%s2404 + $0x6c] sm:$0xf] %vm2146, %v2350
        %2416 = vst.msk [vmem:[%s2404 + $0x70] sm:$0xf] %vm2146, %v2351
        %2417 = vst.msk [vmem:[%s2404 + $0x80] sm:$0xf] %vm2146, %v2352
        %2418 = vst.msk [vmem:[%s2404 + $0x84] sm:$0xf] %vm2146, %v2353
        %2419 = vst.msk [vmem:[%s2404 + $0x94] sm:$0xf] %vm2146, %v2354
        %2420 = vst.msk [vmem:[%s2404 + $0x98] sm:$0xf] %vm2146, %v2355
        %2421 = vst.msk [vmem:[%s2404 + $0xa8] sm:$0xf] %vm2146, %v2356
        %2422 = vst.msk [vmem:[%s2404 + $0xac] sm:$0xf] %vm2146, %v2357
        %2423 = vst.msk [vmem:[%s2404 + $0xbc] sm:$0xf] %vm2146, %v2358
        %2424 = vst.msk [vmem:[%s2404 + $0xc0] sm:$0xf] %vm2146, %v2359
        %2425 = vst.msk [vmem:[%s2404 + $0xd0] sm:$0xf] %vm2146, %v2360
        %2426 = vst.msk [vmem:[%s2404 + $0xd4] sm:$0xf] %vm2146, %v2361
        %2427 = vst.msk [vmem:[%s2404 + $0xe4] sm:$0xf] %vm2146, %v2362
        %2428 = vst.msk [vmem:[%s2404 + $0xe8] sm:$0xf] %vm2146, %v2363
        %2429 = vst.msk [vmem:[%s2404 + $0xf8] sm:$0xf] %vm2146, %v2364
        %2430 = vst.msk [vmem:[%s2404 + $0xfc] sm:$0xf] %vm2146, %v2365
        %2431 = vst.msk [vmem:[%s2404 + $0x10c] sm:$0xf] %vm2146, %v2366
        %2432 = vst.msk [vmem:[%s2404 + $0x110] sm:$0xf] %vm2146, %v2367
        %2433 = vst.msk [vmem:[%s2404 + $0x120] sm:$0xf] %vm2146, %v2368
        %2434 = vst.msk [vmem:[%s2404 + $0x124] sm:$0xf] %vm2146, %v2369
        %2435 = vst.msk [vmem:[%s2404 + $0x134] sm:$0xf] %vm2146, %v2370
        %2436 = vst.msk [vmem:[%s2404 + $0x138] sm:$0xf] %vm2146, %v2371
        %v2437 = vld [vmem:[#allocation2 + $0x4] sm:$0x8]
        %v2438 = vld [vmem:[#allocation2 + $0x8] sm:$0xf]
        %v2439 = vld [vmem:[#allocation2 + $0xc] sm:$0xf]
        %v2440 = vld [vmem:[#allocation2 + $0x18] sm:$0x8]
        %v2441 = vld [vmem:[#allocation2 + $0x1c] sm:$0xf]
        %v2442 = vld [vmem:[#allocation2 + $0x20] sm:$0xf]
        %v2443 = vld [vmem:[#allocation2 + $0x2c] sm:$0x8]
        %v2444 = vld [vmem:[#allocation2 + $0x30] sm:$0xf]
        %v2445 = vld [vmem:[#allocation2 + $0x34] sm:$0xf]
        %v2446 = vld [vmem:[#allocation2 + $0x40] sm:$0x8]
        %v2447 = vld [vmem:[#allocation2 + $0x44] sm:$0xf]
        %v2448 = vld [vmem:[#allocation2 + $0x48] sm:$0xf]
        %v2449 = vld [vmem:[#allocation2 + $0x54] sm:$0x8]
        %v2450 = vld [vmem:[#allocation2 + $0x58] sm:$0xf]
        %v2451 = vld [vmem:[#allocation2 + $0x5c] sm:$0xf]
        %v2452 = vld [vmem:[#allocation2 + $0x68] sm:$0x8]
        %v2453 = vld [vmem:[#allocation2 + $0x6c] sm:$0xf]
        %v2454 = vld [vmem:[#allocation2 + $0x70] sm:$0xf]
        %v2455 = vld [vmem:[#allocation2 + $0x7c] sm:$0x8]
        %v2456 = vld [vmem:[#allocation2 + $0x80] sm:$0xf]
        %v2457 = vld [vmem:[#allocation2 + $0x84] sm:$0xf]
        %v2458 = vld [vmem:[#allocation2 + $0x90] sm:$0x8]
        %v2459 = vld [vmem:[#allocation2 + $0x94] sm:$0xf]
        %v2460 = vld [vmem:[#allocation2 + $0x98] sm:$0xf]
        %v2461 = vld [vmem:[#allocation2 + $0xa4] sm:$0x8]
        %v2462 = vld [vmem:[#allocation2 + $0xa8] sm:$0xf]
        %v2463 = vld [vmem:[#allocation2 + $0xac] sm:$0xf]
        %v2464 = vld [vmem:[#allocation2 + $0xb8] sm:$0x8]
        %v2465 = vld [vmem:[#allocation2 + $0xbc] sm:$0xf]
        %v2466 = vld [vmem:[#allocation2 + $0xc0] sm:$0xf]
        %v2467 = vld [vmem:[#allocation2 + $0xcc] sm:$0x8]
        %v2468 = vld [vmem:[#allocation2 + $0xd0] sm:$0xf]
        %v2469 = vld [vmem:[#allocation2 + $0xd4] sm:$0xf]
        %v2470 = vld [vmem:[#allocation2 + $0xe0] sm:$0x8]
        %v2471 = vld [vmem:[#allocation2 + $0xe4] sm:$0xf]
        %v2472 = vld [vmem:[#allocation2 + $0xe8] sm:$0xf]
        %v2473 = vld [vmem:[#allocation2 + $0xf4] sm:$0x8]
        %v2474 = vld [vmem:[#allocation2 + $0xf8] sm:$0xf]
        %v2475 = vld [vmem:[#allocation2 + $0xfc] sm:$0xf]
        %v2476 = vld [vmem:[#allocation2 + $0x108] sm:$0x8]
        %v2477 = vld [vmem:[#allocation2 + $0x10c] sm:$0xf]
        %v2478 = vld [vmem:[#allocation2 + $0x110] sm:$0xf]
        %v2479 = vld [vmem:[#allocation2 + $0x11c] sm:$0x8]
        %v2480 = vld [vmem:[#allocation2 + $0x120] sm:$0xf]
        %v2481 = vld [vmem:[#allocation2 + $0x124] sm:$0xf]
        %v2482 = vld [vmem:[#allocation2 + $0x130] sm:$0x8]
        %v2483 = vld [vmem:[#allocation2 + $0x134] sm:$0xf]
        %v2484 = vld [vmem:[#allocation2 + $0x138] sm:$0xf]
        %v2485 = vld [vmem:[#allocation2 + $0x10] sm:$0x1]
        %v2486 = vld [vmem:[#allocation2 + $0x24] sm:$0x1]
        %v2487 = vld [vmem:[#allocation2 + $0x38] sm:$0x1]
        %v2488 = vld [vmem:[#allocation2 + $0x4c] sm:$0x1]
        %v2489 = vld [vmem:[#allocation2 + $0x60] sm:$0x1]
        %v2490 = vld [vmem:[#allocation2 + $0x74] sm:$0x1]
        %v2491 = vld [vmem:[#allocation2 + $0x88] sm:$0x1]
        %v2492 = vld [vmem:[#allocation2 + $0x9c] sm:$0x1]
        %v2493 = vld [vmem:[#allocation2 + $0xb0] sm:$0x1]
        %v2494 = vld [vmem:[#allocation2 + $0xc4] sm:$0x1]
        %v2495 = vld [vmem:[#allocation2 + $0xd8] sm:$0x1]
        %v2496 = vld [vmem:[#allocation2 + $0xec] sm:$0x1]
        %v2497 = vld [vmem:[#allocation2 + $0x100] sm:$0x1]
        %v2498 = vld [vmem:[#allocation2 + $0x114] sm:$0x1]
        %v2499 = vld [vmem:[#allocation2 + $0x128] sm:$0x1]
        %v2500 = vld [vmem:[#allocation2 + $0x13c] sm:$0x1]
        %v2501 = vld [vmem:[%s2404 + $0x4] sm:$0x8]
        %v2502 = vld [vmem:[%s2404 + $0x8] sm:$0xf]
        %v2503 = vld [vmem:[%s2404 + $0xc] sm:$0xf]
        %v2504 = vld [vmem:[%s2404 + $0x18] sm:$0x8]
        %v2505 = vld [vmem:[%s2404 + $0x1c] sm:$0xf]
        %v2506 = vld [vmem:[%s2404 + $0x20] sm:$0xf]
        %v2507 = vld [vmem:[%s2404 + $0x2c] sm:$0x8]
        %v2508 = vld [vmem:[%s2404 + $0x30] sm:$0xf]
        %v2509 = vld [vmem:[%s2404 + $0x34] sm:$0xf]
        %v2510 = vld [vmem:[%s2404 + $0x40] sm:$0x8]
        %v2511 = vld [vmem:[%s2404 + $0x44] sm:$0xf]
        %v2512 = vld [vmem:[%s2404 + $0x48] sm:$0xf]
        %v2513 = vld [vmem:[%s2404 + $0x54] sm:$0x8]
        %v2514 = vld [vmem:[%s2404 + $0x58] sm:$0xf]
        %v2515 = vld [vmem:[%s2404 + $0x5c] sm:$0xf]
        %v2516 = vld [vmem:[%s2404 + $0x68] sm:$0x8]
        %v2517 = vld [vmem:[%s2404 + $0x6c] sm:$0xf]
        %v2518 = vld [vmem:[%s2404 + $0x70] sm:$0xf]
        %v2519 = vld [vmem:[%s2404 + $0x7c] sm:$0x8]
        %v2520 = vld [vmem:[%s2404 + $0x80] sm:$0xf]
        %v2521 = vld [vmem:[%s2404 + $0x84] sm:$0xf]
        %v2522 = vld [vmem:[%s2404 + $0x90] sm:$0x8]
        %v2523 = vld [vmem:[%s2404 + $0x94] sm:$0xf]
        %v2524 = vld [vmem:[%s2404 + $0x98] sm:$0xf]
        %v2525 = vld [vmem:[%s2404 + $0xa4] sm:$0x8]
        %v2526 = vld [vmem:[%s2404 + $0xa8] sm:$0xf]
        %v2527 = vld [vmem:[%s2404 + $0xac] sm:$0xf]
        %v2528 = vld [vmem:[%s2404 + $0xb8] sm:$0x8]
        %v2529 = vld [vmem:[%s2404 + $0xbc] sm:$0xf]
        %v2530 = vld [vmem:[%s2404 + $0xc0] sm:$0xf]
        %v2531 = vld [vmem:[%s2404 + $0xcc] sm:$0x8]
        %v2532 = vld [vmem:[%s2404 + $0xd0] sm:$0xf]
        %v2533 = vld [vmem:[%s2404 + $0xd4] sm:$0xf]
        %v2534 = vld [vmem:[%s2404 + $0xe0] sm:$0x8]
        %v2535 = vld [vmem:[%s2404 + $0xe4] sm:$0xf]
        %v2536 = vld [vmem:[%s2404 + $0xe8] sm:$0xf]
        %v2537 = vld [vmem:[%s2404 + $0xf4] sm:$0x8]
        %v2538 = vld [vmem:[%s2404 + $0xf8] sm:$0xf]
        %v2539 = vld [vmem:[%s2404 + $0xfc] sm:$0xf]
        %v2540 = vld [vmem:[%s2404 + $0x108] sm:$0x8]
        %v2541 = vld [vmem:[%s2404 + $0x10c] sm:$0xf]
        %v2542 = vld [vmem:[%s2404 + $0x110] sm:$0xf]
        %v2543 = vld [vmem:[%s2404 + $0x11c] sm:$0x8]
        %v2544 = vld [vmem:[%s2404 + $0x120] sm:$0xf]
        %v2545 = vld [vmem:[%s2404 + $0x124] sm:$0xf]
        %v2546 = vld [vmem:[%s2404 + $0x130] sm:$0x8]
        %v2547 = vld [vmem:[%s2404 + $0x134] sm:$0xf]
        %v2548 = vld [vmem:[%s2404 + $0x138] sm:$0xf]
        %v2549 = vld [vmem:[%s2404 + $0x10] sm:$0x1]
        %v2550 = vld [vmem:[%s2404 + $0x24] sm:$0x1]
        %v2551 = vld [vmem:[%s2404 + $0x38] sm:$0x1]
        %v2552 = vld [vmem:[%s2404 + $0x4c] sm:$0x1]
        %v2553 = vld [vmem:[%s2404 + $0x60] sm:$0x1]
        %v2554 = vld [vmem:[%s2404 + $0x74] sm:$0x1]
        %v2555 = vld [vmem:[%s2404 + $0x88] sm:$0x1]
        %v2556 = vld [vmem:[%s2404 + $0x9c] sm:$0x1]
        %v2557 = vld [vmem:[%s2404 + $0xb0] sm:$0x1]
        %v2558 = vld [vmem:[%s2404 + $0xc4] sm:$0x1]
        %v2559 = vld [vmem:[%s2404 + $0xd8] sm:$0x1]
        %v2560 = vld [vmem:[%s2404 + $0xec] sm:$0x1]
        %v2561 = vld [vmem:[%s2404 + $0x100] sm:$0x1]
        %v2562 = vld [vmem:[%s2404 + $0x114] sm:$0x1]
        %v2563 = vld [vmem:[%s2404 + $0x128] sm:$0x1]
        %v2564 = vld [vmem:[%s2404 + $0x13c] sm:$0x1]
        %s2565 = scalar_lea.vmem [#allocation2], 40
        %v2566 = vld [vmem:[%s2565 + $0x4] sm:$0x8]
        %v2567 = vld [vmem:[%s2565 + $0x8] sm:$0xf]
        %v2568 = vld [vmem:[%s2565 + $0xc] sm:$0xf]
        %v2569 = vld [vmem:[%s2565 + $0x18] sm:$0x8]
        %v2570 = vld [vmem:[%s2565 + $0x1c] sm:$0xf]
        %v2571 = vld [vmem:[%s2565 + $0x20] sm:$0xf]
        %v2572 = vld [vmem:[%s2565 + $0x2c] sm:$0x8]
        %v2573 = vld [vmem:[%s2565 + $0x30] sm:$0xf]
        %v2574 = vld [vmem:[%s2565 + $0x34] sm:$0xf]
        %v2575 = vld [vmem:[%s2565 + $0x40] sm:$0x8]
        %v2576 = vld [vmem:[%s2565 + $0x44] sm:$0xf]
        %v2577 = vld [vmem:[%s2565 + $0x48] sm:$0xf]
        %v2578 = vld [vmem:[%s2565 + $0x54] sm:$0x8]
        %v2579 = vld [vmem:[%s2565 + $0x58] sm:$0xf]
        %v2580 = vld [vmem:[%s2565 + $0x5c] sm:$0xf]
        %v2581 = vld [vmem:[%s2565 + $0x68] sm:$0x8]
        %v2582 = vld [vmem:[%s2565 + $0x6c] sm:$0xf]
        %v2583 = vld [vmem:[%s2565 + $0x70] sm:$0xf]
        %v2584 = vld [vmem:[%s2565 + $0x7c] sm:$0x8]
        %v2585 = vld [vmem:[%s2565 + $0x80] sm:$0xf]
        %v2586 = vld [vmem:[%s2565 + $0x84] sm:$0xf]
        %v2587 = vld [vmem:[%s2565 + $0x90] sm:$0x8]
        %v2588 = vld [vmem:[%s2565 + $0x94] sm:$0xf]
        %v2589 = vld [vmem:[%s2565 + $0x98] sm:$0xf]
        %v2590 = vld [vmem:[%s2565 + $0xa4] sm:$0x8]
        %v2591 = vld [vmem:[%s2565 + $0xa8] sm:$0xf]
        %v2592 = vld [vmem:[%s2565 + $0xac] sm:$0xf]
        %v2593 = vld [vmem:[%s2565 + $0xb8] sm:$0x8]
        %v2594 = vld [vmem:[%s2565 + $0xbc] sm:$0xf]
        %v2595 = vld [vmem:[%s2565 + $0xc0] sm:$0xf]
        %v2596 = vld [vmem:[%s2565 + $0xcc] sm:$0x8]
        %v2597 = vld [vmem:[%s2565 + $0xd0] sm:$0xf]
        %v2598 = vld [vmem:[%s2565 + $0xd4] sm:$0xf]
        %v2599 = vld [vmem:[%s2565 + $0xe0] sm:$0x8]
        %v2600 = vld [vmem:[%s2565 + $0xe4] sm:$0xf]
        %v2601 = vld [vmem:[%s2565 + $0xe8] sm:$0xf]
        %v2602 = vld [vmem:[%s2565 + $0xf4] sm:$0x8]
        %v2603 = vld [vmem:[%s2565 + $0xf8] sm:$0xf]
        %v2604 = vld [vmem:[%s2565 + $0xfc] sm:$0xf]
        %v2605 = vld [vmem:[%s2565 + $0x108] sm:$0x8]
        %v2606 = vld [vmem:[%s2565 + $0x10c] sm:$0xf]
        %v2607 = vld [vmem:[%s2565 + $0x110] sm:$0xf]
        %v2608 = vld [vmem:[%s2565 + $0x11c] sm:$0x8]
        %v2609 = vld [vmem:[%s2565 + $0x120] sm:$0xf]
        %v2610 = vld [vmem:[%s2565 + $0x124] sm:$0xf]
        %v2611 = vld [vmem:[%s2565 + $0x130] sm:$0x8]
        %v2612 = vld [vmem:[%s2565 + $0x134] sm:$0xf]
        %v2613 = vld [vmem:[%s2565 + $0x138] sm:$0xf]
        %v2614 = vld [vmem:[%s2565 + $0x10] sm:$0x1]
        %v2615 = vld [vmem:[%s2565 + $0x24] sm:$0x1]
        %v2616 = vld [vmem:[%s2565 + $0x38] sm:$0x1]
        %v2617 = vld [vmem:[%s2565 + $0x4c] sm:$0x1]
        %v2618 = vld [vmem:[%s2565 + $0x60] sm:$0x1]
        %v2619 = vld [vmem:[%s2565 + $0x74] sm:$0x1]
        %v2620 = vld [vmem:[%s2565 + $0x88] sm:$0x1]
        %v2621 = vld [vmem:[%s2565 + $0x9c] sm:$0x1]
        %v2622 = vld [vmem:[%s2565 + $0xb0] sm:$0x1]
        %v2623 = vld [vmem:[%s2565 + $0xc4] sm:$0x1]
        %v2624 = vld [vmem:[%s2565 + $0xd8] sm:$0x1]
        %v2625 = vld [vmem:[%s2565 + $0xec] sm:$0x1]
        %v2626 = vld [vmem:[%s2565 + $0x100] sm:$0x1]
        %v2627 = vld [vmem:[%s2565 + $0x114] sm:$0x1]
        %v2628 = vld [vmem:[%s2565 + $0x128] sm:$0x1]
        %v2629 = vld [vmem:[%s2565 + $0x13c] sm:$0x1]
        %v2678 = vunpack.c.l.b16 %v2437
        %v2679 = vunpack.c.l.b16 %v2438
        %v2680 = vunpack.c.l.b16 %v2439
        %v2681 = vunpack.c.l.b16 %v2440
        %v2682 = vunpack.c.l.b16 %v2441
        %v2683 = vunpack.c.l.b16 %v2442
        %v2684 = vunpack.c.l.b16 %v2443
        %v2685 = vunpack.c.l.b16 %v2444
        %v2686 = vunpack.c.l.b16 %v2445
        %v2687 = vunpack.c.l.b16 %v2446
        %v2688 = vunpack.c.l.b16 %v2447
        %v2689 = vunpack.c.l.b16 %v2448
        %v2690 = vunpack.c.l.b16 %v2449
        %v2691 = vunpack.c.l.b16 %v2450
        %v2692 = vunpack.c.l.b16 %v2451
        %v2693 = vunpack.c.l.b16 %v2452
        %v2694 = vunpack.c.l.b16 %v2453
        %v2695 = vunpack.c.l.b16 %v2454
        %v2696 = vunpack.c.l.b16 %v2455
        %v2697 = vunpack.c.l.b16 %v2456
        %v2698 = vunpack.c.l.b16 %v2457
        %v2699 = vunpack.c.l.b16 %v2458
        %v2700 = vunpack.c.l.b16 %v2459
        %v2701 = vunpack.c.l.b16 %v2460
        %v2702 = vunpack.c.l.b16 %v2461
        %v2703 = vunpack.c.l.b16 %v2462
        %v2704 = vunpack.c.l.b16 %v2463
        %v2705 = vunpack.c.l.b16 %v2464
        %v2706 = vunpack.c.l.b16 %v2465
        %v2707 = vunpack.c.l.b16 %v2466
        %v2708 = vunpack.c.l.b16 %v2467
        %v2709 = vunpack.c.l.b16 %v2468
        %v2710 = vunpack.c.l.b16 %v2469
        %v2711 = vunpack.c.l.b16 %v2470
        %v2712 = vunpack.c.l.b16 %v2471
        %v2713 = vunpack.c.l.b16 %v2472
        %v2714 = vunpack.c.l.b16 %v2473
        %v2715 = vunpack.c.l.b16 %v2474
        %v2716 = vunpack.c.l.b16 %v2475
        %v2717 = vunpack.c.l.b16 %v2476
        %v2718 = vunpack.c.l.b16 %v2477
        %v2719 = vunpack.c.l.b16 %v2478
        %v2720 = vunpack.c.l.b16 %v2479
        %v2721 = vunpack.c.l.b16 %v2480
        %v2722 = vunpack.c.l.b16 %v2481
        %v2723 = vunpack.c.l.b16 %v2482
        %v2724 = vunpack.c.l.b16 %v2483
        %v2725 = vunpack.c.l.b16 %v2484
        %v2726 = vpack.c.b16 %v2679, %v2678
        %v2727 = vpack.c.b16 %v2680, %v2680
        %v2728 = vpack.c.b16 %v2682, %v2681
        %v2729 = vpack.c.b16 %v2683, %v2683
        %v2730 = vpack.c.b16 %v2685, %v2684
        %v2731 = vpack.c.b16 %v2686, %v2686
        %v2732 = vpack.c.b16 %v2688, %v2687
        %v2733 = vpack.c.b16 %v2689, %v2689
        %v2734 = vpack.c.b16 %v2691, %v2690
        %v2735 = vpack.c.b16 %v2692, %v2692
        %v2736 = vpack.c.b16 %v2694, %v2693
        %v2737 = vpack.c.b16 %v2695, %v2695
        %v2738 = vpack.c.b16 %v2697, %v2696
        %v2739 = vpack.c.b16 %v2698, %v2698
        %v2740 = vpack.c.b16 %v2700, %v2699
        %v2741 = vpack.c.b16 %v2701, %v2701
        %v2742 = vpack.c.b16 %v2703, %v2702
        %v2743 = vpack.c.b16 %v2704, %v2704
        %v2744 = vpack.c.b16 %v2706, %v2705
        %v2745 = vpack.c.b16 %v2707, %v2707
        %v2746 = vpack.c.b16 %v2709, %v2708
        %v2747 = vpack.c.b16 %v2710, %v2710
        %v2748 = vpack.c.b16 %v2712, %v2711
        %v2749 = vpack.c.b16 %v2713, %v2713
        %v2750 = vpack.c.b16 %v2715, %v2714
        %v2751 = vpack.c.b16 %v2716, %v2716
        %v2752 = vpack.c.b16 %v2718, %v2717
        %v2753 = vpack.c.b16 %v2719, %v2719
        %v2754 = vpack.c.b16 %v2721, %v2720
        %v2755 = vpack.c.b16 %v2722, %v2722
        %v2756 = vpack.c.b16 %v2724, %v2723
        %v2757 = vpack.c.b16 %v2725, %v2725
        %v2758 = vpack.c.b16 %v2680, %v2679
        %v2759 = vpack.c.b16 %v2683, %v2682
        %v2760 = vpack.c.b16 %v2686, %v2685
        %v2761 = vpack.c.b16 %v2689, %v2688
        %v2762 = vpack.c.b16 %v2692, %v2691
        %v2763 = vpack.c.b16 %v2695, %v2694
        %v2764 = vpack.c.b16 %v2698, %v2697
        %v2765 = vpack.c.b16 %v2701, %v2700
        %v2766 = vpack.c.b16 %v2704, %v2703
        %v2767 = vpack.c.b16 %v2707, %v2706
        %v2768 = vpack.c.b16 %v2710, %v2709
        %v2769 = vpack.c.b16 %v2713, %v2712
        %v2770 = vpack.c.b16 %v2716, %v2715
        %v2771 = vpack.c.b16 %v2719, %v2718
        %v2772 = vpack.c.b16 %v2722, %v2721
        %v2773 = vpack.c.b16 %v2725, %v2724
        %v2775 = vshrl.u32 %v2758, 16
        %v2777 = vrot.slane %v2775, 4
        %v2778 = vshll.u32 %v2758, 16
        %v2780 = vrot.slane %v2778, 5
        %v2781 = vor.u32 %v2777, %v2780
        %v2783 = vshrl.u32 %v2759, 16
        %v2785 = vrot.slane %v2783, 4
        %v2786 = vshll.u32 %v2759, 16
        %v2788 = vrot.slane %v2786, 5
        %v2789 = vor.u32 %v2785, %v2788
        %v2791 = vshrl.u32 %v2760, 16
        %v2793 = vrot.slane %v2791, 4
        %v2794 = vshll.u32 %v2760, 16
        %v2796 = vrot.slane %v2794, 5
        %v2797 = vor.u32 %v2793, %v2796
        %v2799 = vshrl.u32 %v2761, 16
        %v2801 = vrot.slane %v2799, 4
        %v2802 = vshll.u32 %v2761, 16
        %v2804 = vrot.slane %v2802, 5
        %v2805 = vor.u32 %v2801, %v2804
        %v2807 = vshrl.u32 %v2762, 16
        %v2809 = vrot.slane %v2807, 4
        %v2810 = vshll.u32 %v2762, 16
        %v2812 = vrot.slane %v2810, 5
        %v2813 = vor.u32 %v2809, %v2812
        %v2815 = vshrl.u32 %v2763, 16
        %v2817 = vrot.slane %v2815, 4
        %v2818 = vshll.u32 %v2763, 16
        %v2820 = vrot.slane %v2818, 5
        %v2821 = vor.u32 %v2817, %v2820
        %v2823 = vshrl.u32 %v2764, 16
        %v2825 = vrot.slane %v2823, 4
        %v2826 = vshll.u32 %v2764, 16
        %v2828 = vrot.slane %v2826, 5
        %v2829 = vor.u32 %v2825, %v2828
        %v2831 = vshrl.u32 %v2765, 16
        %v2833 = vrot.slane %v2831, 4
        %v2834 = vshll.u32 %v2765, 16
        %v2836 = vrot.slane %v2834, 5
        %v2837 = vor.u32 %v2833, %v2836
        %v2839 = vshrl.u32 %v2766, 16
        %v2841 = vrot.slane %v2839, 4
        %v2842 = vshll.u32 %v2766, 16
        %v2844 = vrot.slane %v2842, 5
        %v2845 = vor.u32 %v2841, %v2844
        %v2847 = vshrl.u32 %v2767, 16
        %v2849 = vrot.slane %v2847, 4
        %v2850 = vshll.u32 %v2767, 16
        %v2852 = vrot.slane %v2850, 5
        %v2853 = vor.u32 %v2849, %v2852
        %v2855 = vshrl.u32 %v2768, 16
        %v2857 = vrot.slane %v2855, 4
        %v2858 = vshll.u32 %v2768, 16
        %v2860 = vrot.slane %v2858, 5
        %v2861 = vor.u32 %v2857, %v2860
        %v2863 = vshrl.u32 %v2769, 16
        %v2865 = vrot.slane %v2863, 4
        %v2866 = vshll.u32 %v2769, 16
        %v2868 = vrot.slane %v2866, 5
        %v2869 = vor.u32 %v2865, %v2868
        %v2871 = vshrl.u32 %v2770, 16
        %v2873 = vrot.slane %v2871, 4
        %v2874 = vshll.u32 %v2770, 16
        %v2876 = vrot.slane %v2874, 5
        %v2877 = vor.u32 %v2873, %v2876
        %v2879 = vshrl.u32 %v2771, 16
        %v2881 = vrot.slane %v2879, 4
        %v2882 = vshll.u32 %v2771, 16
        %v2884 = vrot.slane %v2882, 5
        %v2885 = vor.u32 %v2881, %v2884
        %v2887 = vshrl.u32 %v2772, 16
        %v2889 = vrot.slane %v2887, 4
        %v2890 = vshll.u32 %v2772, 16
        %v2892 = vrot.slane %v2890, 5
        %v2893 = vor.u32 %v2889, %v2892
        %v2895 = vshrl.u32 %v2773, 16
        %v2897 = vrot.slane %v2895, 4
        %v2898 = vshll.u32 %v2773, 16
        %v2900 = vrot.slane %v2898, 5
        %v2901 = vor.u32 %v2897, %v2900
        %2902 = vrot.lane.b32.xlu0 %v2781, 4
        %v2903 = vpop.permute.xlu0 %2902
        %2904 = vrot.lane.b32.xlu0 %v2789, 4
        %v2905 = vpop.permute.xlu0 %2904
        %2906 = vrot.lane.b32.xlu0 %v2797, 4
        %v2907 = vpop.permute.xlu0 %2906
        %2908 = vrot.lane.b32.xlu0 %v2805, 4
        %v2909 = vpop.permute.xlu0 %2908
        %2910 = vrot.lane.b32.xlu0 %v2813, 4
        %v2911 = vpop.permute.xlu0 %2910
        %2912 = vrot.lane.b32.xlu0 %v2821, 4
        %v2913 = vpop.permute.xlu0 %2912
        %2914 = vrot.lane.b32.xlu0 %v2829, 4
        %v2915 = vpop.permute.xlu0 %2914
        %2916 = vrot.lane.b32.xlu0 %v2837, 4
        %v2917 = vpop.permute.xlu0 %2916
        %2918 = vrot.lane.b32.xlu0 %v2845, 4
        %v2919 = vpop.permute.xlu0 %2918
        %2920 = vrot.lane.b32.xlu0 %v2853, 4
        %v2921 = vpop.permute.xlu0 %2920
        %2922 = vrot.lane.b32.xlu0 %v2861, 4
        %v2923 = vpop.permute.xlu0 %2922
        %2924 = vrot.lane.b32.xlu0 %v2869, 4
        %v2925 = vpop.permute.xlu0 %2924
        %2926 = vrot.lane.b32.xlu0 %v2877, 4
        %v2927 = vpop.permute.xlu0 %2926
        %2928 = vrot.lane.b32.xlu0 %v2885, 4
        %v2929 = vpop.permute.xlu0 %2928
        %2930 = vrot.lane.b32.xlu0 %v2893, 4
        %v2931 = vpop.permute.xlu0 %2930
        %2932 = vrot.lane.b32.xlu0 %v2901, 4
        %v2933 = vpop.permute.xlu0 %2932
        %v2950 = vunpack.c.l.b16 %v2485
        %v2951 = vunpack.c.l.b16 %v2486
        %v2952 = vunpack.c.l.b16 %v2487
        %v2953 = vunpack.c.l.b16 %v2488
        %v2954 = vunpack.c.l.b16 %v2489
        %v2955 = vunpack.c.l.b16 %v2490
        %v2956 = vunpack.c.l.b16 %v2491
        %v2957 = vunpack.c.l.b16 %v2492
        %v2958 = vunpack.c.l.b16 %v2493
        %v2959 = vunpack.c.l.b16 %v2494
        %v2960 = vunpack.c.l.b16 %v2495
        %v2961 = vunpack.c.l.b16 %v2496
        %v2962 = vunpack.c.l.b16 %v2497
        %v2963 = vunpack.c.l.b16 %v2498
        %v2964 = vunpack.c.l.b16 %v2499
        %v2965 = vunpack.c.l.b16 %v2500
        %v2966 = vpack.c.b16 %v2950, %v2950
        %v2967 = vpack.c.b16 %v2951, %v2951
        %v2968 = vpack.c.b16 %v2952, %v2952
        %v2969 = vpack.c.b16 %v2953, %v2953
        %v2970 = vpack.c.b16 %v2954, %v2954
        %v2971 = vpack.c.b16 %v2955, %v2955
        %v2972 = vpack.c.b16 %v2956, %v2956
        %v2973 = vpack.c.b16 %v2957, %v2957
        %v2974 = vpack.c.b16 %v2958, %v2958
        %v2975 = vpack.c.b16 %v2959, %v2959
        %v2976 = vpack.c.b16 %v2960, %v2960
        %v2977 = vpack.c.b16 %v2961, %v2961
        %v2978 = vpack.c.b16 %v2962, %v2962
        %v2979 = vpack.c.b16 %v2963, %v2963
        %v2980 = vpack.c.b16 %v2964, %v2964
        %v2981 = vpack.c.b16 %v2965, %v2965
        %vm2982 = vcmask 1042432
        %v2983 = vrot.slane %v2758, 5
        %v2984 = vrot.slane %v2966, 5
        %v2985 = vsel %vm2982, %v2983, %v2984
        %v2986 = vrot.slane %v2759, 5
        %v2987 = vrot.slane %v2967, 5
        %v2988 = vsel %vm2982, %v2986, %v2987
        %v2989 = vrot.slane %v2760, 5
        %v2990 = vrot.slane %v2968, 5
        %v2991 = vsel %vm2982, %v2989, %v2990
        %v2992 = vrot.slane %v2761, 5
        %v2993 = vrot.slane %v2969, 5
        %v2994 = vsel %vm2982, %v2992, %v2993
        %v2995 = vrot.slane %v2762, 5
        %v2996 = vrot.slane %v2970, 5
        %v2997 = vsel %vm2982, %v2995, %v2996
        %v2998 = vrot.slane %v2763, 5
        %v2999 = vrot.slane %v2971, 5
        %v3000 = vsel %vm2982, %v2998, %v2999
        %v3001 = vrot.slane %v2764, 5
        %v3002 = vrot.slane %v2972, 5
        %v3003 = vsel %vm2982, %v3001, %v3002
        %v3004 = vrot.slane %v2765, 5
        %v3005 = vrot.slane %v2973, 5
        %v3006 = vsel %vm2982, %v3004, %v3005
        %v3007 = vrot.slane %v2766, 5
        %v3008 = vrot.slane %v2974, 5
        %v3009 = vsel %vm2982, %v3007, %v3008
        %v3010 = vrot.slane %v2767, 5
        %v3011 = vrot.slane %v2975, 5
        %v3012 = vsel %vm2982, %v3010, %v3011
        %v3013 = vrot.slane %v2768, 5
        %v3014 = vrot.slane %v2976, 5
        %v3015 = vsel %vm2982, %v3013, %v3014
        %v3016 = vrot.slane %v2769, 5
        %v3017 = vrot.slane %v2977, 5
        %v3018 = vsel %vm2982, %v3016, %v3017
        %v3019 = vrot.slane %v2770, 5
        %v3020 = vrot.slane %v2978, 5
        %v3021 = vsel %vm2982, %v3019, %v3020
        %v3022 = vrot.slane %v2771, 5
        %v3023 = vrot.slane %v2979, 5
        %v3024 = vsel %vm2982, %v3022, %v3023
        %v3025 = vrot.slane %v2772, 5
        %v3026 = vrot.slane %v2980, 5
        %v3027 = vsel %vm2982, %v3025, %v3026
        %v3028 = vrot.slane %v2773, 5
        %v3029 = vrot.slane %v2981, 5
        %v3030 = vsel %vm2982, %v3028, %v3029
        %3031 = vrot.lane.b32.xlu0 %v2983, 8
        %v3032 = vpop.permute.xlu0 %3031
        %3033 = vrot.lane.b32.xlu0 %v2985, 8
        %v3034 = vpop.permute.xlu0 %3033
        %3035 = vrot.lane.b32.xlu0 %v2986, 8
        %v3036 = vpop.permute.xlu0 %3035
        %3037 = vrot.lane.b32.xlu0 %v2988, 8
        %v3038 = vpop.permute.xlu0 %3037
        %3039 = vrot.lane.b32.xlu0 %v2989, 8
        %v3040 = vpop.permute.xlu0 %3039
        %3041 = vrot.lane.b32.xlu0 %v2991, 8
        %v3042 = vpop.permute.xlu0 %3041
        %3043 = vrot.lane.b32.xlu0 %v2992, 8
        %v3044 = vpop.permute.xlu0 %3043
        %3045 = vrot.lane.b32.xlu0 %v2994, 8
        %v3046 = vpop.permute.xlu0 %3045
        %3047 = vrot.lane.b32.xlu0 %v2995, 8
        %v3048 = vpop.permute.xlu0 %3047
        %3049 = vrot.lane.b32.xlu0 %v2997, 8
        %v3050 = vpop.permute.xlu0 %3049
        %3051 = vrot.lane.b32.xlu0 %v2998, 8
        %v3052 = vpop.permute.xlu0 %3051
        %3053 = vrot.lane.b32.xlu0 %v3000, 8
        %v3054 = vpop.permute.xlu0 %3053
        %3055 = vrot.lane.b32.xlu0 %v3001, 8
        %v3056 = vpop.permute.xlu0 %3055
        %3057 = vrot.lane.b32.xlu0 %v3003, 8
        %v3058 = vpop.permute.xlu0 %3057
        %3059 = vrot.lane.b32.xlu0 %v3004, 8
        %v3060 = vpop.permute.xlu0 %3059
        %3061 = vrot.lane.b32.xlu0 %v3006, 8
        %v3062 = vpop.permute.xlu0 %3061
        %3063 = vrot.lane.b32.xlu0 %v3007, 8
        %v3064 = vpop.permute.xlu0 %3063
        %3065 = vrot.lane.b32.xlu0 %v3009, 8
        %v3066 = vpop.permute.xlu0 %3065
        %3067 = vrot.lane.b32.xlu0 %v3010, 8
        %v3068 = vpop.permute.xlu0 %3067
        %3069 = vrot.lane.b32.xlu0 %v3012, 8
        %v3070 = vpop.permute.xlu0 %3069
        %3071 = vrot.lane.b32.xlu0 %v3013, 8
        %v3072 = vpop.permute.xlu0 %3071
        %3073 = vrot.lane.b32.xlu0 %v3015, 8
        %v3074 = vpop.permute.xlu0 %3073
        %3075 = vrot.lane.b32.xlu0 %v3016, 8
        %v3076 = vpop.permute.xlu0 %3075
        %3077 = vrot.lane.b32.xlu0 %v3018, 8
        %v3078 = vpop.permute.xlu0 %3077
        %3079 = vrot.lane.b32.xlu0 %v3019, 8
        %v3080 = vpop.permute.xlu0 %3079
        %3081 = vrot.lane.b32.xlu0 %v3021, 8
        %v3082 = vpop.permute.xlu0 %3081
        %3083 = vrot.lane.b32.xlu0 %v3022, 8
        %v3084 = vpop.permute.xlu0 %3083
        %3085 = vrot.lane.b32.xlu0 %v3024, 8
        %v3086 = vpop.permute.xlu0 %3085
        %3087 = vrot.lane.b32.xlu0 %v3025, 8
        %v3088 = vpop.permute.xlu0 %3087
        %3089 = vrot.lane.b32.xlu0 %v3027, 8
        %v3090 = vpop.permute.xlu0 %3089
        %3091 = vrot.lane.b32.xlu0 %v3028, 8
        %v3092 = vpop.permute.xlu0 %3091
        %3093 = vrot.lane.b32.xlu0 %v3030, 8
        %v3094 = vpop.permute.xlu0 %3093
        %v3143 = vunpack.c.l.b16 %v2501
        %v3144 = vunpack.c.l.b16 %v2502
        %v3145 = vunpack.c.l.b16 %v2503
        %v3146 = vunpack.c.l.b16 %v2504
        %v3147 = vunpack.c.l.b16 %v2505
        %v3148 = vunpack.c.l.b16 %v2506
        %v3149 = vunpack.c.l.b16 %v2507
        %v3150 = vunpack.c.l.b16 %v2508
        %v3151 = vunpack.c.l.b16 %v2509
        %v3152 = vunpack.c.l.b16 %v2510
        %v3153 = vunpack.c.l.b16 %v2511
        %v3154 = vunpack.c.l.b16 %v2512
        %v3155 = vunpack.c.l.b16 %v2513
        %v3156 = vunpack.c.l.b16 %v2514
        %v3157 = vunpack.c.l.b16 %v2515
        %v3158 = vunpack.c.l.b16 %v2516
        %v3159 = vunpack.c.l.b16 %v2517
        %v3160 = vunpack.c.l.b16 %v2518
        %v3161 = vunpack.c.l.b16 %v2519
        %v3162 = vunpack.c.l.b16 %v2520
        %v3163 = vunpack.c.l.b16 %v2521
        %v3164 = vunpack.c.l.b16 %v2522
        %v3165 = vunpack.c.l.b16 %v2523
        %v3166 = vunpack.c.l.b16 %v2524
        %v3167 = vunpack.c.l.b16 %v2525
        %v3168 = vunpack.c.l.b16 %v2526
        %v3169 = vunpack.c.l.b16 %v2527
        %v3170 = vunpack.c.l.b16 %v2528
        %v3171 = vunpack.c.l.b16 %v2529
        %v3172 = vunpack.c.l.b16 %v2530
        %v3173 = vunpack.c.l.b16 %v2531
        %v3174 = vunpack.c.l.b16 %v2532
        %v3175 = vunpack.c.l.b16 %v2533
        %v3176 = vunpack.c.l.b16 %v2534
        %v3177 = vunpack.c.l.b16 %v2535
        %v3178 = vunpack.c.l.b16 %v2536
        %v3179 = vunpack.c.l.b16 %v2537
        %v3180 = vunpack.c.l.b16 %v2538
        %v3181 = vunpack.c.l.b16 %v2539
        %v3182 = vunpack.c.l.b16 %v2540
        %v3183 = vunpack.c.l.b16 %v2541
        %v3184 = vunpack.c.l.b16 %v2542
        %v3185 = vunpack.c.l.b16 %v2543
        %v3186 = vunpack.c.l.b16 %v2544
        %v3187 = vunpack.c.l.b16 %v2545
        %v3188 = vunpack.c.l.b16 %v2546
        %v3189 = vunpack.c.l.b16 %v2547
        %v3190 = vunpack.c.l.b16 %v2548
        %v3191 = vpack.c.b16 %v3144, %v3143
        %v3192 = vpack.c.b16 %v3145, %v3145
        %v3193 = vpack.c.b16 %v3147, %v3146
        %v3194 = vpack.c.b16 %v3148, %v3148
        %v3195 = vpack.c.b16 %v3150, %v3149
        %v3196 = vpack.c.b16 %v3151, %v3151
        %v3197 = vpack.c.b16 %v3153, %v3152
        %v3198 = vpack.c.b16 %v3154, %v3154
        %v3199 = vpack.c.b16 %v3156, %v3155
        %v3200 = vpack.c.b16 %v3157, %v3157
        %v3201 = vpack.c.b16 %v3159, %v3158
        %v3202 = vpack.c.b16 %v3160, %v3160
        %v3203 = vpack.c.b16 %v3162, %v3161
        %v3204 = vpack.c.b16 %v3163, %v3163
        %v3205 = vpack.c.b16 %v3165, %v3164
        %v3206 = vpack.c.b16 %v3166, %v3166
        %v3207 = vpack.c.b16 %v3168, %v3167
        %v3208 = vpack.c.b16 %v3169, %v3169
        %v3209 = vpack.c.b16 %v3171, %v3170
        %v3210 = vpack.c.b16 %v3172, %v3172
        %v3211 = vpack.c.b16 %v3174, %v3173
        %v3212 = vpack.c.b16 %v3175, %v3175
        %v3213 = vpack.c.b16 %v3177, %v3176
        %v3214 = vpack.c.b16 %v3178, %v3178
        %v3215 = vpack.c.b16 %v3180, %v3179
        %v3216 = vpack.c.b16 %v3181, %v3181
        %v3217 = vpack.c.b16 %v3183, %v3182
        %v3218 = vpack.c.b16 %v3184, %v3184
        %v3219 = vpack.c.b16 %v3186, %v3185
        %v3220 = vpack.c.b16 %v3187, %v3187
        %v3221 = vpack.c.b16 %v3189, %v3188
        %v3222 = vpack.c.b16 %v3190, %v3190
        %3223 = vrot.lane.b32.xlu0 %v3191, 12
        %v3224 = vpop.permute.xlu0 %3223
        %3225 = vrot.lane.b32.xlu0 %v3192, 12
        %v3226 = vpop.permute.xlu0 %3225
        %3227 = vrot.lane.b32.xlu0 %v3193, 12
        %v3228 = vpop.permute.xlu0 %3227
        %3229 = vrot.lane.b32.xlu0 %v3194, 12
        %v3230 = vpop.permute.xlu0 %3229
        %3231 = vrot.lane.b32.xlu0 %v3195, 12
        %v3232 = vpop.permute.xlu0 %3231
        %3233 = vrot.lane.b32.xlu0 %v3196, 12
        %v3234 = vpop.permute.xlu0 %3233
        %3235 = vrot.lane.b32.xlu0 %v3197, 12
        %v3236 = vpop.permute.xlu0 %3235
        %3237 = vrot.lane.b32.xlu0 %v3198, 12
        %v3238 = vpop.permute.xlu0 %3237
        %3239 = vrot.lane.b32.xlu0 %v3199, 12
        %v3240 = vpop.permute.xlu0 %3239
        %3241 = vrot.lane.b32.xlu0 %v3200, 12
        %v3242 = vpop.permute.xlu0 %3241
        %3243 = vrot.lane.b32.xlu0 %v3201, 12
        %v3244 = vpop.permute.xlu0 %3243
        %3245 = vrot.lane.b32.xlu0 %v3202, 12
        %v3246 = vpop.permute.xlu0 %3245
        %3247 = vrot.lane.b32.xlu0 %v3203, 12
        %v3248 = vpop.permute.xlu0 %3247
        %3249 = vrot.lane.b32.xlu0 %v3204, 12
        %v3250 = vpop.permute.xlu0 %3249
        %3251 = vrot.lane.b32.xlu0 %v3205, 12
        %v3252 = vpop.permute.xlu0 %3251
        %3253 = vrot.lane.b32.xlu0 %v3206, 12
        %v3254 = vpop.permute.xlu0 %3253
        %3255 = vrot.lane.b32.xlu0 %v3207, 12
        %v3256 = vpop.permute.xlu0 %3255
        %3257 = vrot.lane.b32.xlu0 %v3208, 12
        %v3258 = vpop.permute.xlu0 %3257
        %3259 = vrot.lane.b32.xlu0 %v3209, 12
        %v3260 = vpop.permute.xlu0 %3259
        %3261 = vrot.lane.b32.xlu0 %v3210, 12
        %v3262 = vpop.permute.xlu0 %3261
        %3263 = vrot.lane.b32.xlu0 %v3211, 12
        %v3264 = vpop.permute.xlu0 %3263
        %3265 = vrot.lane.b32.xlu0 %v3212, 12
        %v3266 = vpop.permute.xlu0 %3265
        %3267 = vrot.lane.b32.xlu0 %v3213, 12
        %v3268 = vpop.permute.xlu0 %3267
        %3269 = vrot.lane.b32.xlu0 %v3214, 12
        %v3270 = vpop.permute.xlu0 %3269
        %3271 = vrot.lane.b32.xlu0 %v3215, 12
        %v3272 = vpop.permute.xlu0 %3271
        %3273 = vrot.lane.b32.xlu0 %v3216, 12
        %v3274 = vpop.permute.xlu0 %3273
        %3275 = vrot.lane.b32.xlu0 %v3217, 12
        %v3276 = vpop.permute.xlu0 %3275
        %3277 = vrot.lane.b32.xlu0 %v3218, 12
        %v3278 = vpop.permute.xlu0 %3277
        %3279 = vrot.lane.b32.xlu0 %v3219, 12
        %v3280 = vpop.permute.xlu0 %3279
        %3281 = vrot.lane.b32.xlu0 %v3220, 12
        %v3282 = vpop.permute.xlu0 %3281
        %3283 = vrot.lane.b32.xlu0 %v3221, 12
        %v3284 = vpop.permute.xlu0 %3283
        %3285 = vrot.lane.b32.xlu0 %v3222, 12
        %v3286 = vpop.permute.xlu0 %3285
        %v3287 = vpack.c.b16 %v3145, %v3144
        %v3288 = vpack.c.b16 %v3148, %v3147
        %v3289 = vpack.c.b16 %v3151, %v3150
        %v3290 = vpack.c.b16 %v3154, %v3153
        %v3291 = vpack.c.b16 %v3157, %v3156
        %v3292 = vpack.c.b16 %v3160, %v3159
        %v3293 = vpack.c.b16 %v3163, %v3162
        %v3294 = vpack.c.b16 %v3166, %v3165
        %v3295 = vpack.c.b16 %v3169, %v3168
        %v3296 = vpack.c.b16 %v3172, %v3171
        %v3297 = vpack.c.b16 %v3175, %v3174
        %v3298 = vpack.c.b16 %v3178, %v3177
        %v3299 = vpack.c.b16 %v3181, %v3180
        %v3300 = vpack.c.b16 %v3184, %v3183
        %v3301 = vpack.c.b16 %v3187, %v3186
        %v3302 = vpack.c.b16 %v3190, %v3189
        %v3304 = vshrl.u32 %v3287, 16
        %v3306 = vrot.slane %v3304, 4
        %v3307 = vshll.u32 %v3287, 16
        %v3309 = vrot.slane %v3307, 5
        %v3310 = vor.u32 %v3306, %v3309
        %v3312 = vshrl.u32 %v3288, 16
        %v3314 = vrot.slane %v3312, 4
        %v3315 = vshll.u32 %v3288, 16
        %v3317 = vrot.slane %v3315, 5
        %v3318 = vor.u32 %v3314, %v3317
        %v3320 = vshrl.u32 %v3289, 16
        %v3322 = vrot.slane %v3320, 4
        %v3323 = vshll.u32 %v3289, 16
        %v3325 = vrot.slane %v3323, 5
        %v3326 = vor.u32 %v3322, %v3325
        %v3328 = vshrl.u32 %v3290, 16
        %v3330 = vrot.slane %v3328, 4
        %v3331 = vshll.u32 %v3290, 16
        %v3333 = vrot.slane %v3331, 5
        %v3334 = vor.u32 %v3330, %v3333
        %v3336 = vshrl.u32 %v3291, 16
        %v3338 = vrot.slane %v3336, 4
        %v3339 = vshll.u32 %v3291, 16
        %v3341 = vrot.slane %v3339, 5
        %v3342 = vor.u32 %v3338, %v3341
        %v3344 = vshrl.u32 %v3292, 16
        %v3346 = vrot.slane %v3344, 4
        %v3347 = vshll.u32 %v3292, 16
        %v3349 = vrot.slane %v3347, 5
        %v3350 = vor.u32 %v3346, %v3349
        %v3352 = vshrl.u32 %v3293, 16
        %v3354 = vrot.slane %v3352, 4
        %v3355 = vshll.u32 %v3293, 16
        %v3357 = vrot.slane %v3355, 5
        %v3358 = vor.u32 %v3354, %v3357
        %v3360 = vshrl.u32 %v3294, 16
        %v3362 = vrot.slane %v3360, 4
        %v3363 = vshll.u32 %v3294, 16
        %v3365 = vrot.slane %v3363, 5
        %v3366 = vor.u32 %v3362, %v3365
        %v3368 = vshrl.u32 %v3295, 16
        %v3370 = vrot.slane %v3368, 4
        %v3371 = vshll.u32 %v3295, 16
        %v3373 = vrot.slane %v3371, 5
        %v3374 = vor.u32 %v3370, %v3373
        %v3376 = vshrl.u32 %v3296, 16
        %v3378 = vrot.slane %v3376, 4
        %v3379 = vshll.u32 %v3296, 16
        %v3381 = vrot.slane %v3379, 5
        %v3382 = vor.u32 %v3378, %v3381
        %v3384 = vshrl.u32 %v3297, 16
        %v3386 = vrot.slane %v3384, 4
        %v3387 = vshll.u32 %v3297, 16
        %v3389 = vrot.slane %v3387, 5
        %v3390 = vor.u32 %v3386, %v3389
        %v3392 = vshrl.u32 %v3298, 16
        %v3394 = vrot.slane %v3392, 4
        %v3395 = vshll.u32 %v3298, 16
        %v3397 = vrot.slane %v3395, 5
        %v3398 = vor.u32 %v3394, %v3397
        %v3400 = vshrl.u32 %v3299, 16
        %v3402 = vrot.slane %v3400, 4
        %v3403 = vshll.u32 %v3299, 16
        %v3405 = vrot.slane %v3403, 5
        %v3406 = vor.u32 %v3402, %v3405
        %v3408 = vshrl.u32 %v3300, 16
        %v3410 = vrot.slane %v3408, 4
        %v3411 = vshll.u32 %v3300, 16
        %v3413 = vrot.slane %v3411, 5
        %v3414 = vor.u32 %v3410, %v3413
        %v3416 = vshrl.u32 %v3301, 16
        %v3418 = vrot.slane %v3416, 4
        %v3419 = vshll.u32 %v3301, 16
        %v3421 = vrot.slane %v3419, 5
        %v3422 = vor.u32 %v3418, %v3421
        %v3424 = vshrl.u32 %v3302, 16
        %v3426 = vrot.slane %v3424, 4
        %v3427 = vshll.u32 %v3302, 16
        %v3429 = vrot.slane %v3427, 5
        %v3430 = vor.u32 %v3426, %v3429
        %3431 = vrot.lane.b32.xlu0 %v3310, 16
        %v3432 = vpop.permute.xlu0 %3431
        %3433 = vrot.lane.b32.xlu0 %v3318, 16
        %v3434 = vpop.permute.xlu0 %3433
        %3435 = vrot.lane.b32.xlu0 %v3326, 16
        %v3436 = vpop.permute.xlu0 %3435
        %3437 = vrot.lane.b32.xlu0 %v3334, 16
        %v3438 = vpop.permute.xlu0 %3437
        %3439 = vrot.lane.b32.xlu0 %v3342, 16
        %v3440 = vpop.permute.xlu0 %3439
        %3441 = vrot.lane.b32.xlu0 %v3350, 16
        %v3442 = vpop.permute.xlu0 %3441
        %3443 = vrot.lane.b32.xlu0 %v3358, 16
        %v3444 = vpop.permute.xlu0 %3443
        %3445 = vrot.lane.b32.xlu0 %v3366, 16
        %v3446 = vpop.permute.xlu0 %3445
        %3447 = vrot.lane.b32.xlu0 %v3374, 16
        %v3448 = vpop.permute.xlu0 %3447
        %3449 = vrot.lane.b32.xlu0 %v3382, 16
        %v3450 = vpop.permute.xlu0 %3449
        %3451 = vrot.lane.b32.xlu0 %v3390, 16
        %v3452 = vpop.permute.xlu0 %3451
        %3453 = vrot.lane.b32.xlu0 %v3398, 16
        %v3454 = vpop.permute.xlu0 %3453
        %3455 = vrot.lane.b32.xlu0 %v3406, 16
        %v3456 = vpop.permute.xlu0 %3455
        %3457 = vrot.lane.b32.xlu0 %v3414, 16
        %v3458 = vpop.permute.xlu0 %3457
        %3459 = vrot.lane.b32.xlu0 %v3422, 16
        %v3460 = vpop.permute.xlu0 %3459
        %3461 = vrot.lane.b32.xlu0 %v3430, 16
        %v3462 = vpop.permute.xlu0 %3461
        %v3479 = vunpack.c.l.b16 %v2549
        %v3480 = vunpack.c.l.b16 %v2550
        %v3481 = vunpack.c.l.b16 %v2551
        %v3482 = vunpack.c.l.b16 %v2552
        %v3483 = vunpack.c.l.b16 %v2553
        %v3484 = vunpack.c.l.b16 %v2554
        %v3485 = vunpack.c.l.b16 %v2555
        %v3486 = vunpack.c.l.b16 %v2556
        %v3487 = vunpack.c.l.b16 %v2557
        %v3488 = vunpack.c.l.b16 %v2558
        %v3489 = vunpack.c.l.b16 %v2559
        %v3490 = vunpack.c.l.b16 %v2560
        %v3491 = vunpack.c.l.b16 %v2561
        %v3492 = vunpack.c.l.b16 %v2562
        %v3493 = vunpack.c.l.b16 %v2563
        %v3494 = vunpack.c.l.b16 %v2564
        %v3495 = vpack.c.b16 %v3479, %v3479
        %v3496 = vpack.c.b16 %v3480, %v3480
        %v3497 = vpack.c.b16 %v3481, %v3481
        %v3498 = vpack.c.b16 %v3482, %v3482
        %v3499 = vpack.c.b16 %v3483, %v3483
        %v3500 = vpack.c.b16 %v3484, %v3484
        %v3501 = vpack.c.b16 %v3485, %v3485
        %v3502 = vpack.c.b16 %v3486, %v3486
        %v3503 = vpack.c.b16 %v3487, %v3487
        %v3504 = vpack.c.b16 %v3488, %v3488
        %v3505 = vpack.c.b16 %v3489, %v3489
        %v3506 = vpack.c.b16 %v3490, %v3490
        %v3507 = vpack.c.b16 %v3491, %v3491
        %v3508 = vpack.c.b16 %v3492, %v3492
        %v3509 = vpack.c.b16 %v3493, %v3493
        %v3510 = vpack.c.b16 %v3494, %v3494
        %v3511 = vrot.slane %v3287, 5
        %v3512 = vrot.slane %v3495, 5
        %v3513 = vsel %vm2982, %v3511, %v3512
        %v3514 = vrot.slane %v3288, 5
        %v3515 = vrot.slane %v3496, 5
        %v3516 = vsel %vm2982, %v3514, %v3515
        %v3517 = vrot.slane %v3289, 5
        %v3518 = vrot.slane %v3497, 5
        %v3519 = vsel %vm2982, %v3517, %v3518
        %v3520 = vrot.slane %v3290, 5
        %v3521 = vrot.slane %v3498, 5
        %v3522 = vsel %vm2982, %v3520, %v3521
        %v3523 = vrot.slane %v3291, 5
        %v3524 = vrot.slane %v3499, 5
        %v3525 = vsel %vm2982, %v3523, %v3524
        %v3526 = vrot.slane %v3292, 5
        %v3527 = vrot.slane %v3500, 5
        %v3528 = vsel %vm2982, %v3526, %v3527
        %v3529 = vrot.slane %v3293, 5
        %v3530 = vrot.slane %v3501, 5
        %v3531 = vsel %vm2982, %v3529, %v3530
        %v3532 = vrot.slane %v3294, 5
        %v3533 = vrot.slane %v3502, 5
        %v3534 = vsel %vm2982, %v3532, %v3533
        %v3535 = vrot.slane %v3295, 5
        %v3536 = vrot.slane %v3503, 5
        %v3537 = vsel %vm2982, %v3535, %v3536
        %v3538 = vrot.slane %v3296, 5
        %v3539 = vrot.slane %v3504, 5
        %v3540 = vsel %vm2982, %v3538, %v3539
        %v3541 = vrot.slane %v3297, 5
        %v3542 = vrot.slane %v3505, 5
        %v3543 = vsel %vm2982, %v3541, %v3542
        %v3544 = vrot.slane %v3298, 5
        %v3545 = vrot.slane %v3506, 5
        %v3546 = vsel %vm2982, %v3544, %v3545
        %v3547 = vrot.slane %v3299, 5
        %v3548 = vrot.slane %v3507, 5
        %v3549 = vsel %vm2982, %v3547, %v3548
        %v3550 = vrot.slane %v3300, 5
        %v3551 = vrot.slane %v3508, 5
        %v3552 = vsel %vm2982, %v3550, %v3551
        %v3553 = vrot.slane %v3301, 5
        %v3554 = vrot.slane %v3509, 5
        %v3555 = vsel %vm2982, %v3553, %v3554
        %v3556 = vrot.slane %v3302, 5
        %v3557 = vrot.slane %v3510, 5
        %v3558 = vsel %vm2982, %v3556, %v3557
        %3559 = vrot.lane.b32.xlu0 %v3511, 20
        %v3560 = vpop.permute.xlu0 %3559
        %3561 = vrot.lane.b32.xlu0 %v3513, 20
        %v3562 = vpop.permute.xlu0 %3561
        %3563 = vrot.lane.b32.xlu0 %v3514, 20
        %v3564 = vpop.permute.xlu0 %3563
        %3565 = vrot.lane.b32.xlu0 %v3516, 20
        %v3566 = vpop.permute.xlu0 %3565
        %3567 = vrot.lane.b32.xlu0 %v3517, 20
        %v3568 = vpop.permute.xlu0 %3567
        %3569 = vrot.lane.b32.xlu0 %v3519, 20
        %v3570 = vpop.permute.xlu0 %3569
        %3571 = vrot.lane.b32.xlu0 %v3520, 20
        %v3572 = vpop.permute.xlu0 %3571
        %3573 = vrot.lane.b32.xlu0 %v3522, 20
        %v3574 = vpop.permute.xlu0 %3573
        %3575 = vrot.lane.b32.xlu0 %v3523, 20
        %v3576 = vpop.permute.xlu0 %3575
        %3577 = vrot.lane.b32.xlu0 %v3525, 20
        %v3578 = vpop.permute.xlu0 %3577
        %3579 = vrot.lane.b32.xlu0 %v3526, 20
        %v3580 = vpop.permute.xlu0 %3579
        %3581 = vrot.lane.b32.xlu0 %v3528, 20
        %v3582 = vpop.permute.xlu0 %3581
        %3583 = vrot.lane.b32.xlu0 %v3529, 20
        %v3584 = vpop.permute.xlu0 %3583
        %3585 = vrot.lane.b32.xlu0 %v3531, 20
        %v3586 = vpop.permute.xlu0 %3585
        %3587 = vrot.lane.b32.xlu0 %v3532, 20
        %v3588 = vpop.permute.xlu0 %3587
        %3589 = vrot.lane.b32.xlu0 %v3534, 20
        %v3590 = vpop.permute.xlu0 %3589
        %3591 = vrot.lane.b32.xlu0 %v3535, 20
        %v3592 = vpop.permute.xlu0 %3591
        %3593 = vrot.lane.b32.xlu0 %v3537, 20
        %v3594 = vpop.permute.xlu0 %3593
        %3595 = vrot.lane.b32.xlu0 %v3538, 20
        %v3596 = vpop.permute.xlu0 %3595
        %3597 = vrot.lane.b32.xlu0 %v3540, 20
        %v3598 = vpop.permute.xlu0 %3597
        %3599 = vrot.lane.b32.xlu0 %v3541, 20
        %v3600 = vpop.permute.xlu0 %3599
        %3601 = vrot.lane.b32.xlu0 %v3543, 20
        %v3602 = vpop.permute.xlu0 %3601
        %3603 = vrot.lane.b32.xlu0 %v3544, 20
        %v3604 = vpop.permute.xlu0 %3603
        %3605 = vrot.lane.b32.xlu0 %v3546, 20
        %v3606 = vpop.permute.xlu0 %3605
        %3607 = vrot.lane.b32.xlu0 %v3547, 20
        %v3608 = vpop.permute.xlu0 %3607
        %3609 = vrot.lane.b32.xlu0 %v3549, 20
        %v3610 = vpop.permute.xlu0 %3609
        %3611 = vrot.lane.b32.xlu0 %v3550, 20
        %v3612 = vpop.permute.xlu0 %3611
        %3613 = vrot.lane.b32.xlu0 %v3552, 20
        %v3614 = vpop.permute.xlu0 %3613
        %3615 = vrot.lane.b32.xlu0 %v3553, 20
        %v3616 = vpop.permute.xlu0 %3615
        %3617 = vrot.lane.b32.xlu0 %v3555, 20
        %v3618 = vpop.permute.xlu0 %3617
        %3619 = vrot.lane.b32.xlu0 %v3556, 20
        %v3620 = vpop.permute.xlu0 %3619
        %3621 = vrot.lane.b32.xlu0 %v3558, 20
        %v3622 = vpop.permute.xlu0 %3621
        %v3671 = vunpack.c.l.b16 %v2566
        %v3672 = vunpack.c.l.b16 %v2567
        %v3673 = vunpack.c.l.b16 %v2568
        %v3674 = vunpack.c.l.b16 %v2569
        %v3675 = vunpack.c.l.b16 %v2570
        %v3676 = vunpack.c.l.b16 %v2571
        %v3677 = vunpack.c.l.b16 %v2572
        %v3678 = vunpack.c.l.b16 %v2573
        %v3679 = vunpack.c.l.b16 %v2574
        %v3680 = vunpack.c.l.b16 %v2575
        %v3681 = vunpack.c.l.b16 %v2576
        %v3682 = vunpack.c.l.b16 %v2577
        %v3683 = vunpack.c.l.b16 %v2578
        %v3684 = vunpack.c.l.b16 %v2579
        %v3685 = vunpack.c.l.b16 %v2580
        %v3686 = vunpack.c.l.b16 %v2581
        %v3687 = vunpack.c.l.b16 %v2582
        %v3688 = vunpack.c.l.b16 %v2583
        %v3689 = vunpack.c.l.b16 %v2584
        %v3690 = vunpack.c.l.b16 %v2585
        %v3691 = vunpack.c.l.b16 %v2586
        %v3692 = vunpack.c.l.b16 %v2587
        %v3693 = vunpack.c.l.b16 %v2588
        %v3694 = vunpack.c.l.b16 %v2589
        %v3695 = vunpack.c.l.b16 %v2590
        %v3696 = vunpack.c.l.b16 %v2591
        %v3697 = vunpack.c.l.b16 %v2592
        %v3698 = vunpack.c.l.b16 %v2593
        %v3699 = vunpack.c.l.b16 %v2594
        %v3700 = vunpack.c.l.b16 %v2595
        %v3701 = vunpack.c.l.b16 %v2596
        %v3702 = vunpack.c.l.b16 %v2597
        %v3703 = vunpack.c.l.b16 %v2598
        %v3704 = vunpack.c.l.b16 %v2599
        %v3705 = vunpack.c.l.b16 %v2600
        %v3706 = vunpack.c.l.b16 %v2601
        %v3707 = vunpack.c.l.b16 %v2602
        %v3708 = vunpack.c.l.b16 %v2603
        %v3709 = vunpack.c.l.b16 %v2604
        %v3710 = vunpack.c.l.b16 %v2605
        %v3711 = vunpack.c.l.b16 %v2606
        %v3712 = vunpack.c.l.b16 %v2607
        %v3713 = vunpack.c.l.b16 %v2608
        %v3714 = vunpack.c.l.b16 %v2609
        %v3715 = vunpack.c.l.b16 %v2610
        %v3716 = vunpack.c.l.b16 %v2611
        %v3717 = vunpack.c.l.b16 %v2612
        %v3718 = vunpack.c.l.b16 %v2613
        %v3719 = vpack.c.b16 %v3672, %v3671
        %v3720 = vpack.c.b16 %v3673, %v3673
        %v3721 = vpack.c.b16 %v3675, %v3674
        %v3722 = vpack.c.b16 %v3676, %v3676
        %v3723 = vpack.c.b16 %v3678, %v3677
        %v3724 = vpack.c.b16 %v3679, %v3679
        %v3725 = vpack.c.b16 %v3681, %v3680
        %v3726 = vpack.c.b16 %v3682, %v3682
        %v3727 = vpack.c.b16 %v3684, %v3683
        %v3728 = vpack.c.b16 %v3685, %v3685
        %v3729 = vpack.c.b16 %v3687, %v3686
        %v3730 = vpack.c.b16 %v3688, %v3688
        %v3731 = vpack.c.b16 %v3690, %v3689
        %v3732 = vpack.c.b16 %v3691, %v3691
        %v3733 = vpack.c.b16 %v3693, %v3692
        %v3734 = vpack.c.b16 %v3694, %v3694
        %v3735 = vpack.c.b16 %v3696, %v3695
        %v3736 = vpack.c.b16 %v3697, %v3697
        %v3737 = vpack.c.b16 %v3699, %v3698
        %v3738 = vpack.c.b16 %v3700, %v3700
        %v3739 = vpack.c.b16 %v3702, %v3701
        %v3740 = vpack.c.b16 %v3703, %v3703
        %v3741 = vpack.c.b16 %v3705, %v3704
        %v3742 = vpack.c.b16 %v3706, %v3706
        %v3743 = vpack.c.b16 %v3708, %v3707
        %v3744 = vpack.c.b16 %v3709, %v3709
        %v3745 = vpack.c.b16 %v3711, %v3710
        %v3746 = vpack.c.b16 %v3712, %v3712
        %v3747 = vpack.c.b16 %v3714, %v3713
        %v3748 = vpack.c.b16 %v3715, %v3715
        %v3749 = vpack.c.b16 %v3717, %v3716
        %v3750 = vpack.c.b16 %v3718, %v3718
        %3751 = vrot.lane.b32.xlu0 %v3719, 24
        %v3752 = vpop.permute.xlu0 %3751
        %3753 = vrot.lane.b32.xlu0 %v3720, 24
        %v3754 = vpop.permute.xlu0 %3753
        %3755 = vrot.lane.b32.xlu0 %v3721, 24
        %v3756 = vpop.permute.xlu0 %3755
        %3757 = vrot.lane.b32.xlu0 %v3722, 24
        %v3758 = vpop.permute.xlu0 %3757
        %3759 = vrot.lane.b32.xlu0 %v3723, 24
        %v3760 = vpop.permute.xlu0 %3759
        %3761 = vrot.lane.b32.xlu0 %v3724, 24
        %v3762 = vpop.permute.xlu0 %3761
        %3763 = vrot.lane.b32.xlu0 %v3725, 24
        %v3764 = vpop.permute.xlu0 %3763
        %3765 = vrot.lane.b32.xlu0 %v3726, 24
        %v3766 = vpop.permute.xlu0 %3765
        %3767 = vrot.lane.b32.xlu0 %v3727, 24
        %v3768 = vpop.permute.xlu0 %3767
        %3769 = vrot.lane.b32.xlu0 %v3728, 24
        %v3770 = vpop.permute.xlu0 %3769
        %3771 = vrot.lane.b32.xlu0 %v3729, 24
        %v3772 = vpop.permute.xlu0 %3771
        %3773 = vrot.lane.b32.xlu0 %v3730, 24
        %v3774 = vpop.permute.xlu0 %3773
        %3775 = vrot.lane.b32.xlu0 %v3731, 24
        %v3776 = vpop.permute.xlu0 %3775
        %3777 = vrot.lane.b32.xlu0 %v3732, 24
        %v3778 = vpop.permute.xlu0 %3777
        %3779 = vrot.lane.b32.xlu0 %v3733, 24
        %v3780 = vpop.permute.xlu0 %3779
        %3781 = vrot.lane.b32.xlu0 %v3734, 24
        %v3782 = vpop.permute.xlu0 %3781
        %3783 = vrot.lane.b32.xlu0 %v3735, 24
        %v3784 = vpop.permute.xlu0 %3783
        %3785 = vrot.lane.b32.xlu0 %v3736, 24
        %v3786 = vpop.permute.xlu0 %3785
        %3787 = vrot.lane.b32.xlu0 %v3737, 24
        %v3788 = vpop.permute.xlu0 %3787
        %3789 = vrot.lane.b32.xlu0 %v3738, 24
        %v3790 = vpop.permute.xlu0 %3789
        %3791 = vrot.lane.b32.xlu0 %v3739, 24
        %v3792 = vpop.permute.xlu0 %3791
        %3793 = vrot.lane.b32.xlu0 %v3740, 24
        %v3794 = vpop.permute.xlu0 %3793
        %3795 = vrot.lane.b32.xlu0 %v3741, 24
        %v3796 = vpop.permute.xlu0 %3795
        %3797 = vrot.lane.b32.xlu0 %v3742, 24
        %v3798 = vpop.permute.xlu0 %3797
        %3799 = vrot.lane.b32.xlu0 %v3743, 24
        %v3800 = vpop.permute.xlu0 %3799
        %3801 = vrot.lane.b32.xlu0 %v3744, 24
        %v3802 = vpop.permute.xlu0 %3801
        %3803 = vrot.lane.b32.xlu0 %v3745, 24
        %v3804 = vpop.permute.xlu0 %3803
        %3805 = vrot.lane.b32.xlu0 %v3746, 24
        %v3806 = vpop.permute.xlu0 %3805
        %3807 = vrot.lane.b32.xlu0 %v3747, 24
        %v3808 = vpop.permute.xlu0 %3807
        %3809 = vrot.lane.b32.xlu0 %v3748, 24
        %v3810 = vpop.permute.xlu0 %3809
        %3811 = vrot.lane.b32.xlu0 %v3749, 24
        %v3812 = vpop.permute.xlu0 %3811
        %3813 = vrot.lane.b32.xlu0 %v3750, 24
        %v3814 = vpop.permute.xlu0 %3813
        %v3815 = vpack.c.b16 %v3673, %v3672
        %v3816 = vpack.c.b16 %v3676, %v3675
        %v3817 = vpack.c.b16 %v3679, %v3678
        %v3818 = vpack.c.b16 %v3682, %v3681
        %v3819 = vpack.c.b16 %v3685, %v3684
        %v3820 = vpack.c.b16 %v3688, %v3687
        %v3821 = vpack.c.b16 %v3691, %v3690
        %v3822 = vpack.c.b16 %v3694, %v3693
        %v3823 = vpack.c.b16 %v3697, %v3696
        %v3824 = vpack.c.b16 %v3700, %v3699
        %v3825 = vpack.c.b16 %v3703, %v3702
        %v3826 = vpack.c.b16 %v3706, %v3705
        %v3827 = vpack.c.b16 %v3709, %v3708
        %v3828 = vpack.c.b16 %v3712, %v3711
        %v3829 = vpack.c.b16 %v3715, %v3714
        %v3830 = vpack.c.b16 %v3718, %v3717
        %v3832 = vshrl.u32 %v3815, 16
        %v3834 = vrot.slane %v3832, 4
        %v3835 = vshll.u32 %v3815, 16
        %v3837 = vrot.slane %v3835, 5
        %v3838 = vor.u32 %v3834, %v3837
        %v3840 = vshrl.u32 %v3816, 16
        %v3842 = vrot.slane %v3840, 4
        %v3843 = vshll.u32 %v3816, 16
        %v3845 = vrot.slane %v3843, 5
        %v3846 = vor.u32 %v3842, %v3845
        %v3848 = vshrl.u32 %v3817, 16
        %v3850 = vrot.slane %v3848, 4
        %v3851 = vshll.u32 %v3817, 16
        %v3853 = vrot.slane %v3851, 5
        %v3854 = vor.u32 %v3850, %v3853
        %v3856 = vshrl.u32 %v3818, 16
        %v3858 = vrot.slane %v3856, 4
        %v3859 = vshll.u32 %v3818, 16
        %v3861 = vrot.slane %v3859, 5
        %v3862 = vor.u32 %v3858, %v3861
        %v3864 = vshrl.u32 %v3819, 16
        %v3866 = vrot.slane %v3864, 4
        %v3867 = vshll.u32 %v3819, 16
        %v3869 = vrot.slane %v3867, 5
        %v3870 = vor.u32 %v3866, %v3869
        %v3872 = vshrl.u32 %v3820, 16
        %v3874 = vrot.slane %v3872, 4
        %v3875 = vshll.u32 %v3820, 16
        %v3877 = vrot.slane %v3875, 5
        %v3878 = vor.u32 %v3874, %v3877
        %v3880 = vshrl.u32 %v3821, 16
        %v3882 = vrot.slane %v3880, 4
        %v3883 = vshll.u32 %v3821, 16
        %v3885 = vrot.slane %v3883, 5
        %v3886 = vor.u32 %v3882, %v3885
        %v3888 = vshrl.u32 %v3822, 16
        %v3890 = vrot.slane %v3888, 4
        %v3891 = vshll.u32 %v3822, 16
        %v3893 = vrot.slane %v3891, 5
        %v3894 = vor.u32 %v3890, %v3893
        %v3896 = vshrl.u32 %v3823, 16
        %v3898 = vrot.slane %v3896, 4
        %v3899 = vshll.u32 %v3823, 16
        %v3901 = vrot.slane %v3899, 5
        %v3902 = vor.u32 %v3898, %v3901
        %v3904 = vshrl.u32 %v3824, 16
        %v3906 = vrot.slane %v3904, 4
        %v3907 = vshll.u32 %v3824, 16
        %v3909 = vrot.slane %v3907, 5
        %v3910 = vor.u32 %v3906, %v3909
        %v3912 = vshrl.u32 %v3825, 16
        %v3914 = vrot.slane %v3912, 4
        %v3915 = vshll.u32 %v3825, 16
        %v3917 = vrot.slane %v3915, 5
        %v3918 = vor.u32 %v3914, %v3917
        %v3920 = vshrl.u32 %v3826, 16
        %v3922 = vrot.slane %v3920, 4
        %v3923 = vshll.u32 %v3826, 16
        %v3925 = vrot.slane %v3923, 5
        %v3926 = vor.u32 %v3922, %v3925
        %v3928 = vshrl.u32 %v3827, 16
        %v3930 = vrot.slane %v3928, 4
        %v3931 = vshll.u32 %v3827, 16
        %v3933 = vrot.slane %v3931, 5
        %v3934 = vor.u32 %v3930, %v3933
        %v3936 = vshrl.u32 %v3828, 16
        %v3938 = vrot.slane %v3936, 4
        %v3939 = vshll.u32 %v3828, 16
        %v3941 = vrot.slane %v3939, 5
        %v3942 = vor.u32 %v3938, %v3941
        %v3944 = vshrl.u32 %v3829, 16
        %v3946 = vrot.slane %v3944, 4
        %v3947 = vshll.u32 %v3829, 16
        %v3949 = vrot.slane %v3947, 5
        %v3950 = vor.u32 %v3946, %v3949
        %v3952 = vshrl.u32 %v3830, 16
        %v3954 = vrot.slane %v3952, 4
        %v3955 = vshll.u32 %v3830, 16
        %v3957 = vrot.slane %v3955, 5
        %v3958 = vor.u32 %v3954, %v3957
        %3959 = vrot.lane.b32.xlu0 %v3838, 28
        %v3960 = vpop.permute.xlu0 %3959
        %3961 = vrot.lane.b32.xlu0 %v3846, 28
        %v3962 = vpop.permute.xlu0 %3961
        %3963 = vrot.lane.b32.xlu0 %v3854, 28
        %v3964 = vpop.permute.xlu0 %3963
        %3965 = vrot.lane.b32.xlu0 %v3862, 28
        %v3966 = vpop.permute.xlu0 %3965
        %3967 = vrot.lane.b32.xlu0 %v3870, 28
        %v3968 = vpop.permute.xlu0 %3967
        %3969 = vrot.lane.b32.xlu0 %v3878, 28
        %v3970 = vpop.permute.xlu0 %3969
        %3971 = vrot.lane.b32.xlu0 %v3886, 28
        %v3972 = vpop.permute.xlu0 %3971
        %3973 = vrot.lane.b32.xlu0 %v3894, 28
        %v3974 = vpop.permute.xlu0 %3973
        %3975 = vrot.lane.b32.xlu0 %v3902, 28
        %v3976 = vpop.permute.xlu0 %3975
        %3977 = vrot.lane.b32.xlu0 %v3910, 28
        %v3978 = vpop.permute.xlu0 %3977
        %3979 = vrot.lane.b32.xlu0 %v3918, 28
        %v3980 = vpop.permute.xlu0 %3979
        %3981 = vrot.lane.b32.xlu0 %v3926, 28
        %v3982 = vpop.permute.xlu0 %3981
        %3983 = vrot.lane.b32.xlu0 %v3934, 28
        %v3984 = vpop.permute.xlu0 %3983
        %3985 = vrot.lane.b32.xlu0 %v3942, 28
        %v3986 = vpop.permute.xlu0 %3985
        %3987 = vrot.lane.b32.xlu0 %v3950, 28
        %v3988 = vpop.permute.xlu0 %3987
        %3989 = vrot.lane.b32.xlu0 %v3958, 28
        %v3990 = vpop.permute.xlu0 %3989
        %v4007 = vunpack.c.l.b16 %v2614
        %v4008 = vunpack.c.l.b16 %v2615
        %v4009 = vunpack.c.l.b16 %v2616
        %v4010 = vunpack.c.l.b16 %v2617
        %v4011 = vunpack.c.l.b16 %v2618
        %v4012 = vunpack.c.l.b16 %v2619
        %v4013 = vunpack.c.l.b16 %v2620
        %v4014 = vunpack.c.l.b16 %v2621
        %v4015 = vunpack.c.l.b16 %v2622
        %v4016 = vunpack.c.l.b16 %v2623
        %v4017 = vunpack.c.l.b16 %v2624
        %v4018 = vunpack.c.l.b16 %v2625
        %v4019 = vunpack.c.l.b16 %v2626
        %v4020 = vunpack.c.l.b16 %v2627
        %v4021 = vunpack.c.l.b16 %v2628
        %v4022 = vunpack.c.l.b16 %v2629
        %v4023 = vpack.c.b16 %v4007, %v4007
        %v4024 = vpack.c.b16 %v4008, %v4008
        %v4025 = vpack.c.b16 %v4009, %v4009
        %v4026 = vpack.c.b16 %v4010, %v4010
        %v4027 = vpack.c.b16 %v4011, %v4011
        %v4028 = vpack.c.b16 %v4012, %v4012
        %v4029 = vpack.c.b16 %v4013, %v4013
        %v4030 = vpack.c.b16 %v4014, %v4014
        %v4031 = vpack.c.b16 %v4015, %v4015
        %v4032 = vpack.c.b16 %v4016, %v4016
        %v4033 = vpack.c.b16 %v4017, %v4017
        %v4034 = vpack.c.b16 %v4018, %v4018
        %v4035 = vpack.c.b16 %v4019, %v4019
        %v4036 = vpack.c.b16 %v4020, %v4020
        %v4037 = vpack.c.b16 %v4021, %v4021
        %v4038 = vpack.c.b16 %v4022, %v4022
        %v4039 = vrot.slane %v3815, 5
        %v4040 = vrot.slane %v4023, 5
        %v4041 = vsel %vm2982, %v4039, %v4040
        %v4042 = vrot.slane %v3816, 5
        %v4043 = vrot.slane %v4024, 5
        %v4044 = vsel %vm2982, %v4042, %v4043
        %v4045 = vrot.slane %v3817, 5
        %v4046 = vrot.slane %v4025, 5
        %v4047 = vsel %vm2982, %v4045, %v4046
        %v4048 = vrot.slane %v3818, 5
        %v4049 = vrot.slane %v4026, 5
        %v4050 = vsel %vm2982, %v4048, %v4049
        %v4051 = vrot.slane %v3819, 5
        %v4052 = vrot.slane %v4027, 5
        %v4053 = vsel %vm2982, %v4051, %v4052
        %v4054 = vrot.slane %v3820, 5
        %v4055 = vrot.slane %v4028, 5
        %v4056 = vsel %vm2982, %v4054, %v4055
        %v4057 = vrot.slane %v3821, 5
        %v4058 = vrot.slane %v4029, 5
        %v4059 = vsel %vm2982, %v4057, %v4058
        %v4060 = vrot.slane %v3822, 5
        %v4061 = vrot.slane %v4030, 5
        %v4062 = vsel %vm2982, %v4060, %v4061
        %v4063 = vrot.slane %v3823, 5
        %v4064 = vrot.slane %v4031, 5
        %v4065 = vsel %vm2982, %v4063, %v4064
        %v4066 = vrot.slane %v3824, 5
        %v4067 = vrot.slane %v4032, 5
        %v4068 = vsel %vm2982, %v4066, %v4067
        %v4069 = vrot.slane %v3825, 5
        %v4070 = vrot.slane %v4033, 5
        %v4071 = vsel %vm2982, %v4069, %v4070
        %v4072 = vrot.slane %v3826, 5
        %v4073 = vrot.slane %v4034, 5
        %v4074 = vsel %vm2982, %v4072, %v4073
        %v4075 = vrot.slane %v3827, 5
        %v4076 = vrot.slane %v4035, 5
        %v4077 = vsel %vm2982, %v4075, %v4076
        %v4078 = vrot.slane %v3828, 5
        %v4079 = vrot.slane %v4036, 5
        %v4080 = vsel %vm2982, %v4078, %v4079
        %v4081 = vrot.slane %v3829, 5
        %v4082 = vrot.slane %v4037, 5
        %v4083 = vsel %vm2982, %v4081, %v4082
        %v4084 = vrot.slane %v3830, 5
        %v4085 = vrot.slane %v4038, 5
        %v4086 = vsel %vm2982, %v4084, %v4085
        %4087 = vrot.lane.b32.xlu0 %v4039, 32
        %v4088 = vpop.permute.xlu0 %4087
        %4089 = vrot.lane.b32.xlu0 %v4041, 32
        %v4090 = vpop.permute.xlu0 %4089
        %4091 = vrot.lane.b32.xlu0 %v4042, 32
        %v4092 = vpop.permute.xlu0 %4091
        %4093 = vrot.lane.b32.xlu0 %v4044, 32
        %v4094 = vpop.permute.xlu0 %4093
        %4095 = vrot.lane.b32.xlu0 %v4045, 32
        %v4096 = vpop.permute.xlu0 %4095
        %4097 = vrot.lane.b32.xlu0 %v4047, 32
        %v4098 = vpop.permute.xlu0 %4097
        %4099 = vrot.lane.b32.xlu0 %v4048, 32
        %v4100 = vpop.permute.xlu0 %4099
        %4101 = vrot.lane.b32.xlu0 %v4050, 32
        %v4102 = vpop.permute.xlu0 %4101
        %4103 = vrot.lane.b32.xlu0 %v4051, 32
        %v4104 = vpop.permute.xlu0 %4103
        %4105 = vrot.lane.b32.xlu0 %v4053, 32
        %v4106 = vpop.permute.xlu0 %4105
        %4107 = vrot.lane.b32.xlu0 %v4054, 32
        %v4108 = vpop.permute.xlu0 %4107
        %4109 = vrot.lane.b32.xlu0 %v4056, 32
        %v4110 = vpop.permute.xlu0 %4109
        %4111 = vrot.lane.b32.xlu0 %v4057, 32
        %v4112 = vpop.permute.xlu0 %4111
        %4113 = vrot.lane.b32.xlu0 %v4059, 32
        %v4114 = vpop.permute.xlu0 %4113
        %4115 = vrot.lane.b32.xlu0 %v4060, 32
        %v4116 = vpop.permute.xlu0 %4115
        %4117 = vrot.lane.b32.xlu0 %v4062, 32
        %v4118 = vpop.permute.xlu0 %4117
        %4119 = vrot.lane.b32.xlu0 %v4063, 32
        %v4120 = vpop.permute.xlu0 %4119
        %4121 = vrot.lane.b32.xlu0 %v4065, 32
        %v4122 = vpop.permute.xlu0 %4121
        %4123 = vrot.lane.b32.xlu0 %v4066, 32
        %v4124 = vpop.permute.xlu0 %4123
        %4125 = vrot.lane.b32.xlu0 %v4068, 32
        %v4126 = vpop.permute.xlu0 %4125
        %4127 = vrot.lane.b32.xlu0 %v4069, 32
        %v4128 = vpop.permute.xlu0 %4127
        %4129 = vrot.lane.b32.xlu0 %v4071, 32
        %v4130 = vpop.permute.xlu0 %4129
        %4131 = vrot.lane.b32.xlu0 %v4072, 32
        %v4132 = vpop.permute.xlu0 %4131
        %4133 = vrot.lane.b32.xlu0 %v4074, 32
        %v4134 = vpop.permute.xlu0 %4133
        %4135 = vrot.lane.b32.xlu0 %v4075, 32
        %v4136 = vpop.permute.xlu0 %4135
        %4137 = vrot.lane.b32.xlu0 %v4077, 32
        %v4138 = vpop.permute.xlu0 %4137
        %4139 = vrot.lane.b32.xlu0 %v4078, 32
        %v4140 = vpop.permute.xlu0 %4139
        %4141 = vrot.lane.b32.xlu0 %v4080, 32
        %v4142 = vpop.permute.xlu0 %4141
        %4143 = vrot.lane.b32.xlu0 %v4081, 32
        %v4144 = vpop.permute.xlu0 %4143
        %4145 = vrot.lane.b32.xlu0 %v4083, 32
        %v4146 = vpop.permute.xlu0 %4145
        %4147 = vrot.lane.b32.xlu0 %v4084, 32
        %v4148 = vpop.permute.xlu0 %4147
        %4149 = vrot.lane.b32.xlu0 %v4086, 32
        %v4150 = vpop.permute.xlu0 %4149
        %v4153 = vsel %vm1103, %v2726, %v2903
        %v4155 = vsel %vm1103, %v2727, %v2903
        %v4158 = vsel %vm1103, %v2728, %v2905
        %v4160 = vsel %vm1103, %v2729, %v2905
        %v4163 = vsel %vm1103, %v2730, %v2907
        %v4165 = vsel %vm1103, %v2731, %v2907
        %v4168 = vsel %vm1103, %v2732, %v2909
        %v4170 = vsel %vm1103, %v2733, %v2909
        %v4173 = vsel %vm1103, %v2734, %v2911
        %v4175 = vsel %vm1103, %v2735, %v2911
        %v4178 = vsel %vm1103, %v2736, %v2913
        %v4180 = vsel %vm1103, %v2737, %v2913
        %v4183 = vsel %vm1103, %v2738, %v2915
        %v4185 = vsel %vm1103, %v2739, %v2915
        %v4188 = vsel %vm1103, %v2740, %v2917
        %v4190 = vsel %vm1103, %v2741, %v2917
        %v4193 = vsel %vm1103, %v2742, %v2919
        %v4195 = vsel %vm1103, %v2743, %v2919
        %v4198 = vsel %vm1103, %v2744, %v2921
        %v4200 = vsel %vm1103, %v2745, %v2921
        %v4203 = vsel %vm1103, %v2746, %v2923
        %v4205 = vsel %vm1103, %v2747, %v2923
        %v4208 = vsel %vm1103, %v2748, %v2925
        %v4210 = vsel %vm1103, %v2749, %v2925
        %v4213 = vsel %vm1103, %v2750, %v2927
        %v4215 = vsel %vm1103, %v2751, %v2927
        %v4218 = vsel %vm1103, %v2752, %v2929
        %v4220 = vsel %vm1103, %v2753, %v2929
        %v4223 = vsel %vm1103, %v2754, %v2931
        %v4225 = vsel %vm1103, %v2755, %v2931
        %v4228 = vsel %vm1103, %v2756, %v2933
        %v4230 = vsel %vm1103, %v2757, %v2933
        %v4232 = vsel %vm1136, %v4153, %v3032
        %v4234 = vsel %vm1136, %v4155, %v3034
        %v4236 = vsel %vm1136, %v4158, %v3036
        %v4238 = vsel %vm1136, %v4160, %v3038
        %v4240 = vsel %vm1136, %v4163, %v3040
        %v4242 = vsel %vm1136, %v4165, %v3042
        %v4244 = vsel %vm1136, %v4168, %v3044
        %v4246 = vsel %vm1136, %v4170, %v3046
        %v4248 = vsel %vm1136, %v4173, %v3048
        %v4250 = vsel %vm1136, %v4175, %v3050
        %v4252 = vsel %vm1136, %v4178, %v3052
        %v4254 = vsel %vm1136, %v4180, %v3054
        %v4256 = vsel %vm1136, %v4183, %v3056
        %v4258 = vsel %vm1136, %v4185, %v3058
        %v4260 = vsel %vm1136, %v4188, %v3060
        %v4262 = vsel %vm1136, %v4190, %v3062
        %v4264 = vsel %vm1136, %v4193, %v3064
        %v4266 = vsel %vm1136, %v4195, %v3066
        %v4268 = vsel %vm1136, %v4198, %v3068
        %v4270 = vsel %vm1136, %v4200, %v3070
        %v4272 = vsel %vm1136, %v4203, %v3072
        %v4274 = vsel %vm1136, %v4205, %v3074
        %v4276 = vsel %vm1136, %v4208, %v3076
        %v4278 = vsel %vm1136, %v4210, %v3078
        %v4280 = vsel %vm1136, %v4213, %v3080
        %v4282 = vsel %vm1136, %v4215, %v3082
        %v4284 = vsel %vm1136, %v4218, %v3084
        %v4286 = vsel %vm1136, %v4220, %v3086
        %v4288 = vsel %vm1136, %v4223, %v3088
        %v4290 = vsel %vm1136, %v4225, %v3090
        %v4292 = vsel %vm1136, %v4228, %v3092
        %v4294 = vsel %vm1136, %v4230, %v3094
        %v4296 = vsel %vm1169, %v4232, %v3224
        %v4298 = vsel %vm1169, %v4234, %v3226
        %v4300 = vsel %vm1169, %v4236, %v3228
        %v4302 = vsel %vm1169, %v4238, %v3230
        %v4304 = vsel %vm1169, %v4240, %v3232
        %v4306 = vsel %vm1169, %v4242, %v3234
        %v4308 = vsel %vm1169, %v4244, %v3236
        %v4310 = vsel %vm1169, %v4246, %v3238
        %v4312 = vsel %vm1169, %v4248, %v3240
        %v4314 = vsel %vm1169, %v4250, %v3242
        %v4316 = vsel %vm1169, %v4252, %v3244
        %v4318 = vsel %vm1169, %v4254, %v3246
        %v4320 = vsel %vm1169, %v4256, %v3248
        %v4322 = vsel %vm1169, %v4258, %v3250
        %v4324 = vsel %vm1169, %v4260, %v3252
        %v4326 = vsel %vm1169, %v4262, %v3254
        %v4328 = vsel %vm1169, %v4264, %v3256
        %v4330 = vsel %vm1169, %v4266, %v3258
        %v4332 = vsel %vm1169, %v4268, %v3260
        %v4334 = vsel %vm1169, %v4270, %v3262
        %v4336 = vsel %vm1169, %v4272, %v3264
        %v4338 = vsel %vm1169, %v4274, %v3266
        %v4340 = vsel %vm1169, %v4276, %v3268
        %v4342 = vsel %vm1169, %v4278, %v3270
        %v4344 = vsel %vm1169, %v4280, %v3272
        %v4346 = vsel %vm1169, %v4282, %v3274
        %v4348 = vsel %vm1169, %v4284, %v3276
        %v4350 = vsel %vm1169, %v4286, %v3278
        %v4352 = vsel %vm1169, %v4288, %v3280
        %v4354 = vsel %vm1169, %v4290, %v3282
        %v4356 = vsel %vm1169, %v4292, %v3284
        %v4358 = vsel %vm1169, %v4294, %v3286
        %v4360 = vsel %vm1202, %v4296, %v3432
        %v4361 = vsel %vm1202, %v4298, %v3432
        %v4363 = vsel %vm1202, %v4300, %v3434
        %v4364 = vsel %vm1202, %v4302, %v3434
        %v4366 = vsel %vm1202, %v4304, %v3436
        %v4367 = vsel %vm1202, %v4306, %v3436
        %v4369 = vsel %vm1202, %v4308, %v3438
        %v4370 = vsel %vm1202, %v4310, %v3438
        %v4372 = vsel %vm1202, %v4312, %v3440
        %v4373 = vsel %vm1202, %v4314, %v3440
        %v4375 = vsel %vm1202, %v4316, %v3442
        %v4376 = vsel %vm1202, %v4318, %v3442
        %v4378 = vsel %vm1202, %v4320, %v3444
        %v4379 = vsel %vm1202, %v4322, %v3444
        %v4381 = vsel %vm1202, %v4324, %v3446
        %v4382 = vsel %vm1202, %v4326, %v3446
        %v4384 = vsel %vm1202, %v4328, %v3448
        %v4385 = vsel %vm1202, %v4330, %v3448
        %v4387 = vsel %vm1202, %v4332, %v3450
        %v4388 = vsel %vm1202, %v4334, %v3450
        %v4390 = vsel %vm1202, %v4336, %v3452
        %v4391 = vsel %vm1202, %v4338, %v3452
        %v4393 = vsel %vm1202, %v4340, %v3454
        %v4394 = vsel %vm1202, %v4342, %v3454
        %v4396 = vsel %vm1202, %v4344, %v3456
        %v4397 = vsel %vm1202, %v4346, %v3456
        %v4399 = vsel %vm1202, %v4348, %v3458
        %v4400 = vsel %vm1202, %v4350, %v3458
        %v4402 = vsel %vm1202, %v4352, %v3460
        %v4403 = vsel %vm1202, %v4354, %v3460
        %v4405 = vsel %vm1202, %v4356, %v3462
        %v4406 = vsel %vm1202, %v4358, %v3462
        %v4408 = vsel %vm1235, %v4360, %v3560
        %v4410 = vsel %vm1235, %v4361, %v3562
        %v4412 = vsel %vm1235, %v4363, %v3564
        %v4414 = vsel %vm1235, %v4364, %v3566
        %v4416 = vsel %vm1235, %v4366, %v3568
        %v4418 = vsel %vm1235, %v4367, %v3570
        %v4420 = vsel %vm1235, %v4369, %v3572
        %v4422 = vsel %vm1235, %v4370, %v3574
        %v4424 = vsel %vm1235, %v4372, %v3576
        %v4426 = vsel %vm1235, %v4373, %v3578
        %v4428 = vsel %vm1235, %v4375, %v3580
        %v4430 = vsel %vm1235, %v4376, %v3582
        %v4432 = vsel %vm1235, %v4378, %v3584
        %v4434 = vsel %vm1235, %v4379, %v3586
        %v4436 = vsel %vm1235, %v4381, %v3588
        %v4438 = vsel %vm1235, %v4382, %v3590
        %v4440 = vsel %vm1235, %v4384, %v3592
        %v4442 = vsel %vm1235, %v4385, %v3594
        %v4444 = vsel %vm1235, %v4387, %v3596
        %v4446 = vsel %vm1235, %v4388, %v3598
        %v4448 = vsel %vm1235, %v4390, %v3600
        %v4450 = vsel %vm1235, %v4391, %v3602
        %v4452 = vsel %vm1235, %v4393, %v3604
        %v4454 = vsel %vm1235, %v4394, %v3606
        %v4456 = vsel %vm1235, %v4396, %v3608
        %v4458 = vsel %vm1235, %v4397, %v3610
        %v4460 = vsel %vm1235, %v4399, %v3612
        %v4462 = vsel %vm1235, %v4400, %v3614
        %v4464 = vsel %vm1235, %v4402, %v3616
        %v4466 = vsel %vm1235, %v4403, %v3618
        %v4468 = vsel %vm1235, %v4405, %v3620
        %v4470 = vsel %vm1235, %v4406, %v3622
        %v4472 = vsel %vm1268, %v4408, %v3752
        %v4474 = vsel %vm1268, %v4410, %v3754
        %v4476 = vsel %vm1268, %v4412, %v3756
        %v4478 = vsel %vm1268, %v4414, %v3758
        %v4480 = vsel %vm1268, %v4416, %v3760
        %v4482 = vsel %vm1268, %v4418, %v3762
        %v4484 = vsel %vm1268, %v4420, %v3764
        %v4486 = vsel %vm1268, %v4422, %v3766
        %v4488 = vsel %vm1268, %v4424, %v3768
        %v4490 = vsel %vm1268, %v4426, %v3770
        %v4492 = vsel %vm1268, %v4428, %v3772
        %v4494 = vsel %vm1268, %v4430, %v3774
        %v4496 = vsel %vm1268, %v4432, %v3776
        %v4498 = vsel %vm1268, %v4434, %v3778
        %v4500 = vsel %vm1268, %v4436, %v3780
        %v4502 = vsel %vm1268, %v4438, %v3782
        %v4504 = vsel %vm1268, %v4440, %v3784
        %v4506 = vsel %vm1268, %v4442, %v3786
        %v4508 = vsel %vm1268, %v4444, %v3788
        %v4510 = vsel %vm1268, %v4446, %v3790
        %v4512 = vsel %vm1268, %v4448, %v3792
        %v4514 = vsel %vm1268, %v4450, %v3794
        %v4516 = vsel %vm1268, %v4452, %v3796
        %v4518 = vsel %vm1268, %v4454, %v3798
        %v4520 = vsel %vm1268, %v4456, %v3800
        %v4522 = vsel %vm1268, %v4458, %v3802
        %v4524 = vsel %vm1268, %v4460, %v3804
        %v4526 = vsel %vm1268, %v4462, %v3806
        %v4528 = vsel %vm1268, %v4464, %v3808
        %v4530 = vsel %vm1268, %v4466, %v3810
        %v4532 = vsel %vm1268, %v4468, %v3812
        %v4534 = vsel %vm1268, %v4470, %v3814
        %v4536 = vsel %vm1301, %v4472, %v3960
        %v4537 = vsel %vm1301, %v4474, %v3960
        %v4539 = vsel %vm1301, %v4476, %v3962
        %v4540 = vsel %vm1301, %v4478, %v3962
        %v4542 = vsel %vm1301, %v4480, %v3964
        %v4543 = vsel %vm1301, %v4482, %v3964
        %v4545 = vsel %vm1301, %v4484, %v3966
        %v4546 = vsel %vm1301, %v4486, %v3966
        %v4548 = vsel %vm1301, %v4488, %v3968
        %v4549 = vsel %vm1301, %v4490, %v3968
        %v4551 = vsel %vm1301, %v4492, %v3970
        %v4552 = vsel %vm1301, %v4494, %v3970
        %v4554 = vsel %vm1301, %v4496, %v3972
        %v4555 = vsel %vm1301, %v4498, %v3972
        %v4557 = vsel %vm1301, %v4500, %v3974
        %v4558 = vsel %vm1301, %v4502, %v3974
        %v4560 = vsel %vm1301, %v4504, %v3976
        %v4561 = vsel %vm1301, %v4506, %v3976
        %v4563 = vsel %vm1301, %v4508, %v3978
        %v4564 = vsel %vm1301, %v4510, %v3978
        %v4566 = vsel %vm1301, %v4512, %v3980
        %v4567 = vsel %vm1301, %v4514, %v3980
        %v4569 = vsel %vm1301, %v4516, %v3982
        %v4570 = vsel %vm1301, %v4518, %v3982
        %v4572 = vsel %vm1301, %v4520, %v3984
        %v4573 = vsel %vm1301, %v4522, %v3984
        %v4575 = vsel %vm1301, %v4524, %v3986
        %v4576 = vsel %vm1301, %v4526, %v3986
        %v4578 = vsel %vm1301, %v4528, %v3988
        %v4579 = vsel %vm1301, %v4530, %v3988
        %v4581 = vsel %vm1301, %v4532, %v3990
        %v4582 = vsel %vm1301, %v4534, %v3990
        %v4584 = vsel %vm1334, %v4536, %v4088
        %v4586 = vsel %vm1334, %v4537, %v4090
        %v4588 = vsel %vm1334, %v4539, %v4092
        %v4590 = vsel %vm1334, %v4540, %v4094
        %v4592 = vsel %vm1334, %v4542, %v4096
        %v4594 = vsel %vm1334, %v4543, %v4098
        %v4596 = vsel %vm1334, %v4545, %v4100
        %v4598 = vsel %vm1334, %v4546, %v4102
        %v4600 = vsel %vm1334, %v4548, %v4104
        %v4602 = vsel %vm1334, %v4549, %v4106
        %v4604 = vsel %vm1334, %v4551, %v4108
        %v4606 = vsel %vm1334, %v4552, %v4110
        %v4608 = vsel %vm1334, %v4554, %v4112
        %v4610 = vsel %vm1334, %v4555, %v4114
        %v4612 = vsel %vm1334, %v4557, %v4116
        %v4614 = vsel %vm1334, %v4558, %v4118
        %v4616 = vsel %vm1334, %v4560, %v4120
        %v4618 = vsel %vm1334, %v4561, %v4122
        %v4620 = vsel %vm1334, %v4563, %v4124
        %v4622 = vsel %vm1334, %v4564, %v4126
        %v4624 = vsel %vm1334, %v4566, %v4128
        %v4626 = vsel %vm1334, %v4567, %v4130
        %v4628 = vsel %vm1334, %v4569, %v4132
        %v4630 = vsel %vm1334, %v4570, %v4134
        %v4632 = vsel %vm1334, %v4572, %v4136
        %v4634 = vsel %vm1334, %v4573, %v4138
        %v4636 = vsel %vm1334, %v4575, %v4140
        %v4638 = vsel %vm1334, %v4576, %v4142
        %v4640 = vsel %vm1334, %v4578, %v4144
        %v4642 = vsel %vm1334, %v4579, %v4146
        %v4644 = vsel %vm1334, %v4581, %v4148
        %v4646 = vsel %vm1334, %v4582, %v4150
        %vm4647 = vsmask.f32 4352
        %v4648 = vshrl.u32 %v4584, 16
        %v4650 = vrot.slane %v4648, 3
        %v4651 = vshll.u32 %v4584, 16
        %v4653 = vrot.slane %v4651, 4
        %v4654 = vor.u32 %v4650, %v4653
        %v4655 = vshrl.u32 %v4586, 16
        %v4657 = vrot.slane %v4655, 3
        %v4658 = vshll.u32 %v4586, 16
        %v4660 = vrot.slane %v4658, 4
        %v4661 = vor.u32 %v4657, %v4660
        %v4662 = vsel %vm4647, %v4654, %v4661
        %v4663 = vshrl.u32 %v4588, 16
        %v4665 = vrot.slane %v4663, 3
        %v4666 = vshll.u32 %v4588, 16
        %v4668 = vrot.slane %v4666, 4
        %v4669 = vor.u32 %v4665, %v4668
        %v4670 = vshrl.u32 %v4590, 16
        %v4672 = vrot.slane %v4670, 3
        %v4673 = vshll.u32 %v4590, 16
        %v4675 = vrot.slane %v4673, 4
        %v4676 = vor.u32 %v4672, %v4675
        %v4677 = vsel %vm4647, %v4669, %v4676
        %v4678 = vshrl.u32 %v4592, 16
        %v4680 = vrot.slane %v4678, 3
        %v4681 = vshll.u32 %v4592, 16
        %v4683 = vrot.slane %v4681, 4
        %v4684 = vor.u32 %v4680, %v4683
        %v4685 = vshrl.u32 %v4594, 16
        %v4687 = vrot.slane %v4685, 3
        %v4688 = vshll.u32 %v4594, 16
        %v4690 = vrot.slane %v4688, 4
        %v4691 = vor.u32 %v4687, %v4690
        %v4692 = vsel %vm4647, %v4684, %v4691
        %v4693 = vshrl.u32 %v4596, 16
        %v4695 = vrot.slane %v4693, 3
        %v4696 = vshll.u32 %v4596, 16
        %v4698 = vrot.slane %v4696, 4
        %v4699 = vor.u32 %v4695, %v4698
        %v4700 = vshrl.u32 %v4598, 16
        %v4702 = vrot.slane %v4700, 3
        %v4703 = vshll.u32 %v4598, 16
        %v4705 = vrot.slane %v4703, 4
        %v4706 = vor.u32 %v4702, %v4705
        %v4707 = vsel %vm4647, %v4699, %v4706
        %v4708 = vshrl.u32 %v4600, 16
        %v4710 = vrot.slane %v4708, 3
        %v4711 = vshll.u32 %v4600, 16
        %v4713 = vrot.slane %v4711, 4
        %v4714 = vor.u32 %v4710, %v4713
        %v4715 = vshrl.u32 %v4602, 16
        %v4717 = vrot.slane %v4715, 3
        %v4718 = vshll.u32 %v4602, 16
        %v4720 = vrot.slane %v4718, 4
        %v4721 = vor.u32 %v4717, %v4720
        %v4722 = vsel %vm4647, %v4714, %v4721
        %v4723 = vshrl.u32 %v4604, 16
        %v4725 = vrot.slane %v4723, 3
        %v4726 = vshll.u32 %v4604, 16
        %v4728 = vrot.slane %v4726, 4
        %v4729 = vor.u32 %v4725, %v4728
        %v4730 = vshrl.u32 %v4606, 16
        %v4732 = vrot.slane %v4730, 3
        %v4733 = vshll.u32 %v4606, 16
        %v4735 = vrot.slane %v4733, 4
        %v4736 = vor.u32 %v4732, %v4735
        %v4737 = vsel %vm4647, %v4729, %v4736
        %v4738 = vshrl.u32 %v4608, 16
        %v4740 = vrot.slane %v4738, 3
        %v4741 = vshll.u32 %v4608, 16
        %v4743 = vrot.slane %v4741, 4
        %v4744 = vor.u32 %v4740, %v4743
        %v4745 = vshrl.u32 %v4610, 16
        %v4747 = vrot.slane %v4745, 3
        %v4748 = vshll.u32 %v4610, 16
        %v4750 = vrot.slane %v4748, 4
        %v4751 = vor.u32 %v4747, %v4750
        %v4752 = vsel %vm4647, %v4744, %v4751
        %v4753 = vshrl.u32 %v4612, 16
        %v4755 = vrot.slane %v4753, 3
        %v4756 = vshll.u32 %v4612, 16
        %v4758 = vrot.slane %v4756, 4
        %v4759 = vor.u32 %v4755, %v4758
        %v4760 = vshrl.u32 %v4614, 16
        %v4762 = vrot.slane %v4760, 3
        %v4763 = vshll.u32 %v4614, 16
        %v4765 = vrot.slane %v4763, 4
        %v4766 = vor.u32 %v4762, %v4765
        %v4767 = vsel %vm4647, %v4759, %v4766
        %v4768 = vshrl.u32 %v4616, 16
        %v4770 = vrot.slane %v4768, 3
        %v4771 = vshll.u32 %v4616, 16
        %v4773 = vrot.slane %v4771, 4
        %v4774 = vor.u32 %v4770, %v4773
        %v4775 = vshrl.u32 %v4618, 16
        %v4777 = vrot.slane %v4775, 3
        %v4778 = vshll.u32 %v4618, 16
        %v4780 = vrot.slane %v4778, 4
        %v4781 = vor.u32 %v4777, %v4780
        %v4782 = vsel %vm4647, %v4774, %v4781
        %v4783 = vshrl.u32 %v4620, 16
        %v4785 = vrot.slane %v4783, 3
        %v4786 = vshll.u32 %v4620, 16
        %v4788 = vrot.slane %v4786, 4
        %v4789 = vor.u32 %v4785, %v4788
        %v4790 = vshrl.u32 %v4622, 16
        %v4792 = vrot.slane %v4790, 3
        %v4793 = vshll.u32 %v4622, 16
        %v4795 = vrot.slane %v4793, 4
        %v4796 = vor.u32 %v4792, %v4795
        %v4797 = vsel %vm4647, %v4789, %v4796
        %v4798 = vshrl.u32 %v4624, 16
        %v4800 = vrot.slane %v4798, 3
        %v4801 = vshll.u32 %v4624, 16
        %v4803 = vrot.slane %v4801, 4
        %v4804 = vor.u32 %v4800, %v4803
        %v4805 = vshrl.u32 %v4626, 16
        %v4807 = vrot.slane %v4805, 3
        %v4808 = vshll.u32 %v4626, 16
        %v4810 = vrot.slane %v4808, 4
        %v4811 = vor.u32 %v4807, %v4810
        %v4812 = vsel %vm4647, %v4804, %v4811
        %v4813 = vshrl.u32 %v4628, 16
        %v4815 = vrot.slane %v4813, 3
        %v4816 = vshll.u32 %v4628, 16
        %v4818 = vrot.slane %v4816, 4
        %v4819 = vor.u32 %v4815, %v4818
        %v4820 = vshrl.u32 %v4630, 16
        %v4822 = vrot.slane %v4820, 3
        %v4823 = vshll.u32 %v4630, 16
        %v4825 = vrot.slane %v4823, 4
        %v4826 = vor.u32 %v4822, %v4825
        %v4827 = vsel %vm4647, %v4819, %v4826
        %v4828 = vshrl.u32 %v4632, 16
        %v4830 = vrot.slane %v4828, 3
        %v4831 = vshll.u32 %v4632, 16
        %v4833 = vrot.slane %v4831, 4
        %v4834 = vor.u32 %v4830, %v4833
        %v4835 = vshrl.u32 %v4634, 16
        %v4837 = vrot.slane %v4835, 3
        %v4838 = vshll.u32 %v4634, 16
        %v4840 = vrot.slane %v4838, 4
        %v4841 = vor.u32 %v4837, %v4840
        %v4842 = vsel %vm4647, %v4834, %v4841
        %v4843 = vshrl.u32 %v4636, 16
        %v4845 = vrot.slane %v4843, 3
        %v4846 = vshll.u32 %v4636, 16
        %v4848 = vrot.slane %v4846, 4
        %v4849 = vor.u32 %v4845, %v4848
        %v4850 = vshrl.u32 %v4638, 16
        %v4852 = vrot.slane %v4850, 3
        %v4853 = vshll.u32 %v4638, 16
        %v4855 = vrot.slane %v4853, 4
        %v4856 = vor.u32 %v4852, %v4855
        %v4857 = vsel %vm4647, %v4849, %v4856
        %v4858 = vshrl.u32 %v4640, 16
        %v4860 = vrot.slane %v4858, 3
        %v4861 = vshll.u32 %v4640, 16
        %v4863 = vrot.slane %v4861, 4
        %v4864 = vor.u32 %v4860, %v4863
        %v4865 = vshrl.u32 %v4642, 16
        %v4867 = vrot.slane %v4865, 3
        %v4868 = vshll.u32 %v4642, 16
        %v4870 = vrot.slane %v4868, 4
        %v4871 = vor.u32 %v4867, %v4870
        %v4872 = vsel %vm4647, %v4864, %v4871
        %v4873 = vshrl.u32 %v4644, 16
        %v4875 = vrot.slane %v4873, 3
        %v4876 = vshll.u32 %v4644, 16
        %v4878 = vrot.slane %v4876, 4
        %v4879 = vor.u32 %v4875, %v4878
        %v4880 = vshrl.u32 %v4646, 16
        %v4882 = vrot.slane %v4880, 3
        %v4883 = vshll.u32 %v4646, 16
        %v4885 = vrot.slane %v4883, 4
        %v4886 = vor.u32 %v4882, %v4885
        %v4887 = vsel %vm4647, %v4879, %v4886
        %v4888 = vld [vmem:[#allocation11] sm:$0xf]
        %v4889 = vld [vmem:[#allocation11 + $0x4] sm:$0xf]
        %v4890 = vld [vmem:[#allocation11 + $0x8] sm:$0xf]
        %v4891 = vld [vmem:[#allocation11 + $0xc] sm:$0xf]
        %v4892 = vld [vmem:[#allocation11 + $0x10] sm:$0x3]
        %v4898 = vunpack.c.l.b16 %v4888
        %v4899 = vunpack.c.l.b16 %v4889
        %v4900 = vunpack.c.l.b16 %v4890
        %v4901 = vunpack.c.l.b16 %v4891
        %v4902 = vunpack.c.l.b16 %v4892
        %v4903 = vpack.c.b16 %v4899, %v4898
        %v4904 = vpack.c.b16 %v4901, %v4900
        %v4905 = vpack.c.b16 %v4902, %v4902
        %v4909 = vsel %vm1387, %v4662, 0
        %v4912 = vsel %vm1387, %v4677, 0
        %v4915 = vsel %vm1387, %v4692, 0
        %v4918 = vsel %vm1387, %v4707, 0
        %v4921 = vsel %vm1387, %v4722, 0
        %v4924 = vsel %vm1387, %v4737, 0
        %v4927 = vsel %vm1387, %v4752, 0
        %v4930 = vsel %vm1387, %v4767, 0
        %v4933 = vsel %vm1387, %v4782, 0
        %v4936 = vsel %vm1387, %v4797, 0
        %v4939 = vsel %vm1387, %v4812, 0
        %v4942 = vsel %vm1387, %v4827, 0
        %v4945 = vsel %vm1387, %v4842, 0
        %v4948 = vsel %vm1387, %v4857, 0
        %v4951 = vsel %vm1387, %v4872, 0
        %v4954 = vsel %vm1387, %v4887, 0
        %v4957 = vsel %vm1420, %v4905, 0
        %4959 = vmatprep.subr.bf16.mxu0 0
        %4960 = vmatpush1.bf16.msra.mxu0 %v4903
        %4961 = vmatprep.subr.bf16.mxu0 0
        %4962 = vmatpush1.bf16.msra.mxu0 %v4904
        %4963 = vmatprep.subr.bf16.mxu0 0
        %4964 = vmatpush1.bf16.msra.mxu0 %v4957
        %4965 = vmatprep.subr.bf16.mxu0 0
        %4966 = vmatpush1.bf16.msra.mxu0 0
        %4967 = vmatprep.subr.bf16.mxu0 0
        %4968 = vmatpush1.bf16.msra.mxu0 0
        %4969 = vmatprep.subr.bf16.mxu0 0
        %4970 = vmatpush1.bf16.msra.mxu0 0
        %4971 = vmatprep.subr.bf16.mxu0 0
        %4972 = vmatpush1.bf16.msra.mxu0 0
        %4973 = vmatprep.subr.bf16.mxu0 0
        %4974 = vmatpush1.bf16.msra.mxu0 0
        %4975 = vmatprep.subr.bf16.mxu0 0
        %4976 = vmatpush1.bf16.msra.mxu0 0
        %4977 = vmatprep.subr.bf16.mxu0 0
        %4978 = vmatpush1.bf16.msra.mxu0 0
        %4979 = vmatprep.subr.bf16.mxu0 0
        %4980 = vmatpush1.bf16.msra.mxu0 0
        %4981 = vmatprep.subr.bf16.mxu0 0
        %4982 = vmatpush1.bf16.msra.mxu0 0
        %4983 = vmatprep.subr.bf16.mxu0 0
        %4984 = vmatpush1.bf16.msra.mxu0 0
        %4985 = vmatprep.subr.bf16.mxu0 0
        %4986 = vmatpush1.bf16.msra.mxu0 0
        %4987 = vmatprep.subr.bf16.mxu0 0
        %4988 = vmatpush1.bf16.msra.mxu0 0
        %4989 = vmatprep.subr.bf16.mxu0 0
        %4990 = vmatpush1.bf16.msra.mxu0 0
        %4991 = vmatprep.mubr.bf16.mxu0 0
        %4992 = vmatmul.mubr.bf16.gmra.mrb[0].mxu0 %v4909
        %v4993 = vpop.f32.mrb[0].mxu0
        %v4994 = vadd.f32 0.0, %v4993
        %v4995 = vpop.f32.mrb[0].mxu0
        %v4996 = vpop.f32.mrb[0].mxu0
        %v4997 = vadd.f32 0.0, %v4996
        %v4998 = vpop.f32.mrb[0].mxu0
        %4999 = vmatprep.mubr.bf16.mxu0 0
        %5000 = vmatmul.mubr.bf16.gmra.mrb[0].mxu0 %v4912
        %v5001 = vpop.f32.mrb[0].mxu0
        %v5002 = vadd.f32 0.0, %v5001
        %v5003 = vpop.f32.mrb[0].mxu0
        %v5004 = vpop.f32.mrb[0].mxu0
        %v5005 = vadd.f32 0.0, %v5004
        %v5006 = vpop.f32.mrb[0].mxu0
        %5007 = vmatprep.mubr.bf16.mxu0 0
        %5008 = vmatmul.mubr.bf16.gmra.mrb[0].mxu0 %v4915
        %v5009 = vpop.f32.mrb[0].mxu0
        %v5010 = vadd.f32 0.0, %v5009
        %v5011 = vpop.f32.mrb[0].mxu0
        %v5012 = vpop.f32.mrb[0].mxu0
        %v5013 = vadd.f32 0.0, %v5012
        %v5014 = vpop.f32.mrb[0].mxu0
        %5015 = vmatprep.mubr.bf16.mxu0 0
        %5016 = vmatmul.mubr.bf16.gmra.mrb[0].mxu0 %v4918
        %v5017 = vpop.f32.mrb[0].mxu0
        %v5018 = vadd.f32 0.0, %v5017
        %v5019 = vpop.f32.mrb[0].mxu0
        %v5020 = vpop.f32.mrb[0].mxu0
        %v5021 = vadd.f32 0.0, %v5020
        %v5022 = vpop.f32.mrb[0].mxu0
        %5023 = vmatprep.mubr.bf16.mxu0 0
        %5024 = vmatmul.mubr.bf16.gmra.mrb[0].mxu0 %v4921
        %v5025 = vpop.f32.mrb[0].mxu0
        %v5026 = vadd.f32 0.0, %v5025
        %v5027 = vpop.f32.mrb[0].mxu0
        %v5028 = vpop.f32.mrb[0].mxu0
        %v5029 = vadd.f32 0.0, %v5028
        %v5030 = vpop.f32.mrb[0].mxu0
        %5031 = vmatprep.mubr.bf16.mxu0 0
        %5032 = vmatmul.mubr.bf16.gmra.mrb[0].mxu0 %v4924
        %v5033 = vpop.f32.mrb[0].mxu0
        %v5034 = vadd.f32 0.0, %v5033
        %v5035 = vpop.f32.mrb[0].mxu0
        %v5036 = vpop.f32.mrb[0].mxu0
        %v5037 = vadd.f32 0.0, %v5036
        %v5038 = vpop.f32.mrb[0].mxu0
        %5039 = vmatprep.mubr.bf16.mxu0 0
        %5040 = vmatmul.mubr.bf16.gmra.mrb[0].mxu0 %v4927
        %v5041 = vpop.f32.mrb[0].mxu0
        %v5042 = vadd.f32 0.0, %v5041
        %v5043 = vpop.f32.mrb[0].mxu0
        %v5044 = vpop.f32.mrb[0].mxu0
        %v5045 = vadd.f32 0.0, %v5044
        %v5046 = vpop.f32.mrb[0].mxu0
        %5047 = vmatprep.mubr.bf16.mxu0 0
        %5048 = vmatmul.mubr.bf16.gmra.mrb[0].mxu0 %v4930
        %v5049 = vpop.f32.mrb[0].mxu0
        %v5050 = vadd.f32 0.0, %v5049
        %v5051 = vpop.f32.mrb[0].mxu0
        %v5052 = vpop.f32.mrb[0].mxu0
        %v5053 = vadd.f32 0.0, %v5052
        %v5054 = vpop.f32.mrb[0].mxu0
        %5055 = vmatprep.mubr.bf16.mxu0 0
        %5056 = vmatmul.mubr.bf16.gmra.mrb[0].mxu0 %v4933
        %v5057 = vpop.f32.mrb[0].mxu0
        %v5058 = vadd.f32 0.0, %v5057
        %v5059 = vpop.f32.mrb[0].mxu0
        %v5060 = vpop.f32.mrb[0].mxu0
        %v5061 = vadd.f32 0.0, %v5060
        %v5062 = vpop.f32.mrb[0].mxu0
        %5063 = vmatprep.mubr.bf16.mxu0 0
        %5064 = vmatmul.mubr.bf16.gmra.mrb[0].mxu0 %v4936
        %v5065 = vpop.f32.mrb[0].mxu0
        %v5066 = vadd.f32 0.0, %v5065
        %v5067 = vpop.f32.mrb[0].mxu0
        %v5068 = vpop.f32.mrb[0].mxu0
        %v5069 = vadd.f32 0.0, %v5068
        %v5070 = vpop.f32.mrb[0].mxu0
        %5071 = vmatprep.mubr.bf16.mxu0 0
        %5072 = vmatmul.mubr.bf16.gmra.mrb[0].mxu0 %v4939
        %v5073 = vpop.f32.mrb[0].mxu0
        %v5074 = vadd.f32 0.0, %v5073
        %v5075 = vpop.f32.mrb[0].mxu0
        %v5076 = vpop.f32.mrb[0].mxu0
        %v5077 = vadd.f32 0.0, %v5076
        %v5078 = vpop.f32.mrb[0].mxu0
        %5079 = vmatprep.mubr.bf16.mxu0 0
        %5080 = vmatmul.mubr.bf16.gmra.mrb[0].mxu0 %v4942
        %v5081 = vpop.f32.mrb[0].mxu0
        %v5082 = vadd.f32 0.0, %v5081
        %v5083 = vpop.f32.mrb[0].mxu0
        %v5084 = vpop.f32.mrb[0].mxu0
        %v5085 = vadd.f32 0.0, %v5084
        %v5086 = vpop.f32.mrb[0].mxu0
        %5087 = vmatprep.mubr.bf16.mxu0 0
        %5088 = vmatmul.mubr.bf16.gmra.mrb[0].mxu0 %v4945
        %v5089 = vpop.f32.mrb[0].mxu0
        %v5090 = vadd.f32 0.0, %v5089
        %v5091 = vpop.f32.mrb[0].mxu0
        %v5092 = vpop.f32.mrb[0].mxu0
        %v5093 = vadd.f32 0.0, %v5092
        %v5094 = vpop.f32.mrb[0].mxu0
        %5095 = vmatprep.mubr.bf16.mxu0 0
        %5096 = vmatmul.mubr.bf16.gmra.mrb[0].mxu0 %v4948
        %v5097 = vpop.f32.mrb[0].mxu0
        %v5098 = vadd.f32 0.0, %v5097
        %v5099 = vpop.f32.mrb[0].mxu0
        %v5100 = vpop.f32.mrb[0].mxu0
        %v5101 = vadd.f32 0.0, %v5100
        %v5102 = vpop.f32.mrb[0].mxu0
        %5103 = vmatprep.mubr.bf16.mxu0 0
        %5104 = vmatmul.mubr.bf16.gmra.mrb[0].mxu0 %v4951
        %v5105 = vpop.f32.mrb[0].mxu0
        %v5106 = vadd.f32 0.0, %v5105
        %v5107 = vpop.f32.mrb[0].mxu0
        %v5108 = vpop.f32.mrb[0].mxu0
        %v5109 = vadd.f32 0.0, %v5108
        %v5110 = vpop.f32.mrb[0].mxu0
        %5111 = vmatprep.mubr.bf16.mxu0 0
        %5112 = vmatmul.mubr.bf16.gmra.mrb[0].mxu0 %v4954
        %v5113 = vpop.f32.mrb[0].mxu0
        %v5114 = vadd.f32 0.0, %v5113
        %v5115 = vpop.f32.mrb[0].mxu0
        %v5116 = vpop.f32.mrb[0].mxu0
        %v5117 = vadd.f32 0.0, %v5116
        %v5118 = vpop.f32.mrb[0].mxu0
        %5119 = vdwg.mxu0
        %v5120 = vld [vmem:[#allocation12] sm:$0x1]
        %v5122 = vlaneseq
        %v5123 = vshrl.u32 %v5122, 7
        %v5124 = vsub.s32 0, %v5123
        %v5125 = vrot.slane %v5120, %v5124
        %v5127 = vmul.f32 %v4994, %v5125
        %v5128 = vmul.f32 %v4997, %v5125
        %v5129 = vmul.f32 %v5002, %v5125
        %v5130 = vmul.f32 %v5005, %v5125
        %v5131 = vmul.f32 %v5010, %v5125
        %v5132 = vmul.f32 %v5013, %v5125
        %v5133 = vmul.f32 %v5018, %v5125
        %v5134 = vmul.f32 %v5021, %v5125
        %v5135 = vmul.f32 %v5026, %v5125
        %v5136 = vmul.f32 %v5029, %v5125
        %v5137 = vmul.f32 %v5034, %v5125
        %v5138 = vmul.f32 %v5037, %v5125
        %v5139 = vmul.f32 %v5042, %v5125
        %v5140 = vmul.f32 %v5045, %v5125
        %v5141 = vmul.f32 %v5050, %v5125
        %v5142 = vmul.f32 %v5053, %v5125
        %v5143 = vmul.f32 %v5058, %v5125
        %v5144 = vmul.f32 %v5061, %v5125
        %v5145 = vmul.f32 %v5066, %v5125
        %v5146 = vmul.f32 %v5069, %v5125
        %v5147 = vmul.f32 %v5074, %v5125
        %v5148 = vmul.f32 %v5077, %v5125
        %v5149 = vmul.f32 %v5082, %v5125
        %v5150 = vmul.f32 %v5085, %v5125
        %v5151 = vmul.f32 %v5090, %v5125
        %v5152 = vmul.f32 %v5093, %v5125
        %v5153 = vmul.f32 %v5098, %v5125
        %v5154 = vmul.f32 %v5101, %v5125
        %v5155 = vmul.f32 %v5106, %v5125
        %v5156 = vmul.f32 %v5109, %v5125
        %v5157 = vmul.f32 %v5114, %v5125
        %v5158 = vmul.f32 %v5117, %v5125
        %v5159 = vld [vmem:[#allocation14] sm:$0x1]
        %v5161 = vlaneseq
        %v5162 = vshrl.u32 %v5161, 7
        %v5163 = vsub.s32 0, %v5162
        %v5164 = vrot.slane %v5159, %v5163
        %v5166 = vadd.f32 %v5127, %v5164
        %v5167 = vadd.f32 %v5128, %v5164
        %v5168 = vadd.f32 %v5129, %v5164
        %v5169 = vadd.f32 %v5130, %v5164
        %v5170 = vadd.f32 %v5131, %v5164
        %v5171 = vadd.f32 %v5132, %v5164
        %v5172 = vadd.f32 %v5133, %v5164
        %v5173 = vadd.f32 %v5134, %v5164
        %v5174 = vadd.f32 %v5135, %v5164
        %v5175 = vadd.f32 %v5136, %v5164
        %v5176 = vadd.f32 %v5137, %v5164
        %v5177 = vadd.f32 %v5138, %v5164
        %v5178 = vadd.f32 %v5139, %v5164
        %v5179 = vadd.f32 %v5140, %v5164
        %v5180 = vadd.f32 %v5141, %v5164
        %v5181 = vadd.f32 %v5142, %v5164
        %v5182 = vadd.f32 %v5143, %v5164
        %v5183 = vadd.f32 %v5144, %v5164
        %v5184 = vadd.f32 %v5145, %v5164
        %v5185 = vadd.f32 %v5146, %v5164
        %v5186 = vadd.f32 %v5147, %v5164
        %v5187 = vadd.f32 %v5148, %v5164
        %v5188 = vadd.f32 %v5149, %v5164
        %v5189 = vadd.f32 %v5150, %v5164
        %v5190 = vadd.f32 %v5151, %v5164
        %v5191 = vadd.f32 %v5152, %v5164
        %v5192 = vadd.f32 %v5153, %v5164
        %v5193 = vadd.f32 %v5154, %v5164
        %v5194 = vadd.f32 %v5155, %v5164
        %v5195 = vadd.f32 %v5156, %v5164
        %v5196 = vadd.f32 %v5157, %v5164
        %v5197 = vadd.f32 %v5158, %v5164
        %v5198 = vadd.f32 %v5166, %v2004
        %v5199 = vadd.f32 %v5167, %v2005
        %v5200 = vadd.f32 %v5168, %v2006
        %v5201 = vadd.f32 %v5169, %v2007
        %v5202 = vadd.f32 %v5170, %v2008
        %v5203 = vadd.f32 %v5171, %v2009
        %v5204 = vadd.f32 %v5172, %v2010
        %v5205 = vadd.f32 %v5173, %v2011
        %v5206 = vadd.f32 %v5174, %v2012
        %v5207 = vadd.f32 %v5175, %v2013
        %v5208 = vadd.f32 %v5176, %v2014
        %v5209 = vadd.f32 %v5177, %v2015
        %v5210 = vadd.f32 %v5178, %v2016
        %v5211 = vadd.f32 %v5179, %v2017
        %v5212 = vadd.f32 %v5180, %v2018
        %v5213 = vadd.f32 %v5181, %v2019
        %v5214 = vadd.f32 %v5182, %v2020
        %v5215 = vadd.f32 %v5183, %v2021
        %v5216 = vadd.f32 %v5184, %v2022
        %v5217 = vadd.f32 %v5185, %v2023
        %v5218 = vadd.f32 %v5186, %v2024
        %v5219 = vadd.f32 %v5187, %v2025
        %v5220 = vadd.f32 %v5188, %v2026
        %v5221 = vadd.f32 %v5189, %v2027
        %v5222 = vadd.f32 %v5190, %v2028
        %v5223 = vadd.f32 %v5191, %v2029
        %v5224 = vadd.f32 %v5192, %v2030
        %v5225 = vadd.f32 %v5193, %v2031
        %v5226 = vadd.f32 %v5194, %v2032
        %v5227 = vadd.f32 %v5195, %v2033
        %v5228 = vadd.f32 %v5196, %v2034
        %v5229 = vadd.f32 %v5197, %v2035
        %v5230 = vmax.f32 %v5198, 0.0
        %v5231 = vmax.f32 %v5199, 0.0
        %v5232 = vmax.f32 %v5200, 0.0
        %v5233 = vmax.f32 %v5201, 0.0
        %v5234 = vmax.f32 %v5202, 0.0
        %v5235 = vmax.f32 %v5203, 0.0
        %v5236 = vmax.f32 %v5204, 0.0
        %v5237 = vmax.f32 %v5205, 0.0
        %v5238 = vmax.f32 %v5206, 0.0
        %v5239 = vmax.f32 %v5207, 0.0
        %v5240 = vmax.f32 %v5208, 0.0
        %v5241 = vmax.f32 %v5209, 0.0
        %v5242 = vmax.f32 %v5210, 0.0
        %v5243 = vmax.f32 %v5211, 0.0
        %v5244 = vmax.f32 %v5212, 0.0
        %v5245 = vmax.f32 %v5213, 0.0
        %v5246 = vmax.f32 %v5214, 0.0
        %v5247 = vmax.f32 %v5215, 0.0
        %v5248 = vmax.f32 %v5216, 0.0
        %v5249 = vmax.f32 %v5217, 0.0
        %v5250 = vmax.f32 %v5218, 0.0
        %v5251 = vmax.f32 %v5219, 0.0
        %v5252 = vmax.f32 %v5220, 0.0
        %v5253 = vmax.f32 %v5221, 0.0
        %v5254 = vmax.f32 %v5222, 0.0
        %v5255 = vmax.f32 %v5223, 0.0
        %v5256 = vmax.f32 %v5224, 0.0
        %v5257 = vmax.f32 %v5225, 0.0
        %v5258 = vmax.f32 %v5226, 0.0
        %v5259 = vmax.f32 %v5227, 0.0
        %v5260 = vmax.f32 %v5228, 0.0
        %v5261 = vmax.f32 %v5229, 0.0
        %5262 = vst.msk [vmem:[%s375] sm:$0xff] %vm1103, %v5230
        %5263 = vst.msk [vmem:[%s375 + $0x8] sm:$0xff] %vm1103, %v5231
        %5264 = vst.msk [vmem:[%s375 + $0x10] sm:$0xff] %vm1103, %v5232
        %5265 = vst.msk [vmem:[%s375 + $0x18] sm:$0xff] %vm1103, %v5233
        %5266 = vst.msk [vmem:[%s375 + $0x20] sm:$0xff] %vm1103, %v5234
        %5267 = vst.msk [vmem:[%s375 + $0x28] sm:$0xff] %vm1103, %v5235
        %5268 = vst.msk [vmem:[%s375 + $0x30] sm:$0xff] %vm1103, %v5236
        %5269 = vst.msk [vmem:[%s375 + $0x38] sm:$0xff] %vm1103, %v5237
        %5270 = vst.msk [vmem:[%s375 + $0x40] sm:$0xff] %vm1103, %v5238
        %5271 = vst.msk [vmem:[%s375 + $0x48] sm:$0xff] %vm1103, %v5239
        %5272 = vst.msk [vmem:[%s375 + $0x50] sm:$0xff] %vm1103, %v5240
        %5273 = vst.msk [vmem:[%s375 + $0x58] sm:$0xff] %vm1103, %v5241
        %5274 = vst.msk [vmem:[%s375 + $0x60] sm:$0xff] %vm1103, %v5242
        %5275 = vst.msk [vmem:[%s375 + $0x68] sm:$0xff] %vm1103, %v5243
        %5276 = vst.msk [vmem:[%s375 + $0x70] sm:$0xff] %vm1103, %v5244
        %5277 = vst.msk [vmem:[%s375 + $0x78] sm:$0xff] %vm1103, %v5245
        %5278 = vst.msk [vmem:[%s375 + $0x80] sm:$0xff] %vm1103, %v5246
        %5279 = vst.msk [vmem:[%s375 + $0x88] sm:$0xff] %vm1103, %v5247
        %5280 = vst.msk [vmem:[%s375 + $0x90] sm:$0xff] %vm1103, %v5248
        %5281 = vst.msk [vmem:[%s375 + $0x98] sm:$0xff] %vm1103, %v5249
        %5282 = vst.msk [vmem:[%s375 + $0xa0] sm:$0xff] %vm1103, %v5250
        %5283 = vst.msk [vmem:[%s375 + $0xa8] sm:$0xff] %vm1103, %v5251
        %5284 = vst.msk [vmem:[%s375 + $0xb0] sm:$0xff] %vm1103, %v5252
        %5285 = vst.msk [vmem:[%s375 + $0xb8] sm:$0xff] %vm1103, %v5253
        %5286 = vst.msk [vmem:[%s375 + $0xc0] sm:$0xff] %vm1103, %v5254
        %5287 = vst.msk [vmem:[%s375 + $0xc8] sm:$0xff] %vm1103, %v5255
        %5288 = vst.msk [vmem:[%s375 + $0xd0] sm:$0xff] %vm1103, %v5256
        %5289 = vst.msk [vmem:[%s375 + $0xd8] sm:$0xff] %vm1103, %v5257
        %5290 = vst.msk [vmem:[%s375 + $0xe0] sm:$0xff] %vm1103, %v5258
        %5291 = vst.msk [vmem:[%s375 + $0xe8] sm:$0xff] %vm1103, %v5259
        %5292 = vst.msk [vmem:[%s375 + $0xf0] sm:$0xff] %vm1103, %v5260
        %5293 = vst.msk [vmem:[%s375 + $0xf8] sm:$0xff] %vm1103, %v5261
        %s5294 = sand.u32 %s187, 1
        %s5295 = scalar_lea.sflag [#allocation5], %s5294
        %s5296 = sand.u32 %s187, 1
        %s5297 = smul.addr %s5296, 256
        %s5298 = scalar_lea.vmem [#allocation15], %s5297
        // Predicated region
        $region77: #{basic_block_pallas.1} parent=47 // pred_check
          %p5299 = pneg %p197
        $region78: #{basic_block_pallas.1} parent=47 // pred_check_branch
          %5301 = sbr.rel (%p5299) target = $region80
        $region79: #{basic_block_pallas.1} parent=47 // pred_region
          %s5303 = ssub.s32 4096, 4096
          %5304 = vsyncadd %s5295, %s5303
          %s5305 = smul.addr %s27, 32
          %s5306 = smul.addr %s5305, 128
          %s5307 = scalar_lea.hbm %s7, %s5306
          %s5308 = sshll.u32 %s5298, 4
          %s5309 = int_to_ptr.vmem [resolvable:$true] %s5308
          %5314 = dma.vmem_to_hbm [thread:$0]  %s5309, 4096, %s5307, %s5295, 128, 128, 8
        $region80: #{basic_block_pallas.1} parent=47 // pred_fallthru
          _
      $region48: #{basic_block_pallas.1} parent=5 // pred_fallthru
        _
      %p5315 = scmp.le.s32.totalorder 2, %s22
      // Predicated region
      $region81: #{basic_block_pallas.1} parent=5 // pred_check
        %p5316 = pneg %p5315
      $region82: #{basic_block_pallas.1} parent=5 // pred_check_branch
        %5318 = sbr.rel (%p5316) target = $region84
      $region83: #{basic_block_pallas.1} parent=5 // pred_region
        %s5319 = ssub.s32 %s22, 2
        // Predicated region
        $region85: #{basic_block_pallas.1} parent=83 // pred_check
          %p5320 = pneg %p203
        $region86: #{basic_block_pallas.1} parent=83 // pred_check_branch
          %5322 = sbr.rel (%p5320) target = $region88
        $region87: #{basic_block_pallas.1} parent=83 // pred_region
          %s5323 = sand.u32 %s188, 1
          %s5324 = scalar_lea.sflag [#allocation5], %s5323
          %s5325 = sand.u32 %s188, 1
          %s5326 = smul.addr %s5325, 256
          %s5327 = scalar_lea.vmem [#allocation15], %s5326
          %5328 = dma.done %s5324, 4096
        $region88: #{basic_block_pallas.1} parent=83 // pred_fallthru
          _
      $region84: #{basic_block_pallas.1} parent=5 // pred_fallthru
        _
    $region6: #{basic_block_pallas.1} parent=1 // loop_footer
      %s26 = sadd.s32 1, %s22
    $region7: #{basic_block_pallas.1} parent=1 // loop_footer_branch
      %21 = sbr.rel target = $region3
    $region8: #{basic_block_pallas.1} parent=1 // loop_exit
      _
    %5329 = vsyncpa [#allocation4], 1
    %s5330 = scalar_lea.sflag [#allocation4], 1
    %5331 = vsyncpa %s5330, 1
    %5332 = vsyncpa [#allocation7], 1
    %5333 = vsyncpa [#allocation10], 1
    %5334 = vsyncpa [#allocation13], 1
    %5335 = vsyncpa [#allocation5], 1
    %s5336 = scalar_lea.sflag [#allocation5], 1
    %5337 = vsyncpa %s5336, 1

</llo_original>
